<compile_context>
chip_gen: v7x
topology: tpu7x:2x2x1
jax: 0.10.0
libtpu: 0.0.40
codegen_flags: <defaults>
</compile_context>

<pallas_src>
import functools

import jax
import jax.numpy as jnp
from jax import lax
from jax.experimental import pallas as pl
from jax.experimental.pallas import tpu as pltpu

EPS = 1e-5   # nn.BatchNorm1d default eps
K = 5        # conv kernel size


def _vmem():
    return pl.BlockSpec(memory_space=pltpu.MemorySpace.VMEM)


def _row_mask(m, pitch, valid, ch):
    """(m, ch) bool mask: True where (row index mod pitch) < valid.
    `pitch` is a power of two so the mod is a bitwise AND."""
    idx = lax.broadcasted_iota(jnp.int32, (m, ch), 0)
    return (idx & (pitch - 1)) < valid


def _bn_relu_masked(y, mask, n, g_ref, b_ref):
    """relu(batchnorm(y)) with train-mode batch statistics over rows where
    `mask` is True (two-pass mean / centered variance, biased variance).
    Rows with mask == False come out exactly zero (they become the next
    conv's zero halos)."""
    inv_n = 1.0 / float(n)
    ym = jnp.where(mask, y, 0.0)
    mean = jnp.sum(ym, axis=0, keepdims=True) * inv_n
    d = jnp.where(mask, y - mean, 0.0)
    var = jnp.sum(d * d, axis=0, keepdims=True) * inv_n
    scale = g_ref[...] * lax.rsqrt(var + EPS)
    shift = b_ref[...] - mean * scale
    return jnp.where(mask, jnp.maximum(y * scale + shift, 0.0), 0.0)


def _bn_relu(y, n, g_ref, b_ref):
    inv_n = 1.0 / float(n)
    mean = jnp.sum(y, axis=0, keepdims=True) * inv_n
    d = y - mean
    var = jnp.sum(d * d, axis=0, keepdims=True) * inv_n
    scale = g_ref[...] * lax.rsqrt(var + EPS)
    shift = b_ref[...] - mean * scale
    return jnp.maximum(y * scale + shift, 0.0)


def _fused_pretrain_kernel(xp_ref, w1_ref, w2_ref, w3_ref, wf1_ref, wf2_ref,
                           bf2_ref, g1_ref, be1_ref, g2_ref, be2_ref,
                           g3_ref, be3_ref, g4_ref, be4_ref,
                           o_ref, p2_ref, p3_ref, h3_ref,
                           *, b, ch, l1, l2, l3, o1, o2, o3):
    m1, m2, m3 = b * o1, b * o2, b * o3
    f32 = jnp.float32

    # ---- Conv1 (Cin = 1, VPU) ----------------------------------------------
    # xp rows hold (even, odd) padded positions -> the 5 taps of output row i
    # are unit-stride reads at row offsets 0 / 1 / 2.
    r0 = xp_ref[0:m1, :]            # padded positions 2j,   2j+1   (taps 0,1)
    r1 = xp_ref[1:m1 + 1, :]        # padded positions 2j+2, 2j+3   (taps 2,3)
    r2 = xp_ref[2:m1 + 2, :]        # padded positions 2j+4         (tap  4)
    y1 = (r0[:, 0:1] * w1_ref[0:1, :] + r0[:, 1:2] * w1_ref[1:2, :] +
          r1[:, 0:1] * w1_ref[2:3, :] + r1[:, 1:2] * w1_ref[3:4, :] +
          r2[:, 0:1] * w1_ref[4:5, :])                              # (m1, ch)
    h1 = _bn_relu_masked(y1, _row_mask(m1, o1, l1, ch), b * l1, g1_ref, be1_ref)

    # ---- stage conv2 input: aligned slab store + 8-row head/tail zeroing ----
    # Row 8 + i holds conv1 output row i; rows >= l1 within each sample are
    # zero, so they double as the conv2 halos (no full-buffer memset).
    p2_ref[0:8, :] = jnp.zeros((8, ch), f32)
    p2_ref[8:8 + m1, :] = h1
    p2_ref[8 + m1:, :] = jnp.zeros((8, ch), f32)

    # ---- Conv2: im2col (5 stride-2 taps) + ONE MXU matmul -------------------
    cols2 = jnp.concatenate(
        [p2_ref[pl.ds(6 + k, m2, stride=2), :] for k in range(K)], axis=1)
    y2 = jnp.dot(cols2, w2_ref[...], preferred_element_type=f32)     # (m2, ch)
    h2 = _bn_relu_masked(y2, _row_mask(m2, o2, l2, ch), b * l2, g2_ref, be2_ref)

    p3_ref[0:8, :] = jnp.zeros((8, ch), f32)
    p3_ref[8:8 + m2, :] = h2
    p3_ref[8 + m2:, :] = jnp.zeros((8, ch), f32)

    # ---- Conv3: im2col + ONE MXU matmul -------------------------------------
    cols3 = jnp.concatenate(
        [p3_ref[pl.ds(6 + k, m3, stride=2), :] for k in range(K)], axis=1)
    y3 = jnp.dot(cols3, w3_ref[...], preferred_element_type=f32)     # (m3, ch)
    h3_ref[...] = _bn_relu_masked(y3, _row_mask(m3, o3, l3, ch), b * l3,
                                  g3_ref, be3_ref)

    # ---- Flatten + Linear(ch*l3 -> 32): gather positions into lanes, 1 matmul
    cols4 = jnp.concatenate(
        [h3_ref[pl.ds(pos, b, stride=o3), :] for pos in range(l3)], axis=1)
    y4 = jnp.dot(cols4, wf1_ref[...], preferred_element_type=f32)    # (b, 32)
    h4 = _bn_relu(y4, b, g4_ref, be4_ref)

    # ---- Linear(32 -> label) -------------------------------------------------
    o_ref[...] = (jnp.dot(h4, wf2_ref[...], preferred_element_type=f32)
                  + bf2_ref[...])


# ------------------------------ params --------------------------------------

def _uniform(key, shape, bound):
    return jax.random.uniform(key, shape, jnp.float32, -bound, bound)


def init_params(key, in_dim=120, ch=32, label_num=18):
    """PyTorch-default initialisation of pretrain(in_dim, label_num)."""
    keys = jax.random.split(key, 10)
    p = {}
    bnd = 1.0 / (1 * K) ** 0.5
    p["w1"] = _uniform(keys[0], (ch, 1, K), bnd)
    p["b1"] = _uniform(keys[1], (ch,), bnd)         # absorbed by train-mode BN
    bnd = 1.0 / (ch * K) ** 0.5
    p["w2"] = _uniform(keys[2], (ch, ch, K), bnd)
    p["b2"] = _uniform(keys[3], (ch,), bnd)
    p["w3"] = _uniform(keys[4], (ch, ch, K), bnd)
    p["b3"] = _uniform(keys[5], (ch,), bnd)
    flat = ch * (in_dim // 8)                       # 120 -> 60 -> 30 -> 15
    bnd = 1.0 / flat ** 0.5
    p["wf1"] = _uniform(keys[6], (32, flat), bnd)   # PyTorch Linear layout (out, in)
    p["bf1"] = _uniform(keys[7], (32,), bnd)
    bnd = 1.0 / 32 ** 0.5
    p["wf2"] = _uniform(keys[8], (label_num, 32), bnd)
    p["bf2"] = _uniform(keys[9], (label_num,), bnd)
    for i, c in zip(range(1, 5), (ch, ch, ch, 32)):
        p[f"bn{i}_g"] = jnp.ones((c,), jnp.float32)
        p[f"bn{i}_b"] = jnp.zeros((c,), jnp.float32)
    return p


def prepare_params(p):
    """One-time (outside jit) re-layout into the forms the fused kernel eats.
    Pre-BN biases (b1/b2/b3/bf1) are dropped: train-mode BN absorbs them."""
    ch = p["w2"].shape[0]
    k = p["w1"].shape[2]
    nf = p["wf1"].shape[0]
    l3 = p["wf1"].shape[1] // ch
    prep = {
        "w1": jnp.transpose(p["w1"], (2, 1, 0)).reshape(k, ch),        # (5, ch)
        "w2": jnp.transpose(p["w2"], (2, 1, 0)).reshape(k * ch, ch),   # (160, ch)
        "w3": jnp.transpose(p["w3"], (2, 1, 0)).reshape(k * ch, ch),
        # Linear(ch*l3 -> 32) in PyTorch Flatten order (feature = c*l3 + l),
        # re-laid-out so row (l*ch + c) matches the in-kernel lane gather.
        "wf1": jnp.transpose(p["wf1"].reshape(nf, ch, l3),
                             (2, 1, 0)).reshape(l3 * ch, nf),          # (480, 32)
        "wf2": jnp.transpose(p["wf2"], (1, 0)),                        # (32, label)
        "bf2": p["bf2"].reshape(1, -1),
    }
    for i in range(1, 5):
        prep[f"bn{i}_g"] = p[f"bn{i}_g"].reshape(1, -1)
        prep[f"bn{i}_b"] = p[f"bn{i}_b"].reshape(1, -1)
    return prep


@jax.jit
def pretrain_forward(prep, x):
    """x: (B, 1, in_dim) float32 (PyTorch NCL) -> (B, label_num)."""
    b, _, in_dim = x.shape
    ch = prep["w2"].shape[1]
    label = prep["wf2"].shape[1]
    assert in_dim % 8 == 0
    l1, l2, l3 = in_dim // 2, in_dim // 4, in_dim // 8
    o3 = 1 << l3.bit_length()            # power-of-two row pitches: 16/32/64
    o2, o1 = 2 * o3, 4 * o3

    # Pack the zero-padded input as (even, odd) position pairs: per sample
    # 2*o1 padded positions -> o1 rows of 2 lanes (+ 8 zero tail rows).
    xp = jnp.pad(x.reshape(b, in_dim), ((0, 0), (2, 2 * o1 - in_dim - 2)))
    xp = jnp.pad(xp.reshape(b * o1, 2), ((0, 8), (0, 0)))
    # TODO(synk): BatchNorm running_mean/running_var buffer updates (training
    # state, momentum) are not modeled; only the forward output is produced.

    kernel = functools.partial(_fused_pretrain_kernel, b=b, ch=ch,
                               l1=l1, l2=l2, l3=l3, o1=o1, o2=o2, o3=o3)
    return pl.pallas_call(
        kernel,
        out_shape=jax.ShapeDtypeStruct((b, label), jnp.float32),
        in_specs=[_vmem()] * 15,
        out_specs=_vmem(),
        scratch_shapes=[
            pltpu.VMEM((b * o1 + 16, ch), jnp.float32),   # padded conv2 input
            pltpu.VMEM((b * o2 + 16, ch), jnp.float32),   # padded conv3 input
            pltpu.VMEM((b * o3, ch), jnp.float32),        # conv3 out (fc1 in)
        ],
    )(xp, prep["w1"], prep["w2"], prep["w3"], prep["wf1"], prep["wf2"],
      prep["bf2"],
      prep["bn1_g"], prep["bn1_b"], prep["bn2_g"], prep["bn2_b"],
      prep["bn3_g"], prep["bn3_b"], prep["bn4_g"], prep["bn4_b"])


# ------------------------------ reference -----------------------------------

def _reference_forward(p, x):
    """Pure-JAX reference of the PyTorch module (train-mode BatchNorm)."""
    hp = lax.Precision.HIGHEST

    def conv1d(h, w, bias):                         # h:(B,Ci,L)  w:(Co,Ci,K)
        lout = h.shape[2] // 2
        hpad = jnp.pad(h, ((0, 0), (0, 0), (2, 2)))
        taps = jnp.stack([hpad[:, :, k:k + 2 * lout:2] for k in range(K)],
                         axis=-1)                   # (B, Ci, Lout, K)
        out = jnp.einsum("bilk,oik->bol", taps, w, precision=hp)
        return out + bias[None, :, None]

    def bn_relu(h, g, beta, axes):
        mean = jnp.mean(h, axis=axes, keepdims=True)
        var = jnp.mean((h - mean) ** 2, axis=axes, keepdims=True)
        shape = [1] * h.ndim
        shape[1] = -1
        return jnp.maximum((h - mean) * lax.rsqrt(var + EPS) * g.reshape(shape)
                           + beta.reshape(shape), 0.0)

    h = bn_relu(conv1d(x, p["w1"], p["b1"]), p["bn1_g"], p["bn1_b"], (0, 2))
    h = bn_relu(conv1d(h, p["w2"], p["b2"]), p["bn2_g"], p["bn2_b"], (0, 2))
    h = bn_relu(conv1d(h, p["w3"], p["b3"]), p["bn3_g"], p["bn3_b"], (0, 2))
    h = h.reshape(h.shape[0], -1)                   # (B, ch*15), feat = c*15+l
    h = jnp.dot(h, p["wf1"].T, precision=hp) + p["bf1"]
    h = bn_relu(h, p["bn4_g"], p["bn4_b"], (0,))
    return jnp.dot(h, p["wf2"].T, precision=hp) + p["bf2"]


if __name__ == "__main__":
    key = jax.random.PRNGKey(0)
    pkey, xkey = jax.random.split(key)
    params = init_params(pkey, in_dim=120, ch=32, label_num=18)
    prep = prepare_params(params)

    B, in_dim = 8, 120
    x = jax.random.normal(xkey, (B, 1, in_dim), dtype=jnp.float32)

    out = jax.block_until_ready(pretrain_forward(prep, x))
    assert out.shape == (B, 18), out.shape
    assert bool(jnp.all(jnp.isfinite(out)))

    ref = _reference_forward(params, x)
    err = float(jnp.max(jnp.abs(out - ref)))
    assert err < 3e-2, f"max abs err vs reference: {err}"
    print("KERNEL_OK")
</pallas_src>

<mosaic_0001>
module attributes {stable_mosaic.version = 11 : i64} {
  func.func @_fused_pretrain_kernel(%arg0: memref<520x2xf32, #tpu.memory_space<vmem>>, %arg1: memref<5x32xf32, #tpu.memory_space<vmem>>, %arg2: memref<160x32xf32, #tpu.memory_space<vmem>>, %arg3: memref<160x32xf32, #tpu.memory_space<vmem>>, %arg4: memref<480x32xf32, #tpu.memory_space<vmem>>, %arg5: memref<32x18xf32, #tpu.memory_space<vmem>>, %arg6: memref<1x18xf32, #tpu.memory_space<vmem>>, %arg7: memref<1x32xf32, #tpu.memory_space<vmem>>, %arg8: memref<1x32xf32, #tpu.memory_space<vmem>>, %arg9: memref<1x32xf32, #tpu.memory_space<vmem>>, %arg10: memref<1x32xf32, #tpu.memory_space<vmem>>, %arg11: memref<1x32xf32, #tpu.memory_space<vmem>>, %arg12: memref<1x32xf32, #tpu.memory_space<vmem>>, %arg13: memref<1x32xf32, #tpu.memory_space<vmem>>, %arg14: memref<1x32xf32, #tpu.memory_space<vmem>>, %arg15: memref<8x18xf32, #tpu.memory_space<vmem>>, %arg16: memref<528x32xf32, #tpu.memory_space<vmem>>, %arg17: memref<272x32xf32, #tpu.memory_space<vmem>>, %arg18: memref<128x32xf32, #tpu.memory_space<vmem>>) attributes {dimension_semantics = [], scalar_prefetch = 0 : i64, scratch_operands = 3 : i64, tpu.core_type = #tpu.core_type<tc>} {
    %c0 = arith.constant 0 : index
    %c0_0 = arith.constant 0 : index
    %0 = vector.load %arg0[%c0, %c0_0] : memref<520x2xf32, #tpu.memory_space<vmem>>, vector<512x2xf32>
    %c1 = arith.constant 1 : index
    %c0_1 = arith.constant 0 : index
    %1 = vector.load %arg0[%c1, %c0_1] : memref<520x2xf32, #tpu.memory_space<vmem>>, vector<512x2xf32>
    %c2 = arith.constant 2 : index
    %c0_2 = arith.constant 0 : index
    %2 = vector.load %arg0[%c2, %c0_2] : memref<520x2xf32, #tpu.memory_space<vmem>>, vector<512x2xf32>
    %3 = vector.extract_strided_slice %0 {offsets = [0, 0], sizes = [512, 1], strides = [1, 1]} : vector<512x2xf32> to vector<512x1xf32>
    %c0_3 = arith.constant 0 : index
    %c0_4 = arith.constant 0 : index
    %4 = vector.load %arg1[%c0_3, %c0_4] : memref<5x32xf32, #tpu.memory_space<vmem>>, vector<1x32xf32>
    %5 = vector.broadcast %3 : vector<512x1xf32> to vector<512x32xf32>
    %6 = vector.broadcast %4 : vector<1x32xf32> to vector<512x32xf32>
    %7 = arith.mulf %5, %6 : vector<512x32xf32>
    %8 = vector.extract_strided_slice %0 {offsets = [0, 1], sizes = [512, 1], strides = [1, 1]} : vector<512x2xf32> to vector<512x1xf32>
    %c1_5 = arith.constant 1 : index
    %c0_6 = arith.constant 0 : index
    %9 = vector.load %arg1[%c1_5, %c0_6] : memref<5x32xf32, #tpu.memory_space<vmem>>, vector<1x32xf32>
    %10 = vector.broadcast %8 : vector<512x1xf32> to vector<512x32xf32>
    %11 = vector.broadcast %9 : vector<1x32xf32> to vector<512x32xf32>
    %12 = arith.mulf %10, %11 : vector<512x32xf32>
    %13 = arith.addf %7, %12 : vector<512x32xf32>
    %14 = vector.extract_strided_slice %1 {offsets = [0, 0], sizes = [512, 1], strides = [1, 1]} : vector<512x2xf32> to vector<512x1xf32>
    %c2_7 = arith.constant 2 : index
    %c0_8 = arith.constant 0 : index
    %15 = vector.load %arg1[%c2_7, %c0_8] : memref<5x32xf32, #tpu.memory_space<vmem>>, vector<1x32xf32>
    %16 = vector.broadcast %14 : vector<512x1xf32> to vector<512x32xf32>
    %17 = vector.broadcast %15 : vector<1x32xf32> to vector<512x32xf32>
    %18 = arith.mulf %16, %17 : vector<512x32xf32>
    %19 = arith.addf %13, %18 : vector<512x32xf32>
    %20 = vector.extract_strided_slice %1 {offsets = [0, 1], sizes = [512, 1], strides = [1, 1]} : vector<512x2xf32> to vector<512x1xf32>
    %c3 = arith.constant 3 : index
    %c0_9 = arith.constant 0 : index
    %21 = vector.load %arg1[%c3, %c0_9] : memref<5x32xf32, #tpu.memory_space<vmem>>, vector<1x32xf32>
    %22 = vector.broadcast %20 : vector<512x1xf32> to vector<512x32xf32>
    %23 = vector.broadcast %21 : vector<1x32xf32> to vector<512x32xf32>
    %24 = arith.mulf %22, %23 : vector<512x32xf32>
    %25 = arith.addf %19, %24 : vector<512x32xf32>
    %26 = vector.extract_strided_slice %2 {offsets = [0, 0], sizes = [512, 1], strides = [1, 1]} : vector<512x2xf32> to vector<512x1xf32>
    %c4 = arith.constant 4 : index
    %c0_10 = arith.constant 0 : index
    %27 = vector.load %arg1[%c4, %c0_10] : memref<5x32xf32, #tpu.memory_space<vmem>>, vector<1x32xf32>
    %28 = vector.broadcast %26 : vector<512x1xf32> to vector<512x32xf32>
    %29 = vector.broadcast %27 : vector<1x32xf32> to vector<512x32xf32>
    %30 = arith.mulf %28, %29 : vector<512x32xf32>
    %31 = arith.addf %25, %30 : vector<512x32xf32>
    %32 = tpu.iota {dimensions = array<i32: 0>} : vector<512x32xi32>
    %c63_i32 = arith.constant 63 : i32
    %33 = vector.broadcast %c63_i32 : i32 to vector<512x32xi32>
    %34 = arith.andi %32, %33 : vector<512x32xi32>
    %c60_i32 = arith.constant 60 : i32
    %35 = vector.broadcast %c60_i32 : i32 to vector<512x32xi32>
    %36 = arith.cmpi slt, %34, %35 : vector<512x32xi32>
    %cst = arith.constant 0.000000e+00 : f32
    %37 = vector.broadcast %cst : f32 to vector<512x32xf32>
    %38 = arith.select %36, %31, %37 : vector<512x32xi1>, vector<512x32xf32>
    %cst_11 = arith.constant dense<0.000000e+00> : vector<32xf32>
    %39 = vector.multi_reduction <add>, %38, %cst_11 [0] : vector<512x32xf32> to vector<32xf32>
    %40 = vector.shape_cast %39 : vector<32xf32> to vector<1x32xf32>
    %cst_12 = arith.constant 0.00208333344 : f32
    %41 = vector.broadcast %cst_12 : f32 to vector<1x32xf32>
    %42 = arith.mulf %40, %41 : vector<1x32xf32>
    %43 = vector.broadcast %42 : vector<1x32xf32> to vector<512x32xf32>
    %44 = arith.subf %31, %43 : vector<512x32xf32>
    %cst_13 = arith.constant 0.000000e+00 : f32
    %45 = vector.broadcast %cst_13 : f32 to vector<512x32xf32>
    %46 = arith.select %36, %44, %45 : vector<512x32xi1>, vector<512x32xf32>
    %47 = arith.mulf %46, %46 : vector<512x32xf32>
    %cst_14 = arith.constant dense<0.000000e+00> : vector<32xf32>
    %48 = vector.multi_reduction <add>, %47, %cst_14 [0] : vector<512x32xf32> to vector<32xf32>
    %49 = vector.shape_cast %48 : vector<32xf32> to vector<1x32xf32>
    %cst_15 = arith.constant 0.00208333344 : f32
    %50 = vector.broadcast %cst_15 : f32 to vector<1x32xf32>
    %51 = arith.mulf %49, %50 : vector<1x32xf32>
    %c0_16 = arith.constant 0 : index
    %c0_17 = arith.constant 0 : index
    %52 = vector.load %arg7[%c0_16, %c0_17] : memref<1x32xf32, #tpu.memory_space<vmem>>, vector<1x32xf32>
    %cst_18 = arith.constant 9.99999974E-6 : f32
    %53 = vector.broadcast %cst_18 : f32 to vector<1x32xf32>
    %54 = arith.addf %51, %53 : vector<1x32xf32>
    %55 = math.rsqrt %54 : vector<1x32xf32>
    %56 = arith.mulf %52, %55 : vector<1x32xf32>
    %c0_19 = arith.constant 0 : index
    %c0_20 = arith.constant 0 : index
    %57 = vector.load %arg8[%c0_19, %c0_20] : memref<1x32xf32, #tpu.memory_space<vmem>>, vector<1x32xf32>
    %58 = arith.mulf %42, %56 : vector<1x32xf32>
    %59 = arith.subf %57, %58 : vector<1x32xf32>
    %60 = vector.broadcast %56 : vector<1x32xf32> to vector<512x32xf32>
    %61 = arith.mulf %31, %60 : vector<512x32xf32>
    %62 = vector.broadcast %59 : vector<1x32xf32> to vector<512x32xf32>
    %63 = arith.addf %61, %62 : vector<512x32xf32>
    %cst_21 = arith.constant 0.000000e+00 : f32
    %64 = vector.broadcast %cst_21 : f32 to vector<512x32xf32>
    %65 = arith.maximumf %63, %64 : vector<512x32xf32>
    %cst_22 = arith.constant 0.000000e+00 : f32
    %66 = vector.broadcast %cst_22 : f32 to vector<512x32xf32>
    %67 = arith.select %36, %65, %66 : vector<512x32xi1>, vector<512x32xf32>
    %cst_23 = arith.constant 0.000000e+00 : f32
    %68 = vector.broadcast %cst_23 : f32 to vector<8x32xf32>
    %c0_24 = arith.constant 0 : index
    %c0_25 = arith.constant 0 : index
    %69 = vector.load %arg16[%c0_24, %c0_25] : memref<528x32xf32, #tpu.memory_space<vmem>>, vector<8x32xf32>
    tpu.vector_store %arg16[%c0_24, %c0_25], %68 {strides = array<i32>} : memref<528x32xf32, #tpu.memory_space<vmem>>, vector<8x32xf32>,
    %c8 = arith.constant 8 : index
    %c0_26 = arith.constant 0 : index
    %70 = vector.load %arg16[%c8, %c0_26] : memref<528x32xf32, #tpu.memory_space<vmem>>, vector<512x32xf32>
    tpu.vector_store %arg16[%c8, %c0_26], %67 {strides = array<i32>} : memref<528x32xf32, #tpu.memory_space<vmem>>, vector<512x32xf32>,
    %cst_27 = arith.constant 0.000000e+00 : f32
    %71 = vector.broadcast %cst_27 : f32 to vector<8x32xf32>
    %c520 = arith.constant 520 : index
    %c0_28 = arith.constant 0 : index
    %72 = vector.load %arg16[%c520, %c0_28] : memref<528x32xf32, #tpu.memory_space<vmem>>, vector<8x32xf32>
    tpu.vector_store %arg16[%c520, %c0_28], %71 {strides = array<i32>} : memref<528x32xf32, #tpu.memory_space<vmem>>, vector<8x32xf32>,
    %c6 = arith.constant 6 : index
    %c0_29 = arith.constant 0 : index
    %73 = tpu.strided_load %arg16[%c6, %c0_29] {strides = array<i32: 2, 1>} : memref<528x32xf32, #tpu.memory_space<vmem>>, vector<256x32xf32>
    %c7 = arith.constant 7 : index
    %c0_30 = arith.constant 0 : index
    %74 = tpu.strided_load %arg16[%c7, %c0_30] {strides = array<i32: 2, 1>} : memref<528x32xf32, #tpu.memory_space<vmem>>, vector<256x32xf32>
    %c8_31 = arith.constant 8 : index
    %c0_32 = arith.constant 0 : index
    %75 = tpu.strided_load %arg16[%c8_31, %c0_32] {strides = array<i32: 2, 1>} : memref<528x32xf32, #tpu.memory_space<vmem>>, vector<256x32xf32>
    %c9 = arith.constant 9 : index
    %c0_33 = arith.constant 0 : index
    %76 = tpu.strided_load %arg16[%c9, %c0_33] {strides = array<i32: 2, 1>} : memref<528x32xf32, #tpu.memory_space<vmem>>, vector<256x32xf32>
    %c10 = arith.constant 10 : index
    %c0_34 = arith.constant 0 : index
    %77 = tpu.strided_load %arg16[%c10, %c0_34] {strides = array<i32: 2, 1>} : memref<528x32xf32, #tpu.memory_space<vmem>>, vector<256x32xf32>
    %78 = tpu.concatenate %73, %74, %75, %76, %77 in 1 : vector<256x32xf32>, vector<256x32xf32>, vector<256x32xf32>, vector<256x32xf32>, vector<256x32xf32> -> vector<256x160xf32>
    %c0_35 = arith.constant 0 : index
    %c0_36 = arith.constant 0 : index
    %79 = vector.load %arg2[%c0_35, %c0_36] : memref<160x32xf32, #tpu.memory_space<vmem>>, vector<160x32xf32>
    %cst_37 = arith.constant dense<0.000000e+00> : vector<256x32xf32>
    %80 = tpu.matmul %78, %79, %cst_37 {dimension_numbers = #tpu.dot_dimension_numbers<[1], [0], [0], [1], [0, 0, 1, 1], [], []>} : vector<256x160xf32>, vector<160x32xf32>, vector<256x32xf32> -> vector<256x32xf32>
    %81 = tpu.iota {dimensions = array<i32: 0>} : vector<256x32xi32>
    %c31_i32 = arith.constant 31 : i32
    %82 = vector.broadcast %c31_i32 : i32 to vector<256x32xi32>
    %83 = arith.andi %81, %82 : vector<256x32xi32>
    %c30_i32 = arith.constant 30 : i32
    %84 = vector.broadcast %c30_i32 : i32 to vector<256x32xi32>
    %85 = arith.cmpi slt, %83, %84 : vector<256x32xi32>
    %cst_38 = arith.constant 0.000000e+00 : f32
    %86 = vector.broadcast %cst_38 : f32 to vector<256x32xf32>
    %87 = arith.select %85, %80, %86 : vector<256x32xi1>, vector<256x32xf32>
    %cst_39 = arith.constant dense<0.000000e+00> : vector<32xf32>
    %88 = vector.multi_reduction <add>, %87, %cst_39 [0] : vector<256x32xf32> to vector<32xf32>
    %89 = vector.shape_cast %88 : vector<32xf32> to vector<1x32xf32>
    %cst_40 = arith.constant 0.00416666688 : f32
    %90 = vector.broadcast %cst_40 : f32 to vector<1x32xf32>
    %91 = arith.mulf %89, %90 : vector<1x32xf32>
    %92 = vector.broadcast %91 : vector<1x32xf32> to vector<256x32xf32>
    %93 = arith.subf %80, %92 : vector<256x32xf32>
    %cst_41 = arith.constant 0.000000e+00 : f32
    %94 = vector.broadcast %cst_41 : f32 to vector<256x32xf32>
    %95 = arith.select %85, %93, %94 : vector<256x32xi1>, vector<256x32xf32>
    %96 = arith.mulf %95, %95 : vector<256x32xf32>
    %cst_42 = arith.constant dense<0.000000e+00> : vector<32xf32>
    %97 = vector.multi_reduction <add>, %96, %cst_42 [0] : vector<256x32xf32> to vector<32xf32>
    %98 = vector.shape_cast %97 : vector<32xf32> to vector<1x32xf32>
    %cst_43 = arith.constant 0.00416666688 : f32
    %99 = vector.broadcast %cst_43 : f32 to vector<1x32xf32>
    %100 = arith.mulf %98, %99 : vector<1x32xf32>
    %c0_44 = arith.constant 0 : index
    %c0_45 = arith.constant 0 : index
    %101 = vector.load %arg9[%c0_44, %c0_45] : memref<1x32xf32, #tpu.memory_space<vmem>>, vector<1x32xf32>
    %cst_46 = arith.constant 9.99999974E-6 : f32
    %102 = vector.broadcast %cst_46 : f32 to vector<1x32xf32>
    %103 = arith.addf %100, %102 : vector<1x32xf32>
    %104 = math.rsqrt %103 : vector<1x32xf32>
    %105 = arith.mulf %101, %104 : vector<1x32xf32>
    %c0_47 = arith.constant 0 : index
    %c0_48 = arith.constant 0 : index
    %106 = vector.load %arg10[%c0_47, %c0_48] : memref<1x32xf32, #tpu.memory_space<vmem>>, vector<1x32xf32>
    %107 = arith.mulf %91, %105 : vector<1x32xf32>
    %108 = arith.subf %106, %107 : vector<1x32xf32>
    %109 = vector.broadcast %105 : vector<1x32xf32> to vector<256x32xf32>
    %110 = arith.mulf %80, %109 : vector<256x32xf32>
    %111 = vector.broadcast %108 : vector<1x32xf32> to vector<256x32xf32>
    %112 = arith.addf %110, %111 : vector<256x32xf32>
    %cst_49 = arith.constant 0.000000e+00 : f32
    %113 = vector.broadcast %cst_49 : f32 to vector<256x32xf32>
    %114 = arith.maximumf %112, %113 : vector<256x32xf32>
    %cst_50 = arith.constant 0.000000e+00 : f32
    %115 = vector.broadcast %cst_50 : f32 to vector<256x32xf32>
    %116 = arith.select %85, %114, %115 : vector<256x32xi1>, vector<256x32xf32>
    %cst_51 = arith.constant 0.000000e+00 : f32
    %117 = vector.broadcast %cst_51 : f32 to vector<8x32xf32>
    %c0_52 = arith.constant 0 : index
    %c0_53 = arith.constant 0 : index
    %118 = vector.load %arg17[%c0_52, %c0_53] : memref<272x32xf32, #tpu.memory_space<vmem>>, vector<8x32xf32>
    tpu.vector_store %arg17[%c0_52, %c0_53], %117 {strides = array<i32>} : memref<272x32xf32, #tpu.memory_space<vmem>>, vector<8x32xf32>,
    %c8_54 = arith.constant 8 : index
    %c0_55 = arith.constant 0 : index
    %119 = vector.load %arg17[%c8_54, %c0_55] : memref<272x32xf32, #tpu.memory_space<vmem>>, vector<256x32xf32>
    tpu.vector_store %arg17[%c8_54, %c0_55], %116 {strides = array<i32>} : memref<272x32xf32, #tpu.memory_space<vmem>>, vector<256x32xf32>,
    %cst_56 = arith.constant 0.000000e+00 : f32
    %120 = vector.broadcast %cst_56 : f32 to vector<8x32xf32>
    %c264 = arith.constant 264 : index
    %c0_57 = arith.constant 0 : index
    %121 = vector.load %arg17[%c264, %c0_57] : memref<272x32xf32, #tpu.memory_space<vmem>>, vector<8x32xf32>
    tpu.vector_store %arg17[%c264, %c0_57], %120 {strides = array<i32>} : memref<272x32xf32, #tpu.memory_space<vmem>>, vector<8x32xf32>,
    %c6_58 = arith.constant 6 : index
    %c0_59 = arith.constant 0 : index
    %122 = tpu.strided_load %arg17[%c6_58, %c0_59] {strides = array<i32: 2, 1>} : memref<272x32xf32, #tpu.memory_space<vmem>>, vector<128x32xf32>
    %c7_60 = arith.constant 7 : index
    %c0_61 = arith.constant 0 : index
    %123 = tpu.strided_load %arg17[%c7_60, %c0_61] {strides = array<i32: 2, 1>} : memref<272x32xf32, #tpu.memory_space<vmem>>, vector<128x32xf32>
    %c8_62 = arith.constant 8 : index
    %c0_63 = arith.constant 0 : index
    %124 = tpu.strided_load %arg17[%c8_62, %c0_63] {strides = array<i32: 2, 1>} : memref<272x32xf32, #tpu.memory_space<vmem>>, vector<128x32xf32>
    %c9_64 = arith.constant 9 : index
    %c0_65 = arith.constant 0 : index
    %125 = tpu.strided_load %arg17[%c9_64, %c0_65] {strides = array<i32: 2, 1>} : memref<272x32xf32, #tpu.memory_space<vmem>>, vector<128x32xf32>
    %c10_66 = arith.constant 10 : index
    %c0_67 = arith.constant 0 : index
    %126 = tpu.strided_load %arg17[%c10_66, %c0_67] {strides = array<i32: 2, 1>} : memref<272x32xf32, #tpu.memory_space<vmem>>, vector<128x32xf32>
    %127 = tpu.concatenate %122, %123, %124, %125, %126 in 1 : vector<128x32xf32>, vector<128x32xf32>, vector<128x32xf32>, vector<128x32xf32>, vector<128x32xf32> -> vector<128x160xf32>
    %c0_68 = arith.constant 0 : index
    %c0_69 = arith.constant 0 : index
    %128 = vector.load %arg3[%c0_68, %c0_69] : memref<160x32xf32, #tpu.memory_space<vmem>>, vector<160x32xf32>
    %cst_70 = arith.constant dense<0.000000e+00> : vector<128x32xf32>
    %129 = tpu.matmul %127, %128, %cst_70 {dimension_numbers = #tpu.dot_dimension_numbers<[1], [0], [0], [1], [0, 0, 1, 1], [], []>} : vector<128x160xf32>, vector<160x32xf32>, vector<128x32xf32> -> vector<128x32xf32>
    %130 = tpu.iota {dimensions = array<i32: 0>} : vector<128x32xi32>
    %c15_i32 = arith.constant 15 : i32
    %131 = vector.broadcast %c15_i32 : i32 to vector<128x32xi32>
    %132 = arith.andi %130, %131 : vector<128x32xi32>
    %c15_i32_71 = arith.constant 15 : i32
    %133 = vector.broadcast %c15_i32_71 : i32 to vector<128x32xi32>
    %134 = arith.cmpi slt, %132, %133 : vector<128x32xi32>
    %cst_72 = arith.constant 0.000000e+00 : f32
    %135 = vector.broadcast %cst_72 : f32 to vector<128x32xf32>
    %136 = arith.select %134, %129, %135 : vector<128x32xi1>, vector<128x32xf32>
    %cst_73 = arith.constant dense<0.000000e+00> : vector<32xf32>
    %137 = vector.multi_reduction <add>, %136, %cst_73 [0] : vector<128x32xf32> to vector<32xf32>
    %138 = vector.shape_cast %137 : vector<32xf32> to vector<1x32xf32>
    %cst_74 = arith.constant 0.00833333377 : f32
    %139 = vector.broadcast %cst_74 : f32 to vector<1x32xf32>
    %140 = arith.mulf %138, %139 : vector<1x32xf32>
    %141 = vector.broadcast %140 : vector<1x32xf32> to vector<128x32xf32>
    %142 = arith.subf %129, %141 : vector<128x32xf32>
    %cst_75 = arith.constant 0.000000e+00 : f32
    %143 = vector.broadcast %cst_75 : f32 to vector<128x32xf32>
    %144 = arith.select %134, %142, %143 : vector<128x32xi1>, vector<128x32xf32>
    %145 = arith.mulf %144, %144 : vector<128x32xf32>
    %cst_76 = arith.constant dense<0.000000e+00> : vector<32xf32>
    %146 = vector.multi_reduction <add>, %145, %cst_76 [0] : vector<128x32xf32> to vector<32xf32>
    %147 = vector.shape_cast %146 : vector<32xf32> to vector<1x32xf32>
    %cst_77 = arith.constant 0.00833333377 : f32
    %148 = vector.broadcast %cst_77 : f32 to vector<1x32xf32>
    %149 = arith.mulf %147, %148 : vector<1x32xf32>
    %c0_78 = arith.constant 0 : index
    %c0_79 = arith.constant 0 : index
    %150 = vector.load %arg11[%c0_78, %c0_79] : memref<1x32xf32, #tpu.memory_space<vmem>>, vector<1x32xf32>
    %cst_80 = arith.constant 9.99999974E-6 : f32
    %151 = vector.broadcast %cst_80 : f32 to vector<1x32xf32>
    %152 = arith.addf %149, %151 : vector<1x32xf32>
    %153 = math.rsqrt %152 : vector<1x32xf32>
    %154 = arith.mulf %150, %153 : vector<1x32xf32>
    %c0_81 = arith.constant 0 : index
    %c0_82 = arith.constant 0 : index
    %155 = vector.load %arg12[%c0_81, %c0_82] : memref<1x32xf32, #tpu.memory_space<vmem>>, vector<1x32xf32>
    %156 = arith.mulf %140, %154 : vector<1x32xf32>
    %157 = arith.subf %155, %156 : vector<1x32xf32>
    %158 = vector.broadcast %154 : vector<1x32xf32> to vector<128x32xf32>
    %159 = arith.mulf %129, %158 : vector<128x32xf32>
    %160 = vector.broadcast %157 : vector<1x32xf32> to vector<128x32xf32>
    %161 = arith.addf %159, %160 : vector<128x32xf32>
    %cst_83 = arith.constant 0.000000e+00 : f32
    %162 = vector.broadcast %cst_83 : f32 to vector<128x32xf32>
    %163 = arith.maximumf %161, %162 : vector<128x32xf32>
    %cst_84 = arith.constant 0.000000e+00 : f32
    %164 = vector.broadcast %cst_84 : f32 to vector<128x32xf32>
    %165 = arith.select %134, %163, %164 : vector<128x32xi1>, vector<128x32xf32>
    %c0_85 = arith.constant 0 : index
    %c0_86 = arith.constant 0 : index
    %166 = vector.load %arg18[%c0_85, %c0_86] : memref<128x32xf32, #tpu.memory_space<vmem>>, vector<128x32xf32>
    tpu.vector_store %arg18[%c0_85, %c0_86], %165 {strides = array<i32>} : memref<128x32xf32, #tpu.memory_space<vmem>>, vector<128x32xf32>,
    %c0_87 = arith.constant 0 : index
    %c0_88 = arith.constant 0 : index
    %167 = tpu.strided_load %arg18[%c0_87, %c0_88] {strides = array<i32: 16, 1>} : memref<128x32xf32, #tpu.memory_space<vmem>>, vector<8x32xf32>
    %c1_89 = arith.constant 1 : index
    %c0_90 = arith.constant 0 : index
    %168 = tpu.strided_load %arg18[%c1_89, %c0_90] {strides = array<i32: 16, 1>} : memref<128x32xf32, #tpu.memory_space<vmem>>, vector<8x32xf32>
    %c2_91 = arith.constant 2 : index
    %c0_92 = arith.constant 0 : index
    %169 = tpu.strided_load %arg18[%c2_91, %c0_92] {strides = array<i32: 16, 1>} : memref<128x32xf32, #tpu.memory_space<vmem>>, vector<8x32xf32>
    %c3_93 = arith.constant 3 : index
    %c0_94 = arith.constant 0 : index
    %170 = tpu.strided_load %arg18[%c3_93, %c0_94] {strides = array<i32: 16, 1>} : memref<128x32xf32, #tpu.memory_space<vmem>>, vector<8x32xf32>
    %c4_95 = arith.constant 4 : index
    %c0_96 = arith.constant 0 : index
    %171 = tpu.strided_load %arg18[%c4_95, %c0_96] {strides = array<i32: 16, 1>} : memref<128x32xf32, #tpu.memory_space<vmem>>, vector<8x32xf32>
    %c5 = arith.constant 5 : index
    %c0_97 = arith.constant 0 : index
    %172 = tpu.strided_load %arg18[%c5, %c0_97] {strides = array<i32: 16, 1>} : memref<128x32xf32, #tpu.memory_space<vmem>>, vector<8x32xf32>
    %c6_98 = arith.constant 6 : index
    %c0_99 = arith.constant 0 : index
    %173 = tpu.strided_load %arg18[%c6_98, %c0_99] {strides = array<i32: 16, 1>} : memref<128x32xf32, #tpu.memory_space<vmem>>, vector<8x32xf32>
    %c7_100 = arith.constant 7 : index
    %c0_101 = arith.constant 0 : index
    %174 = tpu.strided_load %arg18[%c7_100, %c0_101] {strides = array<i32: 16, 1>} : memref<128x32xf32, #tpu.memory_space<vmem>>, vector<8x32xf32>
    %c8_102 = arith.constant 8 : index
    %c0_103 = arith.constant 0 : index
    %175 = tpu.strided_load %arg18[%c8_102, %c0_103] {strides = array<i32: 16, 1>} : memref<128x32xf32, #tpu.memory_space<vmem>>, vector<8x32xf32>
    %c9_104 = arith.constant 9 : index
    %c0_105 = arith.constant 0 : index
    %176 = tpu.strided_load %arg18[%c9_104, %c0_105] {strides = array<i32: 16, 1>} : memref<128x32xf32, #tpu.memory_space<vmem>>, vector<8x32xf32>
    %c10_106 = arith.constant 10 : index
    %c0_107 = arith.constant 0 : index
    %177 = tpu.strided_load %arg18[%c10_106, %c0_107] {strides = array<i32: 16, 1>} : memref<128x32xf32, #tpu.memory_space<vmem>>, vector<8x32xf32>
    %c11 = arith.constant 11 : index
    %c0_108 = arith.constant 0 : index
    %178 = tpu.strided_load %arg18[%c11, %c0_108] {strides = array<i32: 16, 1>} : memref<128x32xf32, #tpu.memory_space<vmem>>, vector<8x32xf32>
    %c12 = arith.constant 12 : index
    %c0_109 = arith.constant 0 : index
    %179 = tpu.strided_load %arg18[%c12, %c0_109] {strides = array<i32: 16, 1>} : memref<128x32xf32, #tpu.memory_space<vmem>>, vector<8x32xf32>
    %c13 = arith.constant 13 : index
    %c0_110 = arith.constant 0 : index
    %180 = tpu.strided_load %arg18[%c13, %c0_110] {strides = array<i32: 16, 1>} : memref<128x32xf32, #tpu.memory_space<vmem>>, vector<8x32xf32>
    %c14 = arith.constant 14 : index
    %c0_111 = arith.constant 0 : index
    %181 = tpu.strided_load %arg18[%c14, %c0_111] {strides = array<i32: 16, 1>} : memref<128x32xf32, #tpu.memory_space<vmem>>, vector<8x32xf32>
    %182 = tpu.concatenate %167, %168, %169, %170, %171, %172, %173, %174, %175, %176, %177, %178, %179, %180, %181 in 1 : vector<8x32xf32>, vector<8x32xf32>, vector<8x32xf32>, vector<8x32xf32>, vector<8x32xf32>, vector<8x32xf32>, vector<8x32xf32>, vector<8x32xf32>, vector<8x32xf32>, vector<8x32xf32>, vector<8x32xf32>, vector<8x32xf32>, vector<8x32xf32>, vector<8x32xf32>, vector<8x32xf32> -> vector<8x480xf32>
    %c0_112 = arith.constant 0 : index
    %c0_113 = arith.constant 0 : index
    %183 = vector.load %arg4[%c0_112, %c0_113] : memref<480x32xf32, #tpu.memory_space<vmem>>, vector<480x32xf32>
    %cst_114 = arith.constant dense<0.000000e+00> : vector<8x32xf32>
    %184 = tpu.matmul %182, %183, %cst_114 {dimension_numbers = #tpu.dot_dimension_numbers<[1], [0], [0], [1], [0, 0, 1, 1], [], []>} : vector<8x480xf32>, vector<480x32xf32>, vector<8x32xf32> -> vector<8x32xf32>
    %cst_115 = arith.constant dense<0.000000e+00> : vector<32xf32>
    %185 = vector.multi_reduction <add>, %184, %cst_115 [0] : vector<8x32xf32> to vector<32xf32>
    %186 = vector.shape_cast %185 : vector<32xf32> to vector<1x32xf32>
    %cst_116 = arith.constant 1.250000e-01 : f32
    %187 = vector.broadcast %cst_116 : f32 to vector<1x32xf32>
    %188 = arith.mulf %186, %187 : vector<1x32xf32>
    %189 = vector.broadcast %188 : vector<1x32xf32> to vector<8x32xf32>
    %190 = arith.subf %184, %189 : vector<8x32xf32>
    %191 = arith.mulf %190, %190 : vector<8x32xf32>
    %cst_117 = arith.constant dense<0.000000e+00> : vector<32xf32>
    %192 = vector.multi_reduction <add>, %191, %cst_117 [0] : vector<8x32xf32> to vector<32xf32>
    %193 = vector.shape_cast %192 : vector<32xf32> to vector<1x32xf32>
    %cst_118 = arith.constant 1.250000e-01 : f32
    %194 = vector.broadcast %cst_118 : f32 to vector<1x32xf32>
    %195 = arith.mulf %193, %194 : vector<1x32xf32>
    %c0_119 = arith.constant 0 : index
    %c0_120 = arith.constant 0 : index
    %196 = vector.load %arg13[%c0_119, %c0_120] : memref<1x32xf32, #tpu.memory_space<vmem>>, vector<1x32xf32>
    %cst_121 = arith.constant 9.99999974E-6 : f32
    %197 = vector.broadcast %cst_121 : f32 to vector<1x32xf32>
    %198 = arith.addf %195, %197 : vector<1x32xf32>
    %199 = math.rsqrt %198 : vector<1x32xf32>
    %200 = arith.mulf %196, %199 : vector<1x32xf32>
    %c0_122 = arith.constant 0 : index
    %c0_123 = arith.constant 0 : index
    %201 = vector.load %arg14[%c0_122, %c0_123] : memref<1x32xf32, #tpu.memory_space<vmem>>, vector<1x32xf32>
    %202 = arith.mulf %188, %200 : vector<1x32xf32>
    %203 = arith.subf %201, %202 : vector<1x32xf32>
    %204 = vector.broadcast %200 : vector<1x32xf32> to vector<8x32xf32>
    %205 = arith.mulf %184, %204 : vector<8x32xf32>
    %206 = vector.broadcast %203 : vector<1x32xf32> to vector<8x32xf32>
    %207 = arith.addf %205, %206 : vector<8x32xf32>
    %cst_124 = arith.constant 0.000000e+00 : f32
    %208 = vector.broadcast %cst_124 : f32 to vector<8x32xf32>
    %209 = arith.maximumf %207, %208 : vector<8x32xf32>
    %c0_125 = arith.constant 0 : index
    %c0_126 = arith.constant 0 : index
    %210 = vector.load %arg5[%c0_125, %c0_126] : memref<32x18xf32, #tpu.memory_space<vmem>>, vector<32x18xf32>
    %cst_127 = arith.constant dense<0.000000e+00> : vector<8x18xf32>
    %211 = tpu.matmul %209, %210, %cst_127 {dimension_numbers = #tpu.dot_dimension_numbers<[1], [0], [0], [1], [0, 0, 1, 1], [], []>} : vector<8x32xf32>, vector<32x18xf32>, vector<8x18xf32> -> vector<8x18xf32>
    %c0_128 = arith.constant 0 : index
    %c0_129 = arith.constant 0 : index
    %212 = vector.load %arg6[%c0_128, %c0_129] : memref<1x18xf32, #tpu.memory_space<vmem>>, vector<1x18xf32>
    %213 = vector.broadcast %212 : vector<1x18xf32> to vector<8x18xf32>
    %214 = arith.addf %211, %213 : vector<8x18xf32>
    %c0_130 = arith.constant 0 : index
    %c0_131 = arith.constant 0 : index
    %215 = vector.load %arg15[%c0_130, %c0_131] : memref<8x18xf32, #tpu.memory_space<vmem>>, vector<8x18xf32>
    tpu.vector_store %arg15[%c0_130, %c0_131], %214 {strides = array<i32>} : memref<8x18xf32, #tpu.memory_space<vmem>>, vector<8x18xf32>,
    return
  }
}

</mosaic_0001>

<llo_original>
// kernel: pretrain_forward.1
$region0: #{pretrain_forward.1}
  #allocation0 [shape = 'u32[]', space=smem, size = 0x4, offset = 0x4, fixed_abs, tag = 'smem constant byte address 0x4 - core index']
  #allocation1 [shape = 'u32[144,128]{1,0:T(1,128)}', space=vmem, size = 0x12000, scoped, tag = 'internal scratch']
  #allocation2 [shape = 'f32[528,32]{1,0:T(8,128)}', space=vmem, size = 0x42000, scoped, tag = 'scratch operand']
  #allocation3 [shape = 'f32[272,32]{1,0:T(8,128)}', space=vmem, size = 0x22000, scoped, tag = 'scratch operand']
  #allocation4 [shape = 'f32[128,32]{1,0:T(8,128)}', space=vmem, size = 0x10000, scoped, tag = 'scratch operand']
  %s0 = inlined_call_operand.vmem [shape: f32[520,2], index: 0, kind: input, shape index: {}]
  %s1 = inlined_call_operand.vmem [shape: f32[5,32], index: 1, kind: input, shape index: {}]
  %s2 = inlined_call_operand.vmem [shape: f32[160,32], index: 2, kind: input, shape index: {}]
  %s3 = inlined_call_operand.vmem [shape: f32[160,32], index: 3, kind: input, shape index: {}]
  %s4 = inlined_call_operand.vmem [shape: f32[480,32], index: 4, kind: input, shape index: {}]
  %s5 = inlined_call_operand.vmem [shape: f32[32,18], index: 5, kind: input, shape index: {}]
  %s6 = inlined_call_operand.vmem [shape: f32[1,18], index: 6, kind: input, shape index: {}]
  %s7 = inlined_call_operand.vmem [shape: f32[1,32], index: 7, kind: input, shape index: {}]
  %s8 = inlined_call_operand.vmem [shape: f32[1,32], index: 8, kind: input, shape index: {}]
  %s9 = inlined_call_operand.vmem [shape: f32[1,32], index: 9, kind: input, shape index: {}]
  %s10 = inlined_call_operand.vmem [shape: f32[1,32], index: 10, kind: input, shape index: {}]
  %s11 = inlined_call_operand.vmem [shape: f32[1,32], index: 11, kind: input, shape index: {}]
  %s12 = inlined_call_operand.vmem [shape: f32[1,32], index: 12, kind: input, shape index: {}]
  %s13 = inlined_call_operand.vmem [shape: f32[1,32], index: 13, kind: input, shape index: {}]
  %s14 = inlined_call_operand.vmem [shape: f32[1,32], index: 14, kind: input, shape index: {}]
  %s15 = inlined_call_operand.hbm [shape: f32[8,18], index: 15, kind: output, shape index: {}]
  %s16 = sld [smem:[#allocation0]]
  $region70: #{pretrain_forward.1} parent=0
    _
  %s18 = ssub.s32 1, %s16
  %s19 = scalar_select 0, %s18, %s16
  $region1: #{pretrain_forward.1} parent=0
    #allocation5 [shape = 'u8[4096]{0}', space=vmem, size = 0x1000, scoped, tag = 'output window, operand 0, single buffered']
    #allocation6 [shape = 's32[1]{0}', space=sflag, size = 0x4, scoped, tag = 'scoped memory for pretrain_forward.1']
    %20 = vsyncpa [#allocation6], 0
    // Predicated region
    $region2: #{pretrain_forward.1} parent=1 // pred_check
      _
    $region3: #{pretrain_forward.1} parent=1 // pred_check_branch
      %22 = sbr.rel (0) target = $region5
    $region4: #{pretrain_forward.1} parent=1 // pred_region
      _
    $region5: #{pretrain_forward.1} parent=1 // pred_fallthru
      _
    // Predicated region
    $region6: #{pretrain_forward.1} parent=1 // pred_check
      _
    $region7: #{pretrain_forward.1} parent=1 // pred_check_branch
      %24 = sbr.rel (0) target = $region9
    $region8: #{pretrain_forward.1} parent=1 // pred_region
      _
    $region9: #{pretrain_forward.1} parent=1 // pred_fallthru
      _
    // Predicated region
    $region10: #{pretrain_forward.1} parent=1 // pred_check
      _
    $region11: #{pretrain_forward.1} parent=1 // pred_check_branch
      %26 = sbr.rel (0) target = $region13
    $region12: #{pretrain_forward.1} parent=1 // pred_region
      _
    $region13: #{pretrain_forward.1} parent=1 // pred_fallthru
      _
    // Predicated region
    $region14: #{pretrain_forward.1} parent=1 // pred_check
      _
    $region15: #{pretrain_forward.1} parent=1 // pred_check_branch
      %28 = sbr.rel (0) target = $region17
    $region16: #{pretrain_forward.1} parent=1 // pred_region
      _
    $region17: #{pretrain_forward.1} parent=1 // pred_fallthru
      _
    // Predicated region
    $region18: #{pretrain_forward.1} parent=1 // pred_check
      _
    $region19: #{pretrain_forward.1} parent=1 // pred_check_branch
      %30 = sbr.rel (0) target = $region21
    $region20: #{pretrain_forward.1} parent=1 // pred_region
      _
    $region21: #{pretrain_forward.1} parent=1 // pred_fallthru
      _
    // Predicated region
    $region22: #{pretrain_forward.1} parent=1 // pred_check
      _
    $region23: #{pretrain_forward.1} parent=1 // pred_check_branch
      %32 = sbr.rel (0) target = $region25
    $region24: #{pretrain_forward.1} parent=1 // pred_region
      _
    $region25: #{pretrain_forward.1} parent=1 // pred_fallthru
      _
    // Predicated region
    $region26: #{pretrain_forward.1} parent=1 // pred_check
      _
    $region27: #{pretrain_forward.1} parent=1 // pred_check_branch
      %34 = sbr.rel (0) target = $region29
    $region28: #{pretrain_forward.1} parent=1 // pred_region
      _
    $region29: #{pretrain_forward.1} parent=1 // pred_fallthru
      _
    // Predicated region
    $region30: #{pretrain_forward.1} parent=1 // pred_check
      _
    $region31: #{pretrain_forward.1} parent=1 // pred_check_branch
      %36 = sbr.rel (0) target = $region33
    $region32: #{pretrain_forward.1} parent=1 // pred_region
      _
    $region33: #{pretrain_forward.1} parent=1 // pred_fallthru
      _
    // Predicated region
    $region34: #{pretrain_forward.1} parent=1 // pred_check
      _
    $region35: #{pretrain_forward.1} parent=1 // pred_check_branch
      %38 = sbr.rel (0) target = $region37
    $region36: #{pretrain_forward.1} parent=1 // pred_region
      _
    $region37: #{pretrain_forward.1} parent=1 // pred_fallthru
      _
    // Predicated region
    $region38: #{pretrain_forward.1} parent=1 // pred_check
      _
    $region39: #{pretrain_forward.1} parent=1 // pred_check_branch
      %40 = sbr.rel (0) target = $region41
    $region40: #{pretrain_forward.1} parent=1 // pred_region
      _
    $region41: #{pretrain_forward.1} parent=1 // pred_fallthru
      _
    // Predicated region
    $region42: #{pretrain_forward.1} parent=1 // pred_check
      _
    $region43: #{pretrain_forward.1} parent=1 // pred_check_branch
      %42 = sbr.rel (0) target = $region45
    $region44: #{pretrain_forward.1} parent=1 // pred_region
      _
    $region45: #{pretrain_forward.1} parent=1 // pred_fallthru
      _
    // Predicated region
    $region46: #{pretrain_forward.1} parent=1 // pred_check
      _
    $region47: #{pretrain_forward.1} parent=1 // pred_check_branch
      %44 = sbr.rel (0) target = $region49
    $region48: #{pretrain_forward.1} parent=1 // pred_region
      _
    $region49: #{pretrain_forward.1} parent=1 // pred_fallthru
      _
    // Predicated region
    $region50: #{pretrain_forward.1} parent=1 // pred_check
      _
    $region51: #{pretrain_forward.1} parent=1 // pred_check_branch
      %46 = sbr.rel (0) target = $region53
    $region52: #{pretrain_forward.1} parent=1 // pred_region
      _
    $region53: #{pretrain_forward.1} parent=1 // pred_fallthru
      _
    // Predicated region
    $region54: #{pretrain_forward.1} parent=1 // pred_check
      _
    $region55: #{pretrain_forward.1} parent=1 // pred_check_branch
      %48 = sbr.rel (0) target = $region57
    $region56: #{pretrain_forward.1} parent=1 // pred_region
      _
    $region57: #{pretrain_forward.1} parent=1 // pred_fallthru
      _
    // Predicated region
    $region58: #{pretrain_forward.1} parent=1 // pred_check
      _
    $region59: #{pretrain_forward.1} parent=1 // pred_check_branch
      %50 = sbr.rel (0) target = $region61
    $region60: #{pretrain_forward.1} parent=1 // pred_region
      _
    $region61: #{pretrain_forward.1} parent=1 // pred_fallthru
      _
    %v51 = vld [vmem:[%s0] sm:$0xff]
    %v52 = vld [vmem:[%s0 + $0x8] sm:$0xff]
    %v53 = vld [vmem:[%s0 + $0x10] sm:$0xff]
    %v54 = vld [vmem:[%s0 + $0x18] sm:$0xff]
    %v55 = vld [vmem:[%s0 + $0x20] sm:$0xff]
    %v56 = vld [vmem:[%s0 + $0x28] sm:$0xff]
    %v57 = vld [vmem:[%s0 + $0x30] sm:$0xff]
    %v58 = vld [vmem:[%s0 + $0x38] sm:$0xff]
    %v59 = vld [vmem:[%s0 + $0x40] sm:$0xff]
    %v60 = vld [vmem:[%s0 + $0x48] sm:$0xff]
    %v61 = vld [vmem:[%s0 + $0x50] sm:$0xff]
    %v62 = vld [vmem:[%s0 + $0x58] sm:$0xff]
    %v63 = vld [vmem:[%s0 + $0x60] sm:$0xff]
    %v64 = vld [vmem:[%s0 + $0x68] sm:$0xff]
    %v65 = vld [vmem:[%s0 + $0x70] sm:$0xff]
    %v66 = vld [vmem:[%s0 + $0x78] sm:$0xff]
    %v67 = vld [vmem:[%s0 + $0x80] sm:$0xff]
    %v68 = vld [vmem:[%s0 + $0x88] sm:$0xff]
    %v69 = vld [vmem:[%s0 + $0x90] sm:$0xff]
    %v70 = vld [vmem:[%s0 + $0x98] sm:$0xff]
    %v71 = vld [vmem:[%s0 + $0xa0] sm:$0xff]
    %v72 = vld [vmem:[%s0 + $0xa8] sm:$0xff]
    %v73 = vld [vmem:[%s0 + $0xb0] sm:$0xff]
    %v74 = vld [vmem:[%s0 + $0xb8] sm:$0xff]
    %v75 = vld [vmem:[%s0 + $0xc0] sm:$0xff]
    %v76 = vld [vmem:[%s0 + $0xc8] sm:$0xff]
    %v77 = vld [vmem:[%s0 + $0xd0] sm:$0xff]
    %v78 = vld [vmem:[%s0 + $0xd8] sm:$0xff]
    %v79 = vld [vmem:[%s0 + $0xe0] sm:$0xff]
    %v80 = vld [vmem:[%s0 + $0xe8] sm:$0xff]
    %v81 = vld [vmem:[%s0 + $0xf0] sm:$0xff]
    %v82 = vld [vmem:[%s0 + $0xf8] sm:$0xff]
    %v83 = vld [vmem:[%s0 + $0x100] sm:$0xff]
    %v84 = vld [vmem:[%s0 + $0x108] sm:$0xff]
    %v85 = vld [vmem:[%s0 + $0x110] sm:$0xff]
    %v86 = vld [vmem:[%s0 + $0x118] sm:$0xff]
    %v87 = vld [vmem:[%s0 + $0x120] sm:$0xff]
    %v88 = vld [vmem:[%s0 + $0x128] sm:$0xff]
    %v89 = vld [vmem:[%s0 + $0x130] sm:$0xff]
    %v90 = vld [vmem:[%s0 + $0x138] sm:$0xff]
    %v91 = vld [vmem:[%s0 + $0x140] sm:$0xff]
    %v92 = vld [vmem:[%s0 + $0x148] sm:$0xff]
    %v93 = vld [vmem:[%s0 + $0x150] sm:$0xff]
    %v94 = vld [vmem:[%s0 + $0x158] sm:$0xff]
    %v95 = vld [vmem:[%s0 + $0x160] sm:$0xff]
    %v96 = vld [vmem:[%s0 + $0x168] sm:$0xff]
    %v97 = vld [vmem:[%s0 + $0x170] sm:$0xff]
    %v98 = vld [vmem:[%s0 + $0x178] sm:$0xff]
    %v99 = vld [vmem:[%s0 + $0x180] sm:$0xff]
    %v100 = vld [vmem:[%s0 + $0x188] sm:$0xff]
    %v101 = vld [vmem:[%s0 + $0x190] sm:$0xff]
    %v102 = vld [vmem:[%s0 + $0x198] sm:$0xff]
    %v103 = vld [vmem:[%s0 + $0x1a0] sm:$0xff]
    %v104 = vld [vmem:[%s0 + $0x1a8] sm:$0xff]
    %v105 = vld [vmem:[%s0 + $0x1b0] sm:$0xff]
    %v106 = vld [vmem:[%s0 + $0x1b8] sm:$0xff]
    %v107 = vld [vmem:[%s0 + $0x1c0] sm:$0xff]
    %v108 = vld [vmem:[%s0 + $0x1c8] sm:$0xff]
    %v109 = vld [vmem:[%s0 + $0x1d0] sm:$0xff]
    %v110 = vld [vmem:[%s0 + $0x1d8] sm:$0xff]
    %v111 = vld [vmem:[%s0 + $0x1e0] sm:$0xff]
    %v112 = vld [vmem:[%s0 + $0x1e8] sm:$0xff]
    %v113 = vld [vmem:[%s0 + $0x1f0] sm:$0xff]
    %v114 = vld [vmem:[%s0 + $0x1f8] sm:$0xff]
    %v115 = vld [vmem:[%s0 + $0x1] sm:$0xff]
    %v116 = vld [vmem:[%s0 + $0x9] sm:$0xff]
    %v117 = vld [vmem:[%s0 + $0x11] sm:$0xff]
    %v118 = vld [vmem:[%s0 + $0x19] sm:$0xff]
    %v119 = vld [vmem:[%s0 + $0x21] sm:$0xff]
    %v120 = vld [vmem:[%s0 + $0x29] sm:$0xff]
    %v121 = vld [vmem:[%s0 + $0x31] sm:$0xff]
    %v122 = vld [vmem:[%s0 + $0x39] sm:$0xff]
    %v123 = vld [vmem:[%s0 + $0x41] sm:$0xff]
    %v124 = vld [vmem:[%s0 + $0x49] sm:$0xff]
    %v125 = vld [vmem:[%s0 + $0x51] sm:$0xff]
    %v126 = vld [vmem:[%s0 + $0x59] sm:$0xff]
    %v127 = vld [vmem:[%s0 + $0x61] sm:$0xff]
    %v128 = vld [vmem:[%s0 + $0x69] sm:$0xff]
    %v129 = vld [vmem:[%s0 + $0x71] sm:$0xff]
    %v130 = vld [vmem:[%s0 + $0x79] sm:$0xff]
    %v131 = vld [vmem:[%s0 + $0x81] sm:$0xff]
    %v132 = vld [vmem:[%s0 + $0x89] sm:$0xff]
    %v133 = vld [vmem:[%s0 + $0x91] sm:$0xff]
    %v134 = vld [vmem:[%s0 + $0x99] sm:$0xff]
    %v135 = vld [vmem:[%s0 + $0xa1] sm:$0xff]
    %v136 = vld [vmem:[%s0 + $0xa9] sm:$0xff]
    %v137 = vld [vmem:[%s0 + $0xb1] sm:$0xff]
    %v138 = vld [vmem:[%s0 + $0xb9] sm:$0xff]
    %v139 = vld [vmem:[%s0 + $0xc1] sm:$0xff]
    %v140 = vld [vmem:[%s0 + $0xc9] sm:$0xff]
    %v141 = vld [vmem:[%s0 + $0xd1] sm:$0xff]
    %v142 = vld [vmem:[%s0 + $0xd9] sm:$0xff]
    %v143 = vld [vmem:[%s0 + $0xe1] sm:$0xff]
    %v144 = vld [vmem:[%s0 + $0xe9] sm:$0xff]
    %v145 = vld [vmem:[%s0 + $0xf1] sm:$0xff]
    %v146 = vld [vmem:[%s0 + $0xf9] sm:$0xff]
    %v147 = vld [vmem:[%s0 + $0x101] sm:$0xff]
    %v148 = vld [vmem:[%s0 + $0x109] sm:$0xff]
    %v149 = vld [vmem:[%s0 + $0x111] sm:$0xff]
    %v150 = vld [vmem:[%s0 + $0x119] sm:$0xff]
    %v151 = vld [vmem:[%s0 + $0x121] sm:$0xff]
    %v152 = vld [vmem:[%s0 + $0x129] sm:$0xff]
    %v153 = vld [vmem:[%s0 + $0x131] sm:$0xff]
    %v154 = vld [vmem:[%s0 + $0x139] sm:$0xff]
    %v155 = vld [vmem:[%s0 + $0x141] sm:$0xff]
    %v156 = vld [vmem:[%s0 + $0x149] sm:$0xff]
    %v157 = vld [vmem:[%s0 + $0x151] sm:$0xff]
    %v158 = vld [vmem:[%s0 + $0x159] sm:$0xff]
    %v159 = vld [vmem:[%s0 + $0x161] sm:$0xff]
    %v160 = vld [vmem:[%s0 + $0x169] sm:$0xff]
    %v161 = vld [vmem:[%s0 + $0x171] sm:$0xff]
    %v162 = vld [vmem:[%s0 + $0x179] sm:$0xff]
    %v163 = vld [vmem:[%s0 + $0x181] sm:$0xff]
    %v164 = vld [vmem:[%s0 + $0x189] sm:$0xff]
    %v165 = vld [vmem:[%s0 + $0x191] sm:$0xff]
    %v166 = vld [vmem:[%s0 + $0x199] sm:$0xff]
    %v167 = vld [vmem:[%s0 + $0x1a1] sm:$0xff]
    %v168 = vld [vmem:[%s0 + $0x1a9] sm:$0xff]
    %v169 = vld [vmem:[%s0 + $0x1b1] sm:$0xff]
    %v170 = vld [vmem:[%s0 + $0x1b9] sm:$0xff]
    %v171 = vld [vmem:[%s0 + $0x1c1] sm:$0xff]
    %v172 = vld [vmem:[%s0 + $0x1c9] sm:$0xff]
    %v173 = vld [vmem:[%s0 + $0x1d1] sm:$0xff]
    %v174 = vld [vmem:[%s0 + $0x1d9] sm:$0xff]
    %v175 = vld [vmem:[%s0 + $0x1e1] sm:$0xff]
    %v176 = vld [vmem:[%s0 + $0x1e9] sm:$0xff]
    %v177 = vld [vmem:[%s0 + $0x1f1] sm:$0xff]
    %v178 = vld [vmem:[%s0 + $0x1f9] sm:$0xff]
    %v179 = vld [vmem:[%s0 + $0x2] sm:$0xff]
    %v180 = vld [vmem:[%s0 + $0xa] sm:$0xff]
    %v181 = vld [vmem:[%s0 + $0x12] sm:$0xff]
    %v182 = vld [vmem:[%s0 + $0x1a] sm:$0xff]
    %v183 = vld [vmem:[%s0 + $0x22] sm:$0xff]
    %v184 = vld [vmem:[%s0 + $0x2a] sm:$0xff]
    %v185 = vld [vmem:[%s0 + $0x32] sm:$0xff]
    %v186 = vld [vmem:[%s0 + $0x3a] sm:$0xff]
    %v187 = vld [vmem:[%s0 + $0x42] sm:$0xff]
    %v188 = vld [vmem:[%s0 + $0x4a] sm:$0xff]
    %v189 = vld [vmem:[%s0 + $0x52] sm:$0xff]
    %v190 = vld [vmem:[%s0 + $0x5a] sm:$0xff]
    %v191 = vld [vmem:[%s0 + $0x62] sm:$0xff]
    %v192 = vld [vmem:[%s0 + $0x6a] sm:$0xff]
    %v193 = vld [vmem:[%s0 + $0x72] sm:$0xff]
    %v194 = vld [vmem:[%s0 + $0x7a] sm:$0xff]
    %v195 = vld [vmem:[%s0 + $0x82] sm:$0xff]
    %v196 = vld [vmem:[%s0 + $0x8a] sm:$0xff]
    %v197 = vld [vmem:[%s0 + $0x92] sm:$0xff]
    %v198 = vld [vmem:[%s0 + $0x9a] sm:$0xff]
    %v199 = vld [vmem:[%s0 + $0xa2] sm:$0xff]
    %v200 = vld [vmem:[%s0 + $0xaa] sm:$0xff]
    %v201 = vld [vmem:[%s0 + $0xb2] sm:$0xff]
    %v202 = vld [vmem:[%s0 + $0xba] sm:$0xff]
    %v203 = vld [vmem:[%s0 + $0xc2] sm:$0xff]
    %v204 = vld [vmem:[%s0 + $0xca] sm:$0xff]
    %v205 = vld [vmem:[%s0 + $0xd2] sm:$0xff]
    %v206 = vld [vmem:[%s0 + $0xda] sm:$0xff]
    %v207 = vld [vmem:[%s0 + $0xe2] sm:$0xff]
    %v208 = vld [vmem:[%s0 + $0xea] sm:$0xff]
    %v209 = vld [vmem:[%s0 + $0xf2] sm:$0xff]
    %v210 = vld [vmem:[%s0 + $0xfa] sm:$0xff]
    %v211 = vld [vmem:[%s0 + $0x102] sm:$0xff]
    %v212 = vld [vmem:[%s0 + $0x10a] sm:$0xff]
    %v213 = vld [vmem:[%s0 + $0x112] sm:$0xff]
    %v214 = vld [vmem:[%s0 + $0x11a] sm:$0xff]
    %v215 = vld [vmem:[%s0 + $0x122] sm:$0xff]
    %v216 = vld [vmem:[%s0 + $0x12a] sm:$0xff]
    %v217 = vld [vmem:[%s0 + $0x132] sm:$0xff]
    %v218 = vld [vmem:[%s0 + $0x13a] sm:$0xff]
    %v219 = vld [vmem:[%s0 + $0x142] sm:$0xff]
    %v220 = vld [vmem:[%s0 + $0x14a] sm:$0xff]
    %v221 = vld [vmem:[%s0 + $0x152] sm:$0xff]
    %v222 = vld [vmem:[%s0 + $0x15a] sm:$0xff]
    %v223 = vld [vmem:[%s0 + $0x162] sm:$0xff]
    %v224 = vld [vmem:[%s0 + $0x16a] sm:$0xff]
    %v225 = vld [vmem:[%s0 + $0x172] sm:$0xff]
    %v226 = vld [vmem:[%s0 + $0x17a] sm:$0xff]
    %v227 = vld [vmem:[%s0 + $0x182] sm:$0xff]
    %v228 = vld [vmem:[%s0 + $0x18a] sm:$0xff]
    %v229 = vld [vmem:[%s0 + $0x192] sm:$0xff]
    %v230 = vld [vmem:[%s0 + $0x19a] sm:$0xff]
    %v231 = vld [vmem:[%s0 + $0x1a2] sm:$0xff]
    %v232 = vld [vmem:[%s0 + $0x1aa] sm:$0xff]
    %v233 = vld [vmem:[%s0 + $0x1b2] sm:$0xff]
    %v234 = vld [vmem:[%s0 + $0x1ba] sm:$0xff]
    %v235 = vld [vmem:[%s0 + $0x1c2] sm:$0xff]
    %v236 = vld [vmem:[%s0 + $0x1ca] sm:$0xff]
    %v237 = vld [vmem:[%s0 + $0x1d2] sm:$0xff]
    %v238 = vld [vmem:[%s0 + $0x1da] sm:$0xff]
    %v239 = vld [vmem:[%s0 + $0x1e2] sm:$0xff]
    %v240 = vld [vmem:[%s0 + $0x1ea] sm:$0xff]
    %v241 = vld [vmem:[%s0 + $0x1f2] sm:$0xff]
    %v242 = vld [vmem:[%s0 + $0x1fa] sm:$0xff]
    %v243 = vld [vmem:[%s1] sm:$0x1]
    %245 = vset.pattern.permute.xlu0 0
    %246 = vperm.xlu0 %245, %v51
    %v247 = vpop.permute.xlu0 %246
    %250 = vset.pattern.permute.xlu0 0
    %251 = vperm.xlu0 %250, %v52
    %v252 = vpop.permute.xlu0 %251
    %255 = vset.pattern.permute.xlu0 0
    %256 = vperm.xlu0 %255, %v53
    %v257 = vpop.permute.xlu0 %256
    %260 = vset.pattern.permute.xlu0 0
    %261 = vperm.xlu0 %260, %v54
    %v262 = vpop.permute.xlu0 %261
    %265 = vset.pattern.permute.xlu0 0
    %266 = vperm.xlu0 %265, %v55
    %v267 = vpop.permute.xlu0 %266
    %270 = vset.pattern.permute.xlu0 0
    %271 = vperm.xlu0 %270, %v56
    %v272 = vpop.permute.xlu0 %271
    %275 = vset.pattern.permute.xlu0 0
    %276 = vperm.xlu0 %275, %v57
    %v277 = vpop.permute.xlu0 %276
    %280 = vset.pattern.permute.xlu0 0
    %281 = vperm.xlu0 %280, %v58
    %v282 = vpop.permute.xlu0 %281
    %285 = vset.pattern.permute.xlu0 0
    %286 = vperm.xlu0 %285, %v59
    %v287 = vpop.permute.xlu0 %286
    %290 = vset.pattern.permute.xlu0 0
    %291 = vperm.xlu0 %290, %v60
    %v292 = vpop.permute.xlu0 %291
    %295 = vset.pattern.permute.xlu0 0
    %296 = vperm.xlu0 %295, %v61
    %v297 = vpop.permute.xlu0 %296
    %300 = vset.pattern.permute.xlu0 0
    %301 = vperm.xlu0 %300, %v62
    %v302 = vpop.permute.xlu0 %301
    %305 = vset.pattern.permute.xlu0 0
    %306 = vperm.xlu0 %305, %v63
    %v307 = vpop.permute.xlu0 %306
    %310 = vset.pattern.permute.xlu0 0
    %311 = vperm.xlu0 %310, %v64
    %v312 = vpop.permute.xlu0 %311
    %315 = vset.pattern.permute.xlu0 0
    %316 = vperm.xlu0 %315, %v65
    %v317 = vpop.permute.xlu0 %316
    %320 = vset.pattern.permute.xlu0 0
    %321 = vperm.xlu0 %320, %v66
    %v322 = vpop.permute.xlu0 %321
    %325 = vset.pattern.permute.xlu0 0
    %326 = vperm.xlu0 %325, %v67
    %v327 = vpop.permute.xlu0 %326
    %330 = vset.pattern.permute.xlu0 0
    %331 = vperm.xlu0 %330, %v68
    %v332 = vpop.permute.xlu0 %331
    %335 = vset.pattern.permute.xlu0 0
    %336 = vperm.xlu0 %335, %v69
    %v337 = vpop.permute.xlu0 %336
    %340 = vset.pattern.permute.xlu0 0
    %341 = vperm.xlu0 %340, %v70
    %v342 = vpop.permute.xlu0 %341
    %345 = vset.pattern.permute.xlu0 0
    %346 = vperm.xlu0 %345, %v71
    %v347 = vpop.permute.xlu0 %346
    %350 = vset.pattern.permute.xlu0 0
    %351 = vperm.xlu0 %350, %v72
    %v352 = vpop.permute.xlu0 %351
    %355 = vset.pattern.permute.xlu0 0
    %356 = vperm.xlu0 %355, %v73
    %v357 = vpop.permute.xlu0 %356
    %360 = vset.pattern.permute.xlu0 0
    %361 = vperm.xlu0 %360, %v74
    %v362 = vpop.permute.xlu0 %361
    %365 = vset.pattern.permute.xlu0 0
    %366 = vperm.xlu0 %365, %v75
    %v367 = vpop.permute.xlu0 %366
    %370 = vset.pattern.permute.xlu0 0
    %371 = vperm.xlu0 %370, %v76
    %v372 = vpop.permute.xlu0 %371
    %375 = vset.pattern.permute.xlu0 0
    %376 = vperm.xlu0 %375, %v77
    %v377 = vpop.permute.xlu0 %376
    %380 = vset.pattern.permute.xlu0 0
    %381 = vperm.xlu0 %380, %v78
    %v382 = vpop.permute.xlu0 %381
    %385 = vset.pattern.permute.xlu0 0
    %386 = vperm.xlu0 %385, %v79
    %v387 = vpop.permute.xlu0 %386
    %390 = vset.pattern.permute.xlu0 0
    %391 = vperm.xlu0 %390, %v80
    %v392 = vpop.permute.xlu0 %391
    %395 = vset.pattern.permute.xlu0 0
    %396 = vperm.xlu0 %395, %v81
    %v397 = vpop.permute.xlu0 %396
    %400 = vset.pattern.permute.xlu0 0
    %401 = vperm.xlu0 %400, %v82
    %v402 = vpop.permute.xlu0 %401
    %405 = vset.pattern.permute.xlu0 0
    %406 = vperm.xlu0 %405, %v83
    %v407 = vpop.permute.xlu0 %406
    %410 = vset.pattern.permute.xlu0 0
    %411 = vperm.xlu0 %410, %v84
    %v412 = vpop.permute.xlu0 %411
    %415 = vset.pattern.permute.xlu0 0
    %416 = vperm.xlu0 %415, %v85
    %v417 = vpop.permute.xlu0 %416
    %420 = vset.pattern.permute.xlu0 0
    %421 = vperm.xlu0 %420, %v86
    %v422 = vpop.permute.xlu0 %421
    %425 = vset.pattern.permute.xlu0 0
    %426 = vperm.xlu0 %425, %v87
    %v427 = vpop.permute.xlu0 %426
    %430 = vset.pattern.permute.xlu0 0
    %431 = vperm.xlu0 %430, %v88
    %v432 = vpop.permute.xlu0 %431
    %435 = vset.pattern.permute.xlu0 0
    %436 = vperm.xlu0 %435, %v89
    %v437 = vpop.permute.xlu0 %436
    %440 = vset.pattern.permute.xlu0 0
    %441 = vperm.xlu0 %440, %v90
    %v442 = vpop.permute.xlu0 %441
    %445 = vset.pattern.permute.xlu0 0
    %446 = vperm.xlu0 %445, %v91
    %v447 = vpop.permute.xlu0 %446
    %450 = vset.pattern.permute.xlu0 0
    %451 = vperm.xlu0 %450, %v92
    %v452 = vpop.permute.xlu0 %451
    %455 = vset.pattern.permute.xlu0 0
    %456 = vperm.xlu0 %455, %v93
    %v457 = vpop.permute.xlu0 %456
    %460 = vset.pattern.permute.xlu0 0
    %461 = vperm.xlu0 %460, %v94
    %v462 = vpop.permute.xlu0 %461
    %465 = vset.pattern.permute.xlu0 0
    %466 = vperm.xlu0 %465, %v95
    %v467 = vpop.permute.xlu0 %466
    %470 = vset.pattern.permute.xlu0 0
    %471 = vperm.xlu0 %470, %v96
    %v472 = vpop.permute.xlu0 %471
    %475 = vset.pattern.permute.xlu0 0
    %476 = vperm.xlu0 %475, %v97
    %v477 = vpop.permute.xlu0 %476
    %480 = vset.pattern.permute.xlu0 0
    %481 = vperm.xlu0 %480, %v98
    %v482 = vpop.permute.xlu0 %481
    %485 = vset.pattern.permute.xlu0 0
    %486 = vperm.xlu0 %485, %v99
    %v487 = vpop.permute.xlu0 %486
    %490 = vset.pattern.permute.xlu0 0
    %491 = vperm.xlu0 %490, %v100
    %v492 = vpop.permute.xlu0 %491
    %495 = vset.pattern.permute.xlu0 0
    %496 = vperm.xlu0 %495, %v101
    %v497 = vpop.permute.xlu0 %496
    %500 = vset.pattern.permute.xlu0 0
    %501 = vperm.xlu0 %500, %v102
    %v502 = vpop.permute.xlu0 %501
    %505 = vset.pattern.permute.xlu0 0
    %506 = vperm.xlu0 %505, %v103
    %v507 = vpop.permute.xlu0 %506
    %510 = vset.pattern.permute.xlu0 0
    %511 = vperm.xlu0 %510, %v104
    %v512 = vpop.permute.xlu0 %511
    %515 = vset.pattern.permute.xlu0 0
    %516 = vperm.xlu0 %515, %v105
    %v517 = vpop.permute.xlu0 %516
    %520 = vset.pattern.permute.xlu0 0
    %521 = vperm.xlu0 %520, %v106
    %v522 = vpop.permute.xlu0 %521
    %525 = vset.pattern.permute.xlu0 0
    %526 = vperm.xlu0 %525, %v107
    %v527 = vpop.permute.xlu0 %526
    %530 = vset.pattern.permute.xlu0 0
    %531 = vperm.xlu0 %530, %v108
    %v532 = vpop.permute.xlu0 %531
    %535 = vset.pattern.permute.xlu0 0
    %536 = vperm.xlu0 %535, %v109
    %v537 = vpop.permute.xlu0 %536
    %540 = vset.pattern.permute.xlu0 0
    %541 = vperm.xlu0 %540, %v110
    %v542 = vpop.permute.xlu0 %541
    %545 = vset.pattern.permute.xlu0 0
    %546 = vperm.xlu0 %545, %v111
    %v547 = vpop.permute.xlu0 %546
    %550 = vset.pattern.permute.xlu0 0
    %551 = vperm.xlu0 %550, %v112
    %v552 = vpop.permute.xlu0 %551
    %555 = vset.pattern.permute.xlu0 0
    %556 = vperm.xlu0 %555, %v113
    %v557 = vpop.permute.xlu0 %556
    %560 = vset.pattern.permute.xlu0 0
    %561 = vperm.xlu0 %560, %v114
    %v562 = vpop.permute.xlu0 %561
    %v564 = vlaneseq
    %v565 = vshrl.u32 %v564, 7
    %v566 = vsub.s32 0, %v565
    %v567 = vrot.slane %v243, %v566
    %v568 = vmul.f32 %v247, %v567
    %v569 = vmul.f32 %v252, %v567
    %v570 = vmul.f32 %v257, %v567
    %v571 = vmul.f32 %v262, %v567
    %v572 = vmul.f32 %v267, %v567
    %v573 = vmul.f32 %v272, %v567
    %v574 = vmul.f32 %v277, %v567
    %v575 = vmul.f32 %v282, %v567
    %v576 = vmul.f32 %v287, %v567
    %v577 = vmul.f32 %v292, %v567
    %v578 = vmul.f32 %v297, %v567
    %v579 = vmul.f32 %v302, %v567
    %v580 = vmul.f32 %v307, %v567
    %v581 = vmul.f32 %v312, %v567
    %v582 = vmul.f32 %v317, %v567
    %v583 = vmul.f32 %v322, %v567
    %v584 = vmul.f32 %v327, %v567
    %v585 = vmul.f32 %v332, %v567
    %v586 = vmul.f32 %v337, %v567
    %v587 = vmul.f32 %v342, %v567
    %v588 = vmul.f32 %v347, %v567
    %v589 = vmul.f32 %v352, %v567
    %v590 = vmul.f32 %v357, %v567
    %v591 = vmul.f32 %v362, %v567
    %v592 = vmul.f32 %v367, %v567
    %v593 = vmul.f32 %v372, %v567
    %v594 = vmul.f32 %v377, %v567
    %v595 = vmul.f32 %v382, %v567
    %v596 = vmul.f32 %v387, %v567
    %v597 = vmul.f32 %v392, %v567
    %v598 = vmul.f32 %v397, %v567
    %v599 = vmul.f32 %v402, %v567
    %v600 = vmul.f32 %v407, %v567
    %v601 = vmul.f32 %v412, %v567
    %v602 = vmul.f32 %v417, %v567
    %v603 = vmul.f32 %v422, %v567
    %v604 = vmul.f32 %v427, %v567
    %v605 = vmul.f32 %v432, %v567
    %v606 = vmul.f32 %v437, %v567
    %v607 = vmul.f32 %v442, %v567
    %v608 = vmul.f32 %v447, %v567
    %v609 = vmul.f32 %v452, %v567
    %v610 = vmul.f32 %v457, %v567
    %v611 = vmul.f32 %v462, %v567
    %v612 = vmul.f32 %v467, %v567
    %v613 = vmul.f32 %v472, %v567
    %v614 = vmul.f32 %v477, %v567
    %v615 = vmul.f32 %v482, %v567
    %v616 = vmul.f32 %v487, %v567
    %v617 = vmul.f32 %v492, %v567
    %v618 = vmul.f32 %v497, %v567
    %v619 = vmul.f32 %v502, %v567
    %v620 = vmul.f32 %v507, %v567
    %v621 = vmul.f32 %v512, %v567
    %v622 = vmul.f32 %v517, %v567
    %v623 = vmul.f32 %v522, %v567
    %v624 = vmul.f32 %v527, %v567
    %v625 = vmul.f32 %v532, %v567
    %v626 = vmul.f32 %v537, %v567
    %v627 = vmul.f32 %v542, %v567
    %v628 = vmul.f32 %v547, %v567
    %v629 = vmul.f32 %v552, %v567
    %v630 = vmul.f32 %v557, %v567
    %v631 = vmul.f32 %v562, %v567
    %v632 = vld [vmem:[%s1 + $0x1] sm:$0x1]
    %633 = vset.pattern.permute.xlu0 1
    %634 = vperm.xlu0 %633, %v51
    %v635 = vpop.permute.xlu0 %634
    %637 = vset.pattern.permute.xlu0 1
    %638 = vperm.xlu0 %637, %v52
    %v639 = vpop.permute.xlu0 %638
    %641 = vset.pattern.permute.xlu0 1
    %642 = vperm.xlu0 %641, %v53
    %v643 = vpop.permute.xlu0 %642
    %645 = vset.pattern.permute.xlu0 1
    %646 = vperm.xlu0 %645, %v54
    %v647 = vpop.permute.xlu0 %646
    %649 = vset.pattern.permute.xlu0 1
    %650 = vperm.xlu0 %649, %v55
    %v651 = vpop.permute.xlu0 %650
    %653 = vset.pattern.permute.xlu0 1
    %654 = vperm.xlu0 %653, %v56
    %v655 = vpop.permute.xlu0 %654
    %657 = vset.pattern.permute.xlu0 1
    %658 = vperm.xlu0 %657, %v57
    %v659 = vpop.permute.xlu0 %658
    %661 = vset.pattern.permute.xlu0 1
    %662 = vperm.xlu0 %661, %v58
    %v663 = vpop.permute.xlu0 %662
    %665 = vset.pattern.permute.xlu0 1
    %666 = vperm.xlu0 %665, %v59
    %v667 = vpop.permute.xlu0 %666
    %669 = vset.pattern.permute.xlu0 1
    %670 = vperm.xlu0 %669, %v60
    %v671 = vpop.permute.xlu0 %670
    %673 = vset.pattern.permute.xlu0 1
    %674 = vperm.xlu0 %673, %v61
    %v675 = vpop.permute.xlu0 %674
    %677 = vset.pattern.permute.xlu0 1
    %678 = vperm.xlu0 %677, %v62
    %v679 = vpop.permute.xlu0 %678
    %681 = vset.pattern.permute.xlu0 1
    %682 = vperm.xlu0 %681, %v63
    %v683 = vpop.permute.xlu0 %682
    %685 = vset.pattern.permute.xlu0 1
    %686 = vperm.xlu0 %685, %v64
    %v687 = vpop.permute.xlu0 %686
    %689 = vset.pattern.permute.xlu0 1
    %690 = vperm.xlu0 %689, %v65
    %v691 = vpop.permute.xlu0 %690
    %693 = vset.pattern.permute.xlu0 1
    %694 = vperm.xlu0 %693, %v66
    %v695 = vpop.permute.xlu0 %694
    %697 = vset.pattern.permute.xlu0 1
    %698 = vperm.xlu0 %697, %v67
    %v699 = vpop.permute.xlu0 %698
    %701 = vset.pattern.permute.xlu0 1
    %702 = vperm.xlu0 %701, %v68
    %v703 = vpop.permute.xlu0 %702
    %705 = vset.pattern.permute.xlu0 1
    %706 = vperm.xlu0 %705, %v69
    %v707 = vpop.permute.xlu0 %706
    %709 = vset.pattern.permute.xlu0 1
    %710 = vperm.xlu0 %709, %v70
    %v711 = vpop.permute.xlu0 %710
    %713 = vset.pattern.permute.xlu0 1
    %714 = vperm.xlu0 %713, %v71
    %v715 = vpop.permute.xlu0 %714
    %717 = vset.pattern.permute.xlu0 1
    %718 = vperm.xlu0 %717, %v72
    %v719 = vpop.permute.xlu0 %718
    %721 = vset.pattern.permute.xlu0 1
    %722 = vperm.xlu0 %721, %v73
    %v723 = vpop.permute.xlu0 %722
    %725 = vset.pattern.permute.xlu0 1
    %726 = vperm.xlu0 %725, %v74
    %v727 = vpop.permute.xlu0 %726
    %729 = vset.pattern.permute.xlu0 1
    %730 = vperm.xlu0 %729, %v75
    %v731 = vpop.permute.xlu0 %730
    %733 = vset.pattern.permute.xlu0 1
    %734 = vperm.xlu0 %733, %v76
    %v735 = vpop.permute.xlu0 %734
    %737 = vset.pattern.permute.xlu0 1
    %738 = vperm.xlu0 %737, %v77
    %v739 = vpop.permute.xlu0 %738
    %741 = vset.pattern.permute.xlu0 1
    %742 = vperm.xlu0 %741, %v78
    %v743 = vpop.permute.xlu0 %742
    %745 = vset.pattern.permute.xlu0 1
    %746 = vperm.xlu0 %745, %v79
    %v747 = vpop.permute.xlu0 %746
    %749 = vset.pattern.permute.xlu0 1
    %750 = vperm.xlu0 %749, %v80
    %v751 = vpop.permute.xlu0 %750
    %753 = vset.pattern.permute.xlu0 1
    %754 = vperm.xlu0 %753, %v81
    %v755 = vpop.permute.xlu0 %754
    %757 = vset.pattern.permute.xlu0 1
    %758 = vperm.xlu0 %757, %v82
    %v759 = vpop.permute.xlu0 %758
    %761 = vset.pattern.permute.xlu0 1
    %762 = vperm.xlu0 %761, %v83
    %v763 = vpop.permute.xlu0 %762
    %765 = vset.pattern.permute.xlu0 1
    %766 = vperm.xlu0 %765, %v84
    %v767 = vpop.permute.xlu0 %766
    %769 = vset.pattern.permute.xlu0 1
    %770 = vperm.xlu0 %769, %v85
    %v771 = vpop.permute.xlu0 %770
    %773 = vset.pattern.permute.xlu0 1
    %774 = vperm.xlu0 %773, %v86
    %v775 = vpop.permute.xlu0 %774
    %777 = vset.pattern.permute.xlu0 1
    %778 = vperm.xlu0 %777, %v87
    %v779 = vpop.permute.xlu0 %778
    %781 = vset.pattern.permute.xlu0 1
    %782 = vperm.xlu0 %781, %v88
    %v783 = vpop.permute.xlu0 %782
    %785 = vset.pattern.permute.xlu0 1
    %786 = vperm.xlu0 %785, %v89
    %v787 = vpop.permute.xlu0 %786
    %789 = vset.pattern.permute.xlu0 1
    %790 = vperm.xlu0 %789, %v90
    %v791 = vpop.permute.xlu0 %790
    %793 = vset.pattern.permute.xlu0 1
    %794 = vperm.xlu0 %793, %v91
    %v795 = vpop.permute.xlu0 %794
    %797 = vset.pattern.permute.xlu0 1
    %798 = vperm.xlu0 %797, %v92
    %v799 = vpop.permute.xlu0 %798
    %801 = vset.pattern.permute.xlu0 1
    %802 = vperm.xlu0 %801, %v93
    %v803 = vpop.permute.xlu0 %802
    %805 = vset.pattern.permute.xlu0 1
    %806 = vperm.xlu0 %805, %v94
    %v807 = vpop.permute.xlu0 %806
    %809 = vset.pattern.permute.xlu0 1
    %810 = vperm.xlu0 %809, %v95
    %v811 = vpop.permute.xlu0 %810
    %813 = vset.pattern.permute.xlu0 1
    %814 = vperm.xlu0 %813, %v96
    %v815 = vpop.permute.xlu0 %814
    %817 = vset.pattern.permute.xlu0 1
    %818 = vperm.xlu0 %817, %v97
    %v819 = vpop.permute.xlu0 %818
    %821 = vset.pattern.permute.xlu0 1
    %822 = vperm.xlu0 %821, %v98
    %v823 = vpop.permute.xlu0 %822
    %825 = vset.pattern.permute.xlu0 1
    %826 = vperm.xlu0 %825, %v99
    %v827 = vpop.permute.xlu0 %826
    %829 = vset.pattern.permute.xlu0 1
    %830 = vperm.xlu0 %829, %v100
    %v831 = vpop.permute.xlu0 %830
    %833 = vset.pattern.permute.xlu0 1
    %834 = vperm.xlu0 %833, %v101
    %v835 = vpop.permute.xlu0 %834
    %837 = vset.pattern.permute.xlu0 1
    %838 = vperm.xlu0 %837, %v102
    %v839 = vpop.permute.xlu0 %838
    %841 = vset.pattern.permute.xlu0 1
    %842 = vperm.xlu0 %841, %v103
    %v843 = vpop.permute.xlu0 %842
    %845 = vset.pattern.permute.xlu0 1
    %846 = vperm.xlu0 %845, %v104
    %v847 = vpop.permute.xlu0 %846
    %849 = vset.pattern.permute.xlu0 1
    %850 = vperm.xlu0 %849, %v105
    %v851 = vpop.permute.xlu0 %850
    %853 = vset.pattern.permute.xlu0 1
    %854 = vperm.xlu0 %853, %v106
    %v855 = vpop.permute.xlu0 %854
    %857 = vset.pattern.permute.xlu0 1
    %858 = vperm.xlu0 %857, %v107
    %v859 = vpop.permute.xlu0 %858
    %861 = vset.pattern.permute.xlu0 1
    %862 = vperm.xlu0 %861, %v108
    %v863 = vpop.permute.xlu0 %862
    %865 = vset.pattern.permute.xlu0 1
    %866 = vperm.xlu0 %865, %v109
    %v867 = vpop.permute.xlu0 %866
    %869 = vset.pattern.permute.xlu0 1
    %870 = vperm.xlu0 %869, %v110
    %v871 = vpop.permute.xlu0 %870
    %873 = vset.pattern.permute.xlu0 1
    %874 = vperm.xlu0 %873, %v111
    %v875 = vpop.permute.xlu0 %874
    %877 = vset.pattern.permute.xlu0 1
    %878 = vperm.xlu0 %877, %v112
    %v879 = vpop.permute.xlu0 %878
    %881 = vset.pattern.permute.xlu0 1
    %882 = vperm.xlu0 %881, %v113
    %v883 = vpop.permute.xlu0 %882
    %885 = vset.pattern.permute.xlu0 1
    %886 = vperm.xlu0 %885, %v114
    %v887 = vpop.permute.xlu0 %886
    %v889 = vlaneseq
    %v890 = vshrl.u32 %v889, 7
    %v891 = vsub.s32 0, %v890
    %v892 = vrot.slane %v632, %v891
    %v893 = vmul.f32 %v635, %v892
    %v894 = vmul.f32 %v639, %v892
    %v895 = vmul.f32 %v643, %v892
    %v896 = vmul.f32 %v647, %v892
    %v897 = vmul.f32 %v651, %v892
    %v898 = vmul.f32 %v655, %v892
    %v899 = vmul.f32 %v659, %v892
    %v900 = vmul.f32 %v663, %v892
    %v901 = vmul.f32 %v667, %v892
    %v902 = vmul.f32 %v671, %v892
    %v903 = vmul.f32 %v675, %v892
    %v904 = vmul.f32 %v679, %v892
    %v905 = vmul.f32 %v683, %v892
    %v906 = vmul.f32 %v687, %v892
    %v907 = vmul.f32 %v691, %v892
    %v908 = vmul.f32 %v695, %v892
    %v909 = vmul.f32 %v699, %v892
    %v910 = vmul.f32 %v703, %v892
    %v911 = vmul.f32 %v707, %v892
    %v912 = vmul.f32 %v711, %v892
    %v913 = vmul.f32 %v715, %v892
    %v914 = vmul.f32 %v719, %v892
    %v915 = vmul.f32 %v723, %v892
    %v916 = vmul.f32 %v727, %v892
    %v917 = vmul.f32 %v731, %v892
    %v918 = vmul.f32 %v735, %v892
    %v919 = vmul.f32 %v739, %v892
    %v920 = vmul.f32 %v743, %v892
    %v921 = vmul.f32 %v747, %v892
    %v922 = vmul.f32 %v751, %v892
    %v923 = vmul.f32 %v755, %v892
    %v924 = vmul.f32 %v759, %v892
    %v925 = vmul.f32 %v763, %v892
    %v926 = vmul.f32 %v767, %v892
    %v927 = vmul.f32 %v771, %v892
    %v928 = vmul.f32 %v775, %v892
    %v929 = vmul.f32 %v779, %v892
    %v930 = vmul.f32 %v783, %v892
    %v931 = vmul.f32 %v787, %v892
    %v932 = vmul.f32 %v791, %v892
    %v933 = vmul.f32 %v795, %v892
    %v934 = vmul.f32 %v799, %v892
    %v935 = vmul.f32 %v803, %v892
    %v936 = vmul.f32 %v807, %v892
    %v937 = vmul.f32 %v811, %v892
    %v938 = vmul.f32 %v815, %v892
    %v939 = vmul.f32 %v819, %v892
    %v940 = vmul.f32 %v823, %v892
    %v941 = vmul.f32 %v827, %v892
    %v942 = vmul.f32 %v831, %v892
    %v943 = vmul.f32 %v835, %v892
    %v944 = vmul.f32 %v839, %v892
    %v945 = vmul.f32 %v843, %v892
    %v946 = vmul.f32 %v847, %v892
    %v947 = vmul.f32 %v851, %v892
    %v948 = vmul.f32 %v855, %v892
    %v949 = vmul.f32 %v859, %v892
    %v950 = vmul.f32 %v863, %v892
    %v951 = vmul.f32 %v867, %v892
    %v952 = vmul.f32 %v871, %v892
    %v953 = vmul.f32 %v875, %v892
    %v954 = vmul.f32 %v879, %v892
    %v955 = vmul.f32 %v883, %v892
    %v956 = vmul.f32 %v887, %v892
    %v957 = vadd.f32 %v568, %v893
    %v958 = vadd.f32 %v569, %v894
    %v959 = vadd.f32 %v570, %v895
    %v960 = vadd.f32 %v571, %v896
    %v961 = vadd.f32 %v572, %v897
    %v962 = vadd.f32 %v573, %v898
    %v963 = vadd.f32 %v574, %v899
    %v964 = vadd.f32 %v575, %v900
    %v965 = vadd.f32 %v576, %v901
    %v966 = vadd.f32 %v577, %v902
    %v967 = vadd.f32 %v578, %v903
    %v968 = vadd.f32 %v579, %v904
    %v969 = vadd.f32 %v580, %v905
    %v970 = vadd.f32 %v581, %v906
    %v971 = vadd.f32 %v582, %v907
    %v972 = vadd.f32 %v583, %v908
    %v973 = vadd.f32 %v584, %v909
    %v974 = vadd.f32 %v585, %v910
    %v975 = vadd.f32 %v586, %v911
    %v976 = vadd.f32 %v587, %v912
    %v977 = vadd.f32 %v588, %v913
    %v978 = vadd.f32 %v589, %v914
    %v979 = vadd.f32 %v590, %v915
    %v980 = vadd.f32 %v591, %v916
    %v981 = vadd.f32 %v592, %v917
    %v982 = vadd.f32 %v593, %v918
    %v983 = vadd.f32 %v594, %v919
    %v984 = vadd.f32 %v595, %v920
    %v985 = vadd.f32 %v596, %v921
    %v986 = vadd.f32 %v597, %v922
    %v987 = vadd.f32 %v598, %v923
    %v988 = vadd.f32 %v599, %v924
    %v989 = vadd.f32 %v600, %v925
    %v990 = vadd.f32 %v601, %v926
    %v991 = vadd.f32 %v602, %v927
    %v992 = vadd.f32 %v603, %v928
    %v993 = vadd.f32 %v604, %v929
    %v994 = vadd.f32 %v605, %v930
    %v995 = vadd.f32 %v606, %v931
    %v996 = vadd.f32 %v607, %v932
    %v997 = vadd.f32 %v608, %v933
    %v998 = vadd.f32 %v609, %v934
    %v999 = vadd.f32 %v610, %v935
    %v1000 = vadd.f32 %v611, %v936
    %v1001 = vadd.f32 %v612, %v937
    %v1002 = vadd.f32 %v613, %v938
    %v1003 = vadd.f32 %v614, %v939
    %v1004 = vadd.f32 %v615, %v940
    %v1005 = vadd.f32 %v616, %v941
    %v1006 = vadd.f32 %v617, %v942
    %v1007 = vadd.f32 %v618, %v943
    %v1008 = vadd.f32 %v619, %v944
    %v1009 = vadd.f32 %v620, %v945
    %v1010 = vadd.f32 %v621, %v946
    %v1011 = vadd.f32 %v622, %v947
    %v1012 = vadd.f32 %v623, %v948
    %v1013 = vadd.f32 %v624, %v949
    %v1014 = vadd.f32 %v625, %v950
    %v1015 = vadd.f32 %v626, %v951
    %v1016 = vadd.f32 %v627, %v952
    %v1017 = vadd.f32 %v628, %v953
    %v1018 = vadd.f32 %v629, %v954
    %v1019 = vadd.f32 %v630, %v955
    %v1020 = vadd.f32 %v631, %v956
    %v1021 = vld [vmem:[%s1 + $0x2] sm:$0x1]
    %1023 = vset.pattern.permute.xlu0 0
    %1024 = vperm.xlu0 %1023, %v115
    %v1025 = vpop.permute.xlu0 %1024
    %1028 = vset.pattern.permute.xlu0 0
    %1029 = vperm.xlu0 %1028, %v116
    %v1030 = vpop.permute.xlu0 %1029
    %1033 = vset.pattern.permute.xlu0 0
    %1034 = vperm.xlu0 %1033, %v117
    %v1035 = vpop.permute.xlu0 %1034
    %1038 = vset.pattern.permute.xlu0 0
    %1039 = vperm.xlu0 %1038, %v118
    %v1040 = vpop.permute.xlu0 %1039
    %1043 = vset.pattern.permute.xlu0 0
    %1044 = vperm.xlu0 %1043, %v119
    %v1045 = vpop.permute.xlu0 %1044
    %1048 = vset.pattern.permute.xlu0 0
    %1049 = vperm.xlu0 %1048, %v120
    %v1050 = vpop.permute.xlu0 %1049
    %1053 = vset.pattern.permute.xlu0 0
    %1054 = vperm.xlu0 %1053, %v121
    %v1055 = vpop.permute.xlu0 %1054
    %1058 = vset.pattern.permute.xlu0 0
    %1059 = vperm.xlu0 %1058, %v122
    %v1060 = vpop.permute.xlu0 %1059
    %1063 = vset.pattern.permute.xlu0 0
    %1064 = vperm.xlu0 %1063, %v123
    %v1065 = vpop.permute.xlu0 %1064
    %1068 = vset.pattern.permute.xlu0 0
    %1069 = vperm.xlu0 %1068, %v124
    %v1070 = vpop.permute.xlu0 %1069
    %1073 = vset.pattern.permute.xlu0 0
    %1074 = vperm.xlu0 %1073, %v125
    %v1075 = vpop.permute.xlu0 %1074
    %1078 = vset.pattern.permute.xlu0 0
    %1079 = vperm.xlu0 %1078, %v126
    %v1080 = vpop.permute.xlu0 %1079
    %1083 = vset.pattern.permute.xlu0 0
    %1084 = vperm.xlu0 %1083, %v127
    %v1085 = vpop.permute.xlu0 %1084
    %1088 = vset.pattern.permute.xlu0 0
    %1089 = vperm.xlu0 %1088, %v128
    %v1090 = vpop.permute.xlu0 %1089
    %1093 = vset.pattern.permute.xlu0 0
    %1094 = vperm.xlu0 %1093, %v129
    %v1095 = vpop.permute.xlu0 %1094
    %1098 = vset.pattern.permute.xlu0 0
    %1099 = vperm.xlu0 %1098, %v130
    %v1100 = vpop.permute.xlu0 %1099
    %1103 = vset.pattern.permute.xlu0 0
    %1104 = vperm.xlu0 %1103, %v131
    %v1105 = vpop.permute.xlu0 %1104
    %1108 = vset.pattern.permute.xlu0 0
    %1109 = vperm.xlu0 %1108, %v132
    %v1110 = vpop.permute.xlu0 %1109
    %1113 = vset.pattern.permute.xlu0 0
    %1114 = vperm.xlu0 %1113, %v133
    %v1115 = vpop.permute.xlu0 %1114
    %1118 = vset.pattern.permute.xlu0 0
    %1119 = vperm.xlu0 %1118, %v134
    %v1120 = vpop.permute.xlu0 %1119
    %1123 = vset.pattern.permute.xlu0 0
    %1124 = vperm.xlu0 %1123, %v135
    %v1125 = vpop.permute.xlu0 %1124
    %1128 = vset.pattern.permute.xlu0 0
    %1129 = vperm.xlu0 %1128, %v136
    %v1130 = vpop.permute.xlu0 %1129
    %1133 = vset.pattern.permute.xlu0 0
    %1134 = vperm.xlu0 %1133, %v137
    %v1135 = vpop.permute.xlu0 %1134
    %1138 = vset.pattern.permute.xlu0 0
    %1139 = vperm.xlu0 %1138, %v138
    %v1140 = vpop.permute.xlu0 %1139
    %1143 = vset.pattern.permute.xlu0 0
    %1144 = vperm.xlu0 %1143, %v139
    %v1145 = vpop.permute.xlu0 %1144
    %1148 = vset.pattern.permute.xlu0 0
    %1149 = vperm.xlu0 %1148, %v140
    %v1150 = vpop.permute.xlu0 %1149
    %1153 = vset.pattern.permute.xlu0 0
    %1154 = vperm.xlu0 %1153, %v141
    %v1155 = vpop.permute.xlu0 %1154
    %1158 = vset.pattern.permute.xlu0 0
    %1159 = vperm.xlu0 %1158, %v142
    %v1160 = vpop.permute.xlu0 %1159
    %1163 = vset.pattern.permute.xlu0 0
    %1164 = vperm.xlu0 %1163, %v143
    %v1165 = vpop.permute.xlu0 %1164
    %1168 = vset.pattern.permute.xlu0 0
    %1169 = vperm.xlu0 %1168, %v144
    %v1170 = vpop.permute.xlu0 %1169
    %1173 = vset.pattern.permute.xlu0 0
    %1174 = vperm.xlu0 %1173, %v145
    %v1175 = vpop.permute.xlu0 %1174
    %1178 = vset.pattern.permute.xlu0 0
    %1179 = vperm.xlu0 %1178, %v146
    %v1180 = vpop.permute.xlu0 %1179
    %1183 = vset.pattern.permute.xlu0 0
    %1184 = vperm.xlu0 %1183, %v147
    %v1185 = vpop.permute.xlu0 %1184
    %1188 = vset.pattern.permute.xlu0 0
    %1189 = vperm.xlu0 %1188, %v148
    %v1190 = vpop.permute.xlu0 %1189
    %1193 = vset.pattern.permute.xlu0 0
    %1194 = vperm.xlu0 %1193, %v149
    %v1195 = vpop.permute.xlu0 %1194
    %1198 = vset.pattern.permute.xlu0 0
    %1199 = vperm.xlu0 %1198, %v150
    %v1200 = vpop.permute.xlu0 %1199
    %1203 = vset.pattern.permute.xlu0 0
    %1204 = vperm.xlu0 %1203, %v151
    %v1205 = vpop.permute.xlu0 %1204
    %1208 = vset.pattern.permute.xlu0 0
    %1209 = vperm.xlu0 %1208, %v152
    %v1210 = vpop.permute.xlu0 %1209
    %1213 = vset.pattern.permute.xlu0 0
    %1214 = vperm.xlu0 %1213, %v153
    %v1215 = vpop.permute.xlu0 %1214
    %1218 = vset.pattern.permute.xlu0 0
    %1219 = vperm.xlu0 %1218, %v154
    %v1220 = vpop.permute.xlu0 %1219
    %1223 = vset.pattern.permute.xlu0 0
    %1224 = vperm.xlu0 %1223, %v155
    %v1225 = vpop.permute.xlu0 %1224
    %1228 = vset.pattern.permute.xlu0 0
    %1229 = vperm.xlu0 %1228, %v156
    %v1230 = vpop.permute.xlu0 %1229
    %1233 = vset.pattern.permute.xlu0 0
    %1234 = vperm.xlu0 %1233, %v157
    %v1235 = vpop.permute.xlu0 %1234
    %1238 = vset.pattern.permute.xlu0 0
    %1239 = vperm.xlu0 %1238, %v158
    %v1240 = vpop.permute.xlu0 %1239
    %1243 = vset.pattern.permute.xlu0 0
    %1244 = vperm.xlu0 %1243, %v159
    %v1245 = vpop.permute.xlu0 %1244
    %1248 = vset.pattern.permute.xlu0 0
    %1249 = vperm.xlu0 %1248, %v160
    %v1250 = vpop.permute.xlu0 %1249
    %1253 = vset.pattern.permute.xlu0 0
    %1254 = vperm.xlu0 %1253, %v161
    %v1255 = vpop.permute.xlu0 %1254
    %1258 = vset.pattern.permute.xlu0 0
    %1259 = vperm.xlu0 %1258, %v162
    %v1260 = vpop.permute.xlu0 %1259
    %1263 = vset.pattern.permute.xlu0 0
    %1264 = vperm.xlu0 %1263, %v163
    %v1265 = vpop.permute.xlu0 %1264
    %1268 = vset.pattern.permute.xlu0 0
    %1269 = vperm.xlu0 %1268, %v164
    %v1270 = vpop.permute.xlu0 %1269
    %1273 = vset.pattern.permute.xlu0 0
    %1274 = vperm.xlu0 %1273, %v165
    %v1275 = vpop.permute.xlu0 %1274
    %1278 = vset.pattern.permute.xlu0 0
    %1279 = vperm.xlu0 %1278, %v166
    %v1280 = vpop.permute.xlu0 %1279
    %1283 = vset.pattern.permute.xlu0 0
    %1284 = vperm.xlu0 %1283, %v167
    %v1285 = vpop.permute.xlu0 %1284
    %1288 = vset.pattern.permute.xlu0 0
    %1289 = vperm.xlu0 %1288, %v168
    %v1290 = vpop.permute.xlu0 %1289
    %1293 = vset.pattern.permute.xlu0 0
    %1294 = vperm.xlu0 %1293, %v169
    %v1295 = vpop.permute.xlu0 %1294
    %1298 = vset.pattern.permute.xlu0 0
    %1299 = vperm.xlu0 %1298, %v170
    %v1300 = vpop.permute.xlu0 %1299
    %1303 = vset.pattern.permute.xlu0 0
    %1304 = vperm.xlu0 %1303, %v171
    %v1305 = vpop.permute.xlu0 %1304
    %1308 = vset.pattern.permute.xlu0 0
    %1309 = vperm.xlu0 %1308, %v172
    %v1310 = vpop.permute.xlu0 %1309
    %1313 = vset.pattern.permute.xlu0 0
    %1314 = vperm.xlu0 %1313, %v173
    %v1315 = vpop.permute.xlu0 %1314
    %1318 = vset.pattern.permute.xlu0 0
    %1319 = vperm.xlu0 %1318, %v174
    %v1320 = vpop.permute.xlu0 %1319
    %1323 = vset.pattern.permute.xlu0 0
    %1324 = vperm.xlu0 %1323, %v175
    %v1325 = vpop.permute.xlu0 %1324
    %1328 = vset.pattern.permute.xlu0 0
    %1329 = vperm.xlu0 %1328, %v176
    %v1330 = vpop.permute.xlu0 %1329
    %1333 = vset.pattern.permute.xlu0 0
    %1334 = vperm.xlu0 %1333, %v177
    %v1335 = vpop.permute.xlu0 %1334
    %1338 = vset.pattern.permute.xlu0 0
    %1339 = vperm.xlu0 %1338, %v178
    %v1340 = vpop.permute.xlu0 %1339
    %v1342 = vlaneseq
    %v1343 = vshrl.u32 %v1342, 7
    %v1344 = vsub.s32 0, %v1343
    %v1345 = vrot.slane %v1021, %v1344
    %v1346 = vmul.f32 %v1025, %v1345
    %v1347 = vmul.f32 %v1030, %v1345
    %v1348 = vmul.f32 %v1035, %v1345
    %v1349 = vmul.f32 %v1040, %v1345
    %v1350 = vmul.f32 %v1045, %v1345
    %v1351 = vmul.f32 %v1050, %v1345
    %v1352 = vmul.f32 %v1055, %v1345
    %v1353 = vmul.f32 %v1060, %v1345
    %v1354 = vmul.f32 %v1065, %v1345
    %v1355 = vmul.f32 %v1070, %v1345
    %v1356 = vmul.f32 %v1075, %v1345
    %v1357 = vmul.f32 %v1080, %v1345
    %v1358 = vmul.f32 %v1085, %v1345
    %v1359 = vmul.f32 %v1090, %v1345
    %v1360 = vmul.f32 %v1095, %v1345
    %v1361 = vmul.f32 %v1100, %v1345
    %v1362 = vmul.f32 %v1105, %v1345
    %v1363 = vmul.f32 %v1110, %v1345
    %v1364 = vmul.f32 %v1115, %v1345
    %v1365 = vmul.f32 %v1120, %v1345
    %v1366 = vmul.f32 %v1125, %v1345
    %v1367 = vmul.f32 %v1130, %v1345
    %v1368 = vmul.f32 %v1135, %v1345
    %v1369 = vmul.f32 %v1140, %v1345
    %v1370 = vmul.f32 %v1145, %v1345
    %v1371 = vmul.f32 %v1150, %v1345
    %v1372 = vmul.f32 %v1155, %v1345
    %v1373 = vmul.f32 %v1160, %v1345
    %v1374 = vmul.f32 %v1165, %v1345
    %v1375 = vmul.f32 %v1170, %v1345
    %v1376 = vmul.f32 %v1175, %v1345
    %v1377 = vmul.f32 %v1180, %v1345
    %v1378 = vmul.f32 %v1185, %v1345
    %v1379 = vmul.f32 %v1190, %v1345
    %v1380 = vmul.f32 %v1195, %v1345
    %v1381 = vmul.f32 %v1200, %v1345
    %v1382 = vmul.f32 %v1205, %v1345
    %v1383 = vmul.f32 %v1210, %v1345
    %v1384 = vmul.f32 %v1215, %v1345
    %v1385 = vmul.f32 %v1220, %v1345
    %v1386 = vmul.f32 %v1225, %v1345
    %v1387 = vmul.f32 %v1230, %v1345
    %v1388 = vmul.f32 %v1235, %v1345
    %v1389 = vmul.f32 %v1240, %v1345
    %v1390 = vmul.f32 %v1245, %v1345
    %v1391 = vmul.f32 %v1250, %v1345
    %v1392 = vmul.f32 %v1255, %v1345
    %v1393 = vmul.f32 %v1260, %v1345
    %v1394 = vmul.f32 %v1265, %v1345
    %v1395 = vmul.f32 %v1270, %v1345
    %v1396 = vmul.f32 %v1275, %v1345
    %v1397 = vmul.f32 %v1280, %v1345
    %v1398 = vmul.f32 %v1285, %v1345
    %v1399 = vmul.f32 %v1290, %v1345
    %v1400 = vmul.f32 %v1295, %v1345
    %v1401 = vmul.f32 %v1300, %v1345
    %v1402 = vmul.f32 %v1305, %v1345
    %v1403 = vmul.f32 %v1310, %v1345
    %v1404 = vmul.f32 %v1315, %v1345
    %v1405 = vmul.f32 %v1320, %v1345
    %v1406 = vmul.f32 %v1325, %v1345
    %v1407 = vmul.f32 %v1330, %v1345
    %v1408 = vmul.f32 %v1335, %v1345
    %v1409 = vmul.f32 %v1340, %v1345
    %v1410 = vadd.f32 %v957, %v1346
    %v1411 = vadd.f32 %v958, %v1347
    %v1412 = vadd.f32 %v959, %v1348
    %v1413 = vadd.f32 %v960, %v1349
    %v1414 = vadd.f32 %v961, %v1350
    %v1415 = vadd.f32 %v962, %v1351
    %v1416 = vadd.f32 %v963, %v1352
    %v1417 = vadd.f32 %v964, %v1353
    %v1418 = vadd.f32 %v965, %v1354
    %v1419 = vadd.f32 %v966, %v1355
    %v1420 = vadd.f32 %v967, %v1356
    %v1421 = vadd.f32 %v968, %v1357
    %v1422 = vadd.f32 %v969, %v1358
    %v1423 = vadd.f32 %v970, %v1359
    %v1424 = vadd.f32 %v971, %v1360
    %v1425 = vadd.f32 %v972, %v1361
    %v1426 = vadd.f32 %v973, %v1362
    %v1427 = vadd.f32 %v974, %v1363
    %v1428 = vadd.f32 %v975, %v1364
    %v1429 = vadd.f32 %v976, %v1365
    %v1430 = vadd.f32 %v977, %v1366
    %v1431 = vadd.f32 %v978, %v1367
    %v1432 = vadd.f32 %v979, %v1368
    %v1433 = vadd.f32 %v980, %v1369
    %v1434 = vadd.f32 %v981, %v1370
    %v1435 = vadd.f32 %v982, %v1371
    %v1436 = vadd.f32 %v983, %v1372
    %v1437 = vadd.f32 %v984, %v1373
    %v1438 = vadd.f32 %v985, %v1374
    %v1439 = vadd.f32 %v986, %v1375
    %v1440 = vadd.f32 %v987, %v1376
    %v1441 = vadd.f32 %v988, %v1377
    %v1442 = vadd.f32 %v989, %v1378
    %v1443 = vadd.f32 %v990, %v1379
    %v1444 = vadd.f32 %v991, %v1380
    %v1445 = vadd.f32 %v992, %v1381
    %v1446 = vadd.f32 %v993, %v1382
    %v1447 = vadd.f32 %v994, %v1383
    %v1448 = vadd.f32 %v995, %v1384
    %v1449 = vadd.f32 %v996, %v1385
    %v1450 = vadd.f32 %v997, %v1386
    %v1451 = vadd.f32 %v998, %v1387
    %v1452 = vadd.f32 %v999, %v1388
    %v1453 = vadd.f32 %v1000, %v1389
    %v1454 = vadd.f32 %v1001, %v1390
    %v1455 = vadd.f32 %v1002, %v1391
    %v1456 = vadd.f32 %v1003, %v1392
    %v1457 = vadd.f32 %v1004, %v1393
    %v1458 = vadd.f32 %v1005, %v1394
    %v1459 = vadd.f32 %v1006, %v1395
    %v1460 = vadd.f32 %v1007, %v1396
    %v1461 = vadd.f32 %v1008, %v1397
    %v1462 = vadd.f32 %v1009, %v1398
    %v1463 = vadd.f32 %v1010, %v1399
    %v1464 = vadd.f32 %v1011, %v1400
    %v1465 = vadd.f32 %v1012, %v1401
    %v1466 = vadd.f32 %v1013, %v1402
    %v1467 = vadd.f32 %v1014, %v1403
    %v1468 = vadd.f32 %v1015, %v1404
    %v1469 = vadd.f32 %v1016, %v1405
    %v1470 = vadd.f32 %v1017, %v1406
    %v1471 = vadd.f32 %v1018, %v1407
    %v1472 = vadd.f32 %v1019, %v1408
    %v1473 = vadd.f32 %v1020, %v1409
    %v1474 = vld [vmem:[%s1 + $0x3] sm:$0x1]
    %1475 = vset.pattern.permute.xlu0 1
    %1476 = vperm.xlu0 %1475, %v115
    %v1477 = vpop.permute.xlu0 %1476
    %1479 = vset.pattern.permute.xlu0 1
    %1480 = vperm.xlu0 %1479, %v116
    %v1481 = vpop.permute.xlu0 %1480
    %1483 = vset.pattern.permute.xlu0 1
    %1484 = vperm.xlu0 %1483, %v117
    %v1485 = vpop.permute.xlu0 %1484
    %1487 = vset.pattern.permute.xlu0 1
    %1488 = vperm.xlu0 %1487, %v118
    %v1489 = vpop.permute.xlu0 %1488
    %1491 = vset.pattern.permute.xlu0 1
    %1492 = vperm.xlu0 %1491, %v119
    %v1493 = vpop.permute.xlu0 %1492
    %1495 = vset.pattern.permute.xlu0 1
    %1496 = vperm.xlu0 %1495, %v120
    %v1497 = vpop.permute.xlu0 %1496
    %1499 = vset.pattern.permute.xlu0 1
    %1500 = vperm.xlu0 %1499, %v121
    %v1501 = vpop.permute.xlu0 %1500
    %1503 = vset.pattern.permute.xlu0 1
    %1504 = vperm.xlu0 %1503, %v122
    %v1505 = vpop.permute.xlu0 %1504
    %1507 = vset.pattern.permute.xlu0 1
    %1508 = vperm.xlu0 %1507, %v123
    %v1509 = vpop.permute.xlu0 %1508
    %1511 = vset.pattern.permute.xlu0 1
    %1512 = vperm.xlu0 %1511, %v124
    %v1513 = vpop.permute.xlu0 %1512
    %1515 = vset.pattern.permute.xlu0 1
    %1516 = vperm.xlu0 %1515, %v125
    %v1517 = vpop.permute.xlu0 %1516
    %1519 = vset.pattern.permute.xlu0 1
    %1520 = vperm.xlu0 %1519, %v126
    %v1521 = vpop.permute.xlu0 %1520
    %1523 = vset.pattern.permute.xlu0 1
    %1524 = vperm.xlu0 %1523, %v127
    %v1525 = vpop.permute.xlu0 %1524
    %1527 = vset.pattern.permute.xlu0 1
    %1528 = vperm.xlu0 %1527, %v128
    %v1529 = vpop.permute.xlu0 %1528
    %1531 = vset.pattern.permute.xlu0 1
    %1532 = vperm.xlu0 %1531, %v129
    %v1533 = vpop.permute.xlu0 %1532
    %1535 = vset.pattern.permute.xlu0 1
    %1536 = vperm.xlu0 %1535, %v130
    %v1537 = vpop.permute.xlu0 %1536
    %1539 = vset.pattern.permute.xlu0 1
    %1540 = vperm.xlu0 %1539, %v131
    %v1541 = vpop.permute.xlu0 %1540
    %1543 = vset.pattern.permute.xlu0 1
    %1544 = vperm.xlu0 %1543, %v132
    %v1545 = vpop.permute.xlu0 %1544
    %1547 = vset.pattern.permute.xlu0 1
    %1548 = vperm.xlu0 %1547, %v133
    %v1549 = vpop.permute.xlu0 %1548
    %1551 = vset.pattern.permute.xlu0 1
    %1552 = vperm.xlu0 %1551, %v134
    %v1553 = vpop.permute.xlu0 %1552
    %1555 = vset.pattern.permute.xlu0 1
    %1556 = vperm.xlu0 %1555, %v135
    %v1557 = vpop.permute.xlu0 %1556
    %1559 = vset.pattern.permute.xlu0 1
    %1560 = vperm.xlu0 %1559, %v136
    %v1561 = vpop.permute.xlu0 %1560
    %1563 = vset.pattern.permute.xlu0 1
    %1564 = vperm.xlu0 %1563, %v137
    %v1565 = vpop.permute.xlu0 %1564
    %1567 = vset.pattern.permute.xlu0 1
    %1568 = vperm.xlu0 %1567, %v138
    %v1569 = vpop.permute.xlu0 %1568
    %1571 = vset.pattern.permute.xlu0 1
    %1572 = vperm.xlu0 %1571, %v139
    %v1573 = vpop.permute.xlu0 %1572
    %1575 = vset.pattern.permute.xlu0 1
    %1576 = vperm.xlu0 %1575, %v140
    %v1577 = vpop.permute.xlu0 %1576
    %1579 = vset.pattern.permute.xlu0 1
    %1580 = vperm.xlu0 %1579, %v141
    %v1581 = vpop.permute.xlu0 %1580
    %1583 = vset.pattern.permute.xlu0 1
    %1584 = vperm.xlu0 %1583, %v142
    %v1585 = vpop.permute.xlu0 %1584
    %1587 = vset.pattern.permute.xlu0 1
    %1588 = vperm.xlu0 %1587, %v143
    %v1589 = vpop.permute.xlu0 %1588
    %1591 = vset.pattern.permute.xlu0 1
    %1592 = vperm.xlu0 %1591, %v144
    %v1593 = vpop.permute.xlu0 %1592
    %1595 = vset.pattern.permute.xlu0 1
    %1596 = vperm.xlu0 %1595, %v145
    %v1597 = vpop.permute.xlu0 %1596
    %1599 = vset.pattern.permute.xlu0 1
    %1600 = vperm.xlu0 %1599, %v146
    %v1601 = vpop.permute.xlu0 %1600
    %1603 = vset.pattern.permute.xlu0 1
    %1604 = vperm.xlu0 %1603, %v147
    %v1605 = vpop.permute.xlu0 %1604
    %1607 = vset.pattern.permute.xlu0 1
    %1608 = vperm.xlu0 %1607, %v148
    %v1609 = vpop.permute.xlu0 %1608
    %1611 = vset.pattern.permute.xlu0 1
    %1612 = vperm.xlu0 %1611, %v149
    %v1613 = vpop.permute.xlu0 %1612
    %1615 = vset.pattern.permute.xlu0 1
    %1616 = vperm.xlu0 %1615, %v150
    %v1617 = vpop.permute.xlu0 %1616
    %1619 = vset.pattern.permute.xlu0 1
    %1620 = vperm.xlu0 %1619, %v151
    %v1621 = vpop.permute.xlu0 %1620
    %1623 = vset.pattern.permute.xlu0 1
    %1624 = vperm.xlu0 %1623, %v152
    %v1625 = vpop.permute.xlu0 %1624
    %1627 = vset.pattern.permute.xlu0 1
    %1628 = vperm.xlu0 %1627, %v153
    %v1629 = vpop.permute.xlu0 %1628
    %1631 = vset.pattern.permute.xlu0 1
    %1632 = vperm.xlu0 %1631, %v154
    %v1633 = vpop.permute.xlu0 %1632
    %1635 = vset.pattern.permute.xlu0 1
    %1636 = vperm.xlu0 %1635, %v155
    %v1637 = vpop.permute.xlu0 %1636
    %1639 = vset.pattern.permute.xlu0 1
    %1640 = vperm.xlu0 %1639, %v156
    %v1641 = vpop.permute.xlu0 %1640
    %1643 = vset.pattern.permute.xlu0 1
    %1644 = vperm.xlu0 %1643, %v157
    %v1645 = vpop.permute.xlu0 %1644
    %1647 = vset.pattern.permute.xlu0 1
    %1648 = vperm.xlu0 %1647, %v158
    %v1649 = vpop.permute.xlu0 %1648
    %1651 = vset.pattern.permute.xlu0 1
    %1652 = vperm.xlu0 %1651, %v159
    %v1653 = vpop.permute.xlu0 %1652
    %1655 = vset.pattern.permute.xlu0 1
    %1656 = vperm.xlu0 %1655, %v160
    %v1657 = vpop.permute.xlu0 %1656
    %1659 = vset.pattern.permute.xlu0 1
    %1660 = vperm.xlu0 %1659, %v161
    %v1661 = vpop.permute.xlu0 %1660
    %1663 = vset.pattern.permute.xlu0 1
    %1664 = vperm.xlu0 %1663, %v162
    %v1665 = vpop.permute.xlu0 %1664
    %1667 = vset.pattern.permute.xlu0 1
    %1668 = vperm.xlu0 %1667, %v163
    %v1669 = vpop.permute.xlu0 %1668
    %1671 = vset.pattern.permute.xlu0 1
    %1672 = vperm.xlu0 %1671, %v164
    %v1673 = vpop.permute.xlu0 %1672
    %1675 = vset.pattern.permute.xlu0 1
    %1676 = vperm.xlu0 %1675, %v165
    %v1677 = vpop.permute.xlu0 %1676
    %1679 = vset.pattern.permute.xlu0 1
    %1680 = vperm.xlu0 %1679, %v166
    %v1681 = vpop.permute.xlu0 %1680
    %1683 = vset.pattern.permute.xlu0 1
    %1684 = vperm.xlu0 %1683, %v167
    %v1685 = vpop.permute.xlu0 %1684
    %1687 = vset.pattern.permute.xlu0 1
    %1688 = vperm.xlu0 %1687, %v168
    %v1689 = vpop.permute.xlu0 %1688
    %1691 = vset.pattern.permute.xlu0 1
    %1692 = vperm.xlu0 %1691, %v169
    %v1693 = vpop.permute.xlu0 %1692
    %1695 = vset.pattern.permute.xlu0 1
    %1696 = vperm.xlu0 %1695, %v170
    %v1697 = vpop.permute.xlu0 %1696
    %1699 = vset.pattern.permute.xlu0 1
    %1700 = vperm.xlu0 %1699, %v171
    %v1701 = vpop.permute.xlu0 %1700
    %1703 = vset.pattern.permute.xlu0 1
    %1704 = vperm.xlu0 %1703, %v172
    %v1705 = vpop.permute.xlu0 %1704
    %1707 = vset.pattern.permute.xlu0 1
    %1708 = vperm.xlu0 %1707, %v173
    %v1709 = vpop.permute.xlu0 %1708
    %1711 = vset.pattern.permute.xlu0 1
    %1712 = vperm.xlu0 %1711, %v174
    %v1713 = vpop.permute.xlu0 %1712
    %1715 = vset.pattern.permute.xlu0 1
    %1716 = vperm.xlu0 %1715, %v175
    %v1717 = vpop.permute.xlu0 %1716
    %1719 = vset.pattern.permute.xlu0 1
    %1720 = vperm.xlu0 %1719, %v176
    %v1721 = vpop.permute.xlu0 %1720
    %1723 = vset.pattern.permute.xlu0 1
    %1724 = vperm.xlu0 %1723, %v177
    %v1725 = vpop.permute.xlu0 %1724
    %1727 = vset.pattern.permute.xlu0 1
    %1728 = vperm.xlu0 %1727, %v178
    %v1729 = vpop.permute.xlu0 %1728
    %v1731 = vlaneseq
    %v1732 = vshrl.u32 %v1731, 7
    %v1733 = vsub.s32 0, %v1732
    %v1734 = vrot.slane %v1474, %v1733
    %v1735 = vmul.f32 %v1477, %v1734
    %v1736 = vmul.f32 %v1481, %v1734
    %v1737 = vmul.f32 %v1485, %v1734
    %v1738 = vmul.f32 %v1489, %v1734
    %v1739 = vmul.f32 %v1493, %v1734
    %v1740 = vmul.f32 %v1497, %v1734
    %v1741 = vmul.f32 %v1501, %v1734
    %v1742 = vmul.f32 %v1505, %v1734
    %v1743 = vmul.f32 %v1509, %v1734
    %v1744 = vmul.f32 %v1513, %v1734
    %v1745 = vmul.f32 %v1517, %v1734
    %v1746 = vmul.f32 %v1521, %v1734
    %v1747 = vmul.f32 %v1525, %v1734
    %v1748 = vmul.f32 %v1529, %v1734
    %v1749 = vmul.f32 %v1533, %v1734
    %v1750 = vmul.f32 %v1537, %v1734
    %v1751 = vmul.f32 %v1541, %v1734
    %v1752 = vmul.f32 %v1545, %v1734
    %v1753 = vmul.f32 %v1549, %v1734
    %v1754 = vmul.f32 %v1553, %v1734
    %v1755 = vmul.f32 %v1557, %v1734
    %v1756 = vmul.f32 %v1561, %v1734
    %v1757 = vmul.f32 %v1565, %v1734
    %v1758 = vmul.f32 %v1569, %v1734
    %v1759 = vmul.f32 %v1573, %v1734
    %v1760 = vmul.f32 %v1577, %v1734
    %v1761 = vmul.f32 %v1581, %v1734
    %v1762 = vmul.f32 %v1585, %v1734
    %v1763 = vmul.f32 %v1589, %v1734
    %v1764 = vmul.f32 %v1593, %v1734
    %v1765 = vmul.f32 %v1597, %v1734
    %v1766 = vmul.f32 %v1601, %v1734
    %v1767 = vmul.f32 %v1605, %v1734
    %v1768 = vmul.f32 %v1609, %v1734
    %v1769 = vmul.f32 %v1613, %v1734
    %v1770 = vmul.f32 %v1617, %v1734
    %v1771 = vmul.f32 %v1621, %v1734
    %v1772 = vmul.f32 %v1625, %v1734
    %v1773 = vmul.f32 %v1629, %v1734
    %v1774 = vmul.f32 %v1633, %v1734
    %v1775 = vmul.f32 %v1637, %v1734
    %v1776 = vmul.f32 %v1641, %v1734
    %v1777 = vmul.f32 %v1645, %v1734
    %v1778 = vmul.f32 %v1649, %v1734
    %v1779 = vmul.f32 %v1653, %v1734
    %v1780 = vmul.f32 %v1657, %v1734
    %v1781 = vmul.f32 %v1661, %v1734
    %v1782 = vmul.f32 %v1665, %v1734
    %v1783 = vmul.f32 %v1669, %v1734
    %v1784 = vmul.f32 %v1673, %v1734
    %v1785 = vmul.f32 %v1677, %v1734
    %v1786 = vmul.f32 %v1681, %v1734
    %v1787 = vmul.f32 %v1685, %v1734
    %v1788 = vmul.f32 %v1689, %v1734
    %v1789 = vmul.f32 %v1693, %v1734
    %v1790 = vmul.f32 %v1697, %v1734
    %v1791 = vmul.f32 %v1701, %v1734
    %v1792 = vmul.f32 %v1705, %v1734
    %v1793 = vmul.f32 %v1709, %v1734
    %v1794 = vmul.f32 %v1713, %v1734
    %v1795 = vmul.f32 %v1717, %v1734
    %v1796 = vmul.f32 %v1721, %v1734
    %v1797 = vmul.f32 %v1725, %v1734
    %v1798 = vmul.f32 %v1729, %v1734
    %v1799 = vadd.f32 %v1410, %v1735
    %v1800 = vadd.f32 %v1411, %v1736
    %v1801 = vadd.f32 %v1412, %v1737
    %v1802 = vadd.f32 %v1413, %v1738
    %v1803 = vadd.f32 %v1414, %v1739
    %v1804 = vadd.f32 %v1415, %v1740
    %v1805 = vadd.f32 %v1416, %v1741
    %v1806 = vadd.f32 %v1417, %v1742
    %v1807 = vadd.f32 %v1418, %v1743
    %v1808 = vadd.f32 %v1419, %v1744
    %v1809 = vadd.f32 %v1420, %v1745
    %v1810 = vadd.f32 %v1421, %v1746
    %v1811 = vadd.f32 %v1422, %v1747
    %v1812 = vadd.f32 %v1423, %v1748
    %v1813 = vadd.f32 %v1424, %v1749
    %v1814 = vadd.f32 %v1425, %v1750
    %v1815 = vadd.f32 %v1426, %v1751
    %v1816 = vadd.f32 %v1427, %v1752
    %v1817 = vadd.f32 %v1428, %v1753
    %v1818 = vadd.f32 %v1429, %v1754
    %v1819 = vadd.f32 %v1430, %v1755
    %v1820 = vadd.f32 %v1431, %v1756
    %v1821 = vadd.f32 %v1432, %v1757
    %v1822 = vadd.f32 %v1433, %v1758
    %v1823 = vadd.f32 %v1434, %v1759
    %v1824 = vadd.f32 %v1435, %v1760
    %v1825 = vadd.f32 %v1436, %v1761
    %v1826 = vadd.f32 %v1437, %v1762
    %v1827 = vadd.f32 %v1438, %v1763
    %v1828 = vadd.f32 %v1439, %v1764
    %v1829 = vadd.f32 %v1440, %v1765
    %v1830 = vadd.f32 %v1441, %v1766
    %v1831 = vadd.f32 %v1442, %v1767
    %v1832 = vadd.f32 %v1443, %v1768
    %v1833 = vadd.f32 %v1444, %v1769
    %v1834 = vadd.f32 %v1445, %v1770
    %v1835 = vadd.f32 %v1446, %v1771
    %v1836 = vadd.f32 %v1447, %v1772
    %v1837 = vadd.f32 %v1448, %v1773
    %v1838 = vadd.f32 %v1449, %v1774
    %v1839 = vadd.f32 %v1450, %v1775
    %v1840 = vadd.f32 %v1451, %v1776
    %v1841 = vadd.f32 %v1452, %v1777
    %v1842 = vadd.f32 %v1453, %v1778
    %v1843 = vadd.f32 %v1454, %v1779
    %v1844 = vadd.f32 %v1455, %v1780
    %v1845 = vadd.f32 %v1456, %v1781
    %v1846 = vadd.f32 %v1457, %v1782
    %v1847 = vadd.f32 %v1458, %v1783
    %v1848 = vadd.f32 %v1459, %v1784
    %v1849 = vadd.f32 %v1460, %v1785
    %v1850 = vadd.f32 %v1461, %v1786
    %v1851 = vadd.f32 %v1462, %v1787
    %v1852 = vadd.f32 %v1463, %v1788
    %v1853 = vadd.f32 %v1464, %v1789
    %v1854 = vadd.f32 %v1465, %v1790
    %v1855 = vadd.f32 %v1466, %v1791
    %v1856 = vadd.f32 %v1467, %v1792
    %v1857 = vadd.f32 %v1468, %v1793
    %v1858 = vadd.f32 %v1469, %v1794
    %v1859 = vadd.f32 %v1470, %v1795
    %v1860 = vadd.f32 %v1471, %v1796
    %v1861 = vadd.f32 %v1472, %v1797
    %v1862 = vadd.f32 %v1473, %v1798
    %v1863 = vld [vmem:[%s1 + $0x4] sm:$0x1]
    %1865 = vset.pattern.permute.xlu0 0
    %1866 = vperm.xlu0 %1865, %v179
    %v1867 = vpop.permute.xlu0 %1866
    %1870 = vset.pattern.permute.xlu0 0
    %1871 = vperm.xlu0 %1870, %v180
    %v1872 = vpop.permute.xlu0 %1871
    %1875 = vset.pattern.permute.xlu0 0
    %1876 = vperm.xlu0 %1875, %v181
    %v1877 = vpop.permute.xlu0 %1876
    %1880 = vset.pattern.permute.xlu0 0
    %1881 = vperm.xlu0 %1880, %v182
    %v1882 = vpop.permute.xlu0 %1881
    %1885 = vset.pattern.permute.xlu0 0
    %1886 = vperm.xlu0 %1885, %v183
    %v1887 = vpop.permute.xlu0 %1886
    %1890 = vset.pattern.permute.xlu0 0
    %1891 = vperm.xlu0 %1890, %v184
    %v1892 = vpop.permute.xlu0 %1891
    %1895 = vset.pattern.permute.xlu0 0
    %1896 = vperm.xlu0 %1895, %v185
    %v1897 = vpop.permute.xlu0 %1896
    %1900 = vset.pattern.permute.xlu0 0
    %1901 = vperm.xlu0 %1900, %v186
    %v1902 = vpop.permute.xlu0 %1901
    %1905 = vset.pattern.permute.xlu0 0
    %1906 = vperm.xlu0 %1905, %v187
    %v1907 = vpop.permute.xlu0 %1906
    %1910 = vset.pattern.permute.xlu0 0
    %1911 = vperm.xlu0 %1910, %v188
    %v1912 = vpop.permute.xlu0 %1911
    %1915 = vset.pattern.permute.xlu0 0
    %1916 = vperm.xlu0 %1915, %v189
    %v1917 = vpop.permute.xlu0 %1916
    %1920 = vset.pattern.permute.xlu0 0
    %1921 = vperm.xlu0 %1920, %v190
    %v1922 = vpop.permute.xlu0 %1921
    %1925 = vset.pattern.permute.xlu0 0
    %1926 = vperm.xlu0 %1925, %v191
    %v1927 = vpop.permute.xlu0 %1926
    %1930 = vset.pattern.permute.xlu0 0
    %1931 = vperm.xlu0 %1930, %v192
    %v1932 = vpop.permute.xlu0 %1931
    %1935 = vset.pattern.permute.xlu0 0
    %1936 = vperm.xlu0 %1935, %v193
    %v1937 = vpop.permute.xlu0 %1936
    %1940 = vset.pattern.permute.xlu0 0
    %1941 = vperm.xlu0 %1940, %v194
    %v1942 = vpop.permute.xlu0 %1941
    %1945 = vset.pattern.permute.xlu0 0
    %1946 = vperm.xlu0 %1945, %v195
    %v1947 = vpop.permute.xlu0 %1946
    %1950 = vset.pattern.permute.xlu0 0
    %1951 = vperm.xlu0 %1950, %v196
    %v1952 = vpop.permute.xlu0 %1951
    %1955 = vset.pattern.permute.xlu0 0
    %1956 = vperm.xlu0 %1955, %v197
    %v1957 = vpop.permute.xlu0 %1956
    %1960 = vset.pattern.permute.xlu0 0
    %1961 = vperm.xlu0 %1960, %v198
    %v1962 = vpop.permute.xlu0 %1961
    %1965 = vset.pattern.permute.xlu0 0
    %1966 = vperm.xlu0 %1965, %v199
    %v1967 = vpop.permute.xlu0 %1966
    %1970 = vset.pattern.permute.xlu0 0
    %1971 = vperm.xlu0 %1970, %v200
    %v1972 = vpop.permute.xlu0 %1971
    %1975 = vset.pattern.permute.xlu0 0
    %1976 = vperm.xlu0 %1975, %v201
    %v1977 = vpop.permute.xlu0 %1976
    %1980 = vset.pattern.permute.xlu0 0
    %1981 = vperm.xlu0 %1980, %v202
    %v1982 = vpop.permute.xlu0 %1981
    %1985 = vset.pattern.permute.xlu0 0
    %1986 = vperm.xlu0 %1985, %v203
    %v1987 = vpop.permute.xlu0 %1986
    %1990 = vset.pattern.permute.xlu0 0
    %1991 = vperm.xlu0 %1990, %v204
    %v1992 = vpop.permute.xlu0 %1991
    %1995 = vset.pattern.permute.xlu0 0
    %1996 = vperm.xlu0 %1995, %v205
    %v1997 = vpop.permute.xlu0 %1996
    %2000 = vset.pattern.permute.xlu0 0
    %2001 = vperm.xlu0 %2000, %v206
    %v2002 = vpop.permute.xlu0 %2001
    %2005 = vset.pattern.permute.xlu0 0
    %2006 = vperm.xlu0 %2005, %v207
    %v2007 = vpop.permute.xlu0 %2006
    %2010 = vset.pattern.permute.xlu0 0
    %2011 = vperm.xlu0 %2010, %v208
    %v2012 = vpop.permute.xlu0 %2011
    %2015 = vset.pattern.permute.xlu0 0
    %2016 = vperm.xlu0 %2015, %v209
    %v2017 = vpop.permute.xlu0 %2016
    %2020 = vset.pattern.permute.xlu0 0
    %2021 = vperm.xlu0 %2020, %v210
    %v2022 = vpop.permute.xlu0 %2021
    %2025 = vset.pattern.permute.xlu0 0
    %2026 = vperm.xlu0 %2025, %v211
    %v2027 = vpop.permute.xlu0 %2026
    %2030 = vset.pattern.permute.xlu0 0
    %2031 = vperm.xlu0 %2030, %v212
    %v2032 = vpop.permute.xlu0 %2031
    %2035 = vset.pattern.permute.xlu0 0
    %2036 = vperm.xlu0 %2035, %v213
    %v2037 = vpop.permute.xlu0 %2036
    %2040 = vset.pattern.permute.xlu0 0
    %2041 = vperm.xlu0 %2040, %v214
    %v2042 = vpop.permute.xlu0 %2041
    %2045 = vset.pattern.permute.xlu0 0
    %2046 = vperm.xlu0 %2045, %v215
    %v2047 = vpop.permute.xlu0 %2046
    %2050 = vset.pattern.permute.xlu0 0
    %2051 = vperm.xlu0 %2050, %v216
    %v2052 = vpop.permute.xlu0 %2051
    %2055 = vset.pattern.permute.xlu0 0
    %2056 = vperm.xlu0 %2055, %v217
    %v2057 = vpop.permute.xlu0 %2056
    %2060 = vset.pattern.permute.xlu0 0
    %2061 = vperm.xlu0 %2060, %v218
    %v2062 = vpop.permute.xlu0 %2061
    %2065 = vset.pattern.permute.xlu0 0
    %2066 = vperm.xlu0 %2065, %v219
    %v2067 = vpop.permute.xlu0 %2066
    %2070 = vset.pattern.permute.xlu0 0
    %2071 = vperm.xlu0 %2070, %v220
    %v2072 = vpop.permute.xlu0 %2071
    %2075 = vset.pattern.permute.xlu0 0
    %2076 = vperm.xlu0 %2075, %v221
    %v2077 = vpop.permute.xlu0 %2076
    %2080 = vset.pattern.permute.xlu0 0
    %2081 = vperm.xlu0 %2080, %v222
    %v2082 = vpop.permute.xlu0 %2081
    %2085 = vset.pattern.permute.xlu0 0
    %2086 = vperm.xlu0 %2085, %v223
    %v2087 = vpop.permute.xlu0 %2086
    %2090 = vset.pattern.permute.xlu0 0
    %2091 = vperm.xlu0 %2090, %v224
    %v2092 = vpop.permute.xlu0 %2091
    %2095 = vset.pattern.permute.xlu0 0
    %2096 = vperm.xlu0 %2095, %v225
    %v2097 = vpop.permute.xlu0 %2096
    %2100 = vset.pattern.permute.xlu0 0
    %2101 = vperm.xlu0 %2100, %v226
    %v2102 = vpop.permute.xlu0 %2101
    %2105 = vset.pattern.permute.xlu0 0
    %2106 = vperm.xlu0 %2105, %v227
    %v2107 = vpop.permute.xlu0 %2106
    %2110 = vset.pattern.permute.xlu0 0
    %2111 = vperm.xlu0 %2110, %v228
    %v2112 = vpop.permute.xlu0 %2111
    %2115 = vset.pattern.permute.xlu0 0
    %2116 = vperm.xlu0 %2115, %v229
    %v2117 = vpop.permute.xlu0 %2116
    %2120 = vset.pattern.permute.xlu0 0
    %2121 = vperm.xlu0 %2120, %v230
    %v2122 = vpop.permute.xlu0 %2121
    %2125 = vset.pattern.permute.xlu0 0
    %2126 = vperm.xlu0 %2125, %v231
    %v2127 = vpop.permute.xlu0 %2126
    %2130 = vset.pattern.permute.xlu0 0
    %2131 = vperm.xlu0 %2130, %v232
    %v2132 = vpop.permute.xlu0 %2131
    %2135 = vset.pattern.permute.xlu0 0
    %2136 = vperm.xlu0 %2135, %v233
    %v2137 = vpop.permute.xlu0 %2136
    %2140 = vset.pattern.permute.xlu0 0
    %2141 = vperm.xlu0 %2140, %v234
    %v2142 = vpop.permute.xlu0 %2141
    %2145 = vset.pattern.permute.xlu0 0
    %2146 = vperm.xlu0 %2145, %v235
    %v2147 = vpop.permute.xlu0 %2146
    %2150 = vset.pattern.permute.xlu0 0
    %2151 = vperm.xlu0 %2150, %v236
    %v2152 = vpop.permute.xlu0 %2151
    %2155 = vset.pattern.permute.xlu0 0
    %2156 = vperm.xlu0 %2155, %v237
    %v2157 = vpop.permute.xlu0 %2156
    %2160 = vset.pattern.permute.xlu0 0
    %2161 = vperm.xlu0 %2160, %v238
    %v2162 = vpop.permute.xlu0 %2161
    %2165 = vset.pattern.permute.xlu0 0
    %2166 = vperm.xlu0 %2165, %v239
    %v2167 = vpop.permute.xlu0 %2166
    %2170 = vset.pattern.permute.xlu0 0
    %2171 = vperm.xlu0 %2170, %v240
    %v2172 = vpop.permute.xlu0 %2171
    %2175 = vset.pattern.permute.xlu0 0
    %2176 = vperm.xlu0 %2175, %v241
    %v2177 = vpop.permute.xlu0 %2176
    %2180 = vset.pattern.permute.xlu0 0
    %2181 = vperm.xlu0 %2180, %v242
    %v2182 = vpop.permute.xlu0 %2181
    %v2184 = vlaneseq
    %v2185 = vshrl.u32 %v2184, 7
    %v2186 = vsub.s32 0, %v2185
    %v2187 = vrot.slane %v1863, %v2186
    %v2188 = vmul.f32 %v1867, %v2187
    %v2189 = vmul.f32 %v1872, %v2187
    %v2190 = vmul.f32 %v1877, %v2187
    %v2191 = vmul.f32 %v1882, %v2187
    %v2192 = vmul.f32 %v1887, %v2187
    %v2193 = vmul.f32 %v1892, %v2187
    %v2194 = vmul.f32 %v1897, %v2187
    %v2195 = vmul.f32 %v1902, %v2187
    %v2196 = vmul.f32 %v1907, %v2187
    %v2197 = vmul.f32 %v1912, %v2187
    %v2198 = vmul.f32 %v1917, %v2187
    %v2199 = vmul.f32 %v1922, %v2187
    %v2200 = vmul.f32 %v1927, %v2187
    %v2201 = vmul.f32 %v1932, %v2187
    %v2202 = vmul.f32 %v1937, %v2187
    %v2203 = vmul.f32 %v1942, %v2187
    %v2204 = vmul.f32 %v1947, %v2187
    %v2205 = vmul.f32 %v1952, %v2187
    %v2206 = vmul.f32 %v1957, %v2187
    %v2207 = vmul.f32 %v1962, %v2187
    %v2208 = vmul.f32 %v1967, %v2187
    %v2209 = vmul.f32 %v1972, %v2187
    %v2210 = vmul.f32 %v1977, %v2187
    %v2211 = vmul.f32 %v1982, %v2187
    %v2212 = vmul.f32 %v1987, %v2187
    %v2213 = vmul.f32 %v1992, %v2187
    %v2214 = vmul.f32 %v1997, %v2187
    %v2215 = vmul.f32 %v2002, %v2187
    %v2216 = vmul.f32 %v2007, %v2187
    %v2217 = vmul.f32 %v2012, %v2187
    %v2218 = vmul.f32 %v2017, %v2187
    %v2219 = vmul.f32 %v2022, %v2187
    %v2220 = vmul.f32 %v2027, %v2187
    %v2221 = vmul.f32 %v2032, %v2187
    %v2222 = vmul.f32 %v2037, %v2187
    %v2223 = vmul.f32 %v2042, %v2187
    %v2224 = vmul.f32 %v2047, %v2187
    %v2225 = vmul.f32 %v2052, %v2187
    %v2226 = vmul.f32 %v2057, %v2187
    %v2227 = vmul.f32 %v2062, %v2187
    %v2228 = vmul.f32 %v2067, %v2187
    %v2229 = vmul.f32 %v2072, %v2187
    %v2230 = vmul.f32 %v2077, %v2187
    %v2231 = vmul.f32 %v2082, %v2187
    %v2232 = vmul.f32 %v2087, %v2187
    %v2233 = vmul.f32 %v2092, %v2187
    %v2234 = vmul.f32 %v2097, %v2187
    %v2235 = vmul.f32 %v2102, %v2187
    %v2236 = vmul.f32 %v2107, %v2187
    %v2237 = vmul.f32 %v2112, %v2187
    %v2238 = vmul.f32 %v2117, %v2187
    %v2239 = vmul.f32 %v2122, %v2187
    %v2240 = vmul.f32 %v2127, %v2187
    %v2241 = vmul.f32 %v2132, %v2187
    %v2242 = vmul.f32 %v2137, %v2187
    %v2243 = vmul.f32 %v2142, %v2187
    %v2244 = vmul.f32 %v2147, %v2187
    %v2245 = vmul.f32 %v2152, %v2187
    %v2246 = vmul.f32 %v2157, %v2187
    %v2247 = vmul.f32 %v2162, %v2187
    %v2248 = vmul.f32 %v2167, %v2187
    %v2249 = vmul.f32 %v2172, %v2187
    %v2250 = vmul.f32 %v2177, %v2187
    %v2251 = vmul.f32 %v2182, %v2187
    %v2252 = vadd.f32 %v1799, %v2188
    %v2253 = vadd.f32 %v1800, %v2189
    %v2254 = vadd.f32 %v1801, %v2190
    %v2255 = vadd.f32 %v1802, %v2191
    %v2256 = vadd.f32 %v1803, %v2192
    %v2257 = vadd.f32 %v1804, %v2193
    %v2258 = vadd.f32 %v1805, %v2194
    %v2259 = vadd.f32 %v1806, %v2195
    %v2260 = vadd.f32 %v1807, %v2196
    %v2261 = vadd.f32 %v1808, %v2197
    %v2262 = vadd.f32 %v1809, %v2198
    %v2263 = vadd.f32 %v1810, %v2199
    %v2264 = vadd.f32 %v1811, %v2200
    %v2265 = vadd.f32 %v1812, %v2201
    %v2266 = vadd.f32 %v1813, %v2202
    %v2267 = vadd.f32 %v1814, %v2203
    %v2268 = vadd.f32 %v1815, %v2204
    %v2269 = vadd.f32 %v1816, %v2205
    %v2270 = vadd.f32 %v1817, %v2206
    %v2271 = vadd.f32 %v1818, %v2207
    %v2272 = vadd.f32 %v1819, %v2208
    %v2273 = vadd.f32 %v1820, %v2209
    %v2274 = vadd.f32 %v1821, %v2210
    %v2275 = vadd.f32 %v1822, %v2211
    %v2276 = vadd.f32 %v1823, %v2212
    %v2277 = vadd.f32 %v1824, %v2213
    %v2278 = vadd.f32 %v1825, %v2214
    %v2279 = vadd.f32 %v1826, %v2215
    %v2280 = vadd.f32 %v1827, %v2216
    %v2281 = vadd.f32 %v1828, %v2217
    %v2282 = vadd.f32 %v1829, %v2218
    %v2283 = vadd.f32 %v1830, %v2219
    %v2284 = vadd.f32 %v1831, %v2220
    %v2285 = vadd.f32 %v1832, %v2221
    %v2286 = vadd.f32 %v1833, %v2222
    %v2287 = vadd.f32 %v1834, %v2223
    %v2288 = vadd.f32 %v1835, %v2224
    %v2289 = vadd.f32 %v1836, %v2225
    %v2290 = vadd.f32 %v1837, %v2226
    %v2291 = vadd.f32 %v1838, %v2227
    %v2292 = vadd.f32 %v1839, %v2228
    %v2293 = vadd.f32 %v1840, %v2229
    %v2294 = vadd.f32 %v1841, %v2230
    %v2295 = vadd.f32 %v1842, %v2231
    %v2296 = vadd.f32 %v1843, %v2232
    %v2297 = vadd.f32 %v1844, %v2233
    %v2298 = vadd.f32 %v1845, %v2234
    %v2299 = vadd.f32 %v1846, %v2235
    %v2300 = vadd.f32 %v1847, %v2236
    %v2301 = vadd.f32 %v1848, %v2237
    %v2302 = vadd.f32 %v1849, %v2238
    %v2303 = vadd.f32 %v1850, %v2239
    %v2304 = vadd.f32 %v1851, %v2240
    %v2305 = vadd.f32 %v1852, %v2241
    %v2306 = vadd.f32 %v1853, %v2242
    %v2307 = vadd.f32 %v1854, %v2243
    %v2308 = vadd.f32 %v1855, %v2244
    %v2309 = vadd.f32 %v1856, %v2245
    %v2310 = vadd.f32 %v1857, %v2246
    %v2311 = vadd.f32 %v1858, %v2247
    %v2312 = vadd.f32 %v1859, %v2248
    %v2313 = vadd.f32 %v1860, %v2249
    %v2314 = vadd.f32 %v1861, %v2250
    %v2315 = vadd.f32 %v1862, %v2251
    %v2316 = vlaneseq
    %v2317 = vshrl.u32 %v2316, 7
    %v2318 = vadd.s32 %v2317, 8
    %v2319 = vadd.s32 %v2317, 16
    %v2320 = vadd.s32 %v2317, 24
    %v2321 = vadd.s32 %v2317, 32
    %v2322 = vadd.s32 %v2317, 40
    %v2323 = vadd.s32 %v2317, 48
    %v2324 = vadd.s32 %v2317, 56
    %v2325 = vadd.s32 %v2317, 64
    %v2326 = vadd.s32 %v2317, 72
    %v2327 = vadd.s32 %v2317, 80
    %v2328 = vadd.s32 %v2317, 88
    %v2329 = vadd.s32 %v2317, 96
    %v2330 = vadd.s32 %v2317, 104
    %v2331 = vadd.s32 %v2317, 112
    %v2332 = vadd.s32 %v2317, 120
    %v2333 = vadd.s32 %v2317, 128
    %v2334 = vadd.s32 %v2317, 136
    %v2335 = vadd.s32 %v2317, 144
    %v2336 = vadd.s32 %v2317, 152
    %v2337 = vadd.s32 %v2317, 160
    %v2338 = vadd.s32 %v2317, 168
    %v2339 = vadd.s32 %v2317, 176
    %v2340 = vadd.s32 %v2317, 184
    %v2341 = vadd.s32 %v2317, 192
    %v2342 = vadd.s32 %v2317, 200
    %v2343 = vadd.s32 %v2317, 208
    %v2344 = vadd.s32 %v2317, 216
    %v2345 = vadd.s32 %v2317, 224
    %v2346 = vadd.s32 %v2317, 232
    %v2347 = vadd.s32 %v2317, 240
    %v2348 = vadd.s32 %v2317, 248
    %v2349 = vadd.s32 %v2317, 256
    %v2350 = vadd.s32 %v2317, 264
    %v2351 = vadd.s32 %v2317, 272
    %v2352 = vadd.s32 %v2317, 280
    %v2353 = vadd.s32 %v2317, 288
    %v2354 = vadd.s32 %v2317, 296
    %v2355 = vadd.s32 %v2317, 304
    %v2356 = vadd.s32 %v2317, 312
    %v2357 = vadd.s32 %v2317, 320
    %v2358 = vadd.s32 %v2317, 328
    %v2359 = vadd.s32 %v2317, 336
    %v2360 = vadd.s32 %v2317, 344
    %v2361 = vadd.s32 %v2317, 352
    %v2362 = vadd.s32 %v2317, 360
    %v2363 = vadd.s32 %v2317, 368
    %v2364 = vadd.s32 %v2317, 376
    %v2365 = vadd.s32 %v2317, 384
    %v2366 = vadd.s32 %v2317, 392
    %v2367 = vadd.s32 %v2317, 400
    %v2368 = vadd.s32 %v2317, 408
    %v2369 = vadd.s32 %v2317, 416
    %v2370 = vadd.s32 %v2317, 424
    %v2371 = vadd.s32 %v2317, 432
    %v2372 = vadd.s32 %v2317, 440
    %v2373 = vadd.s32 %v2317, 448
    %v2374 = vadd.s32 %v2317, 456
    %v2375 = vadd.s32 %v2317, 464
    %v2376 = vadd.s32 %v2317, 472
    %v2377 = vadd.s32 %v2317, 480
    %v2378 = vadd.s32 %v2317, 488
    %v2379 = vadd.s32 %v2317, 496
    %v2380 = vadd.s32 %v2317, 504
    %v2381 = vand.u32 %v2317, 63
    %v2382 = vand.u32 %v2318, 63
    %v2383 = vand.u32 %v2319, 63
    %v2384 = vand.u32 %v2320, 63
    %v2385 = vand.u32 %v2321, 63
    %v2386 = vand.u32 %v2322, 63
    %v2387 = vand.u32 %v2323, 63
    %v2388 = vand.u32 %v2324, 63
    %v2389 = vand.u32 %v2325, 63
    %v2390 = vand.u32 %v2326, 63
    %v2391 = vand.u32 %v2327, 63
    %v2392 = vand.u32 %v2328, 63
    %v2393 = vand.u32 %v2329, 63
    %v2394 = vand.u32 %v2330, 63
    %v2395 = vand.u32 %v2331, 63
    %v2396 = vand.u32 %v2332, 63
    %v2397 = vand.u32 %v2333, 63
    %v2398 = vand.u32 %v2334, 63
    %v2399 = vand.u32 %v2335, 63
    %v2400 = vand.u32 %v2336, 63
    %v2401 = vand.u32 %v2337, 63
    %v2402 = vand.u32 %v2338, 63
    %v2403 = vand.u32 %v2339, 63
    %v2404 = vand.u32 %v2340, 63
    %v2405 = vand.u32 %v2341, 63
    %v2406 = vand.u32 %v2342, 63
    %v2407 = vand.u32 %v2343, 63
    %v2408 = vand.u32 %v2344, 63
    %v2409 = vand.u32 %v2345, 63
    %v2410 = vand.u32 %v2346, 63
    %v2411 = vand.u32 %v2347, 63
    %v2412 = vand.u32 %v2348, 63
    %v2413 = vand.u32 %v2349, 63
    %v2414 = vand.u32 %v2350, 63
    %v2415 = vand.u32 %v2351, 63
    %v2416 = vand.u32 %v2352, 63
    %v2417 = vand.u32 %v2353, 63
    %v2418 = vand.u32 %v2354, 63
    %v2419 = vand.u32 %v2355, 63
    %v2420 = vand.u32 %v2356, 63
    %v2421 = vand.u32 %v2357, 63
    %v2422 = vand.u32 %v2358, 63
    %v2423 = vand.u32 %v2359, 63
    %v2424 = vand.u32 %v2360, 63
    %v2425 = vand.u32 %v2361, 63
    %v2426 = vand.u32 %v2362, 63
    %v2427 = vand.u32 %v2363, 63
    %v2428 = vand.u32 %v2364, 63
    %v2429 = vand.u32 %v2365, 63
    %v2430 = vand.u32 %v2366, 63
    %v2431 = vand.u32 %v2367, 63
    %v2432 = vand.u32 %v2368, 63
    %v2433 = vand.u32 %v2369, 63
    %v2434 = vand.u32 %v2370, 63
    %v2435 = vand.u32 %v2371, 63
    %v2436 = vand.u32 %v2372, 63
    %v2437 = vand.u32 %v2373, 63
    %v2438 = vand.u32 %v2374, 63
    %v2439 = vand.u32 %v2375, 63
    %v2440 = vand.u32 %v2376, 63
    %v2441 = vand.u32 %v2377, 63
    %v2442 = vand.u32 %v2378, 63
    %v2443 = vand.u32 %v2379, 63
    %v2444 = vand.u32 %v2380, 63
    %vm2445 = vcmp.lt.s32.totalorder %v2381, 60
    %vm2446 = vcmp.lt.s32.totalorder %v2382, 60
    %vm2447 = vcmp.lt.s32.totalorder %v2383, 60
    %vm2448 = vcmp.lt.s32.totalorder %v2384, 60
    %vm2449 = vcmp.lt.s32.totalorder %v2385, 60
    %vm2450 = vcmp.lt.s32.totalorder %v2386, 60
    %vm2451 = vcmp.lt.s32.totalorder %v2387, 60
    %vm2452 = vcmp.lt.s32.totalorder %v2388, 60
    %vm2453 = vcmp.lt.s32.totalorder %v2389, 60
    %vm2454 = vcmp.lt.s32.totalorder %v2390, 60
    %vm2455 = vcmp.lt.s32.totalorder %v2391, 60
    %vm2456 = vcmp.lt.s32.totalorder %v2392, 60
    %vm2457 = vcmp.lt.s32.totalorder %v2393, 60
    %vm2458 = vcmp.lt.s32.totalorder %v2394, 60
    %vm2459 = vcmp.lt.s32.totalorder %v2395, 60
    %vm2460 = vcmp.lt.s32.totalorder %v2396, 60
    %vm2461 = vcmp.lt.s32.totalorder %v2397, 60
    %vm2462 = vcmp.lt.s32.totalorder %v2398, 60
    %vm2463 = vcmp.lt.s32.totalorder %v2399, 60
    %vm2464 = vcmp.lt.s32.totalorder %v2400, 60
    %vm2465 = vcmp.lt.s32.totalorder %v2401, 60
    %vm2466 = vcmp.lt.s32.totalorder %v2402, 60
    %vm2467 = vcmp.lt.s32.totalorder %v2403, 60
    %vm2468 = vcmp.lt.s32.totalorder %v2404, 60
    %vm2469 = vcmp.lt.s32.totalorder %v2405, 60
    %vm2470 = vcmp.lt.s32.totalorder %v2406, 60
    %vm2471 = vcmp.lt.s32.totalorder %v2407, 60
    %vm2472 = vcmp.lt.s32.totalorder %v2408, 60
    %vm2473 = vcmp.lt.s32.totalorder %v2409, 60
    %vm2474 = vcmp.lt.s32.totalorder %v2410, 60
    %vm2475 = vcmp.lt.s32.totalorder %v2411, 60
    %vm2476 = vcmp.lt.s32.totalorder %v2412, 60
    %vm2477 = vcmp.lt.s32.totalorder %v2413, 60
    %vm2478 = vcmp.lt.s32.totalorder %v2414, 60
    %vm2479 = vcmp.lt.s32.totalorder %v2415, 60
    %vm2480 = vcmp.lt.s32.totalorder %v2416, 60
    %vm2481 = vcmp.lt.s32.totalorder %v2417, 60
    %vm2482 = vcmp.lt.s32.totalorder %v2418, 60
    %vm2483 = vcmp.lt.s32.totalorder %v2419, 60
    %vm2484 = vcmp.lt.s32.totalorder %v2420, 60
    %vm2485 = vcmp.lt.s32.totalorder %v2421, 60
    %vm2486 = vcmp.lt.s32.totalorder %v2422, 60
    %vm2487 = vcmp.lt.s32.totalorder %v2423, 60
    %vm2488 = vcmp.lt.s32.totalorder %v2424, 60
    %vm2489 = vcmp.lt.s32.totalorder %v2425, 60
    %vm2490 = vcmp.lt.s32.totalorder %v2426, 60
    %vm2491 = vcmp.lt.s32.totalorder %v2427, 60
    %vm2492 = vcmp.lt.s32.totalorder %v2428, 60
    %vm2493 = vcmp.lt.s32.totalorder %v2429, 60
    %vm2494 = vcmp.lt.s32.totalorder %v2430, 60
    %vm2495 = vcmp.lt.s32.totalorder %v2431, 60
    %vm2496 = vcmp.lt.s32.totalorder %v2432, 60
    %vm2497 = vcmp.lt.s32.totalorder %v2433, 60
    %vm2498 = vcmp.lt.s32.totalorder %v2434, 60
    %vm2499 = vcmp.lt.s32.totalorder %v2435, 60
    %vm2500 = vcmp.lt.s32.totalorder %v2436, 60
    %vm2501 = vcmp.lt.s32.totalorder %v2437, 60
    %vm2502 = vcmp.lt.s32.totalorder %v2438, 60
    %vm2503 = vcmp.lt.s32.totalorder %v2439, 60
    %vm2504 = vcmp.lt.s32.totalorder %v2440, 60
    %vm2505 = vcmp.lt.s32.totalorder %v2441, 60
    %vm2506 = vcmp.lt.s32.totalorder %v2442, 60
    %vm2507 = vcmp.lt.s32.totalorder %v2443, 60
    %vm2508 = vcmp.lt.s32.totalorder %v2444, 60
    %v2509 = vsel %vm2445, %v2252, 0.0
    %v2510 = vsel %vm2446, %v2253, 0.0
    %v2511 = vsel %vm2447, %v2254, 0.0
    %v2512 = vsel %vm2448, %v2255, 0.0
    %v2513 = vsel %vm2449, %v2256, 0.0
    %v2514 = vsel %vm2450, %v2257, 0.0
    %v2515 = vsel %vm2451, %v2258, 0.0
    %v2516 = vsel %vm2452, %v2259, 0.0
    %v2517 = vsel %vm2453, %v2260, 0.0
    %v2518 = vsel %vm2454, %v2261, 0.0
    %v2519 = vsel %vm2455, %v2262, 0.0
    %v2520 = vsel %vm2456, %v2263, 0.0
    %v2521 = vsel %vm2457, %v2264, 0.0
    %v2522 = vsel %vm2458, %v2265, 0.0
    %v2523 = vsel %vm2459, %v2266, 0.0
    %v2524 = vsel %vm2460, %v2267, 0.0
    %v2525 = vsel %vm2461, %v2268, 0.0
    %v2526 = vsel %vm2462, %v2269, 0.0
    %v2527 = vsel %vm2463, %v2270, 0.0
    %v2528 = vsel %vm2464, %v2271, 0.0
    %v2529 = vsel %vm2465, %v2272, 0.0
    %v2530 = vsel %vm2466, %v2273, 0.0
    %v2531 = vsel %vm2467, %v2274, 0.0
    %v2532 = vsel %vm2468, %v2275, 0.0
    %v2533 = vsel %vm2469, %v2276, 0.0
    %v2534 = vsel %vm2470, %v2277, 0.0
    %v2535 = vsel %vm2471, %v2278, 0.0
    %v2536 = vsel %vm2472, %v2279, 0.0
    %v2537 = vsel %vm2473, %v2280, 0.0
    %v2538 = vsel %vm2474, %v2281, 0.0
    %v2539 = vsel %vm2475, %v2282, 0.0
    %v2540 = vsel %vm2476, %v2283, 0.0
    %v2541 = vsel %vm2477, %v2284, 0.0
    %v2542 = vsel %vm2478, %v2285, 0.0
    %v2543 = vsel %vm2479, %v2286, 0.0
    %v2544 = vsel %vm2480, %v2287, 0.0
    %v2545 = vsel %vm2481, %v2288, 0.0
    %v2546 = vsel %vm2482, %v2289, 0.0
    %v2547 = vsel %vm2483, %v2290, 0.0
    %v2548 = vsel %vm2484, %v2291, 0.0
    %v2549 = vsel %vm2485, %v2292, 0.0
    %v2550 = vsel %vm2486, %v2293, 0.0
    %v2551 = vsel %vm2487, %v2294, 0.0
    %v2552 = vsel %vm2488, %v2295, 0.0
    %v2553 = vsel %vm2489, %v2296, 0.0
    %v2554 = vsel %vm2490, %v2297, 0.0
    %v2555 = vsel %vm2491, %v2298, 0.0
    %v2556 = vsel %vm2492, %v2299, 0.0
    %v2557 = vsel %vm2493, %v2300, 0.0
    %v2558 = vsel %vm2494, %v2301, 0.0
    %v2559 = vsel %vm2495, %v2302, 0.0
    %v2560 = vsel %vm2496, %v2303, 0.0
    %v2561 = vsel %vm2497, %v2304, 0.0
    %v2562 = vsel %vm2498, %v2305, 0.0
    %v2563 = vsel %vm2499, %v2306, 0.0
    %v2564 = vsel %vm2500, %v2307, 0.0
    %v2565 = vsel %vm2501, %v2308, 0.0
    %v2566 = vsel %vm2502, %v2309, 0.0
    %v2567 = vsel %vm2503, %v2310, 0.0
    %v2568 = vsel %vm2504, %v2311, 0.0
    %v2569 = vsel %vm2505, %v2312, 0.0
    %v2570 = vsel %vm2506, %v2313, 0.0
    %v2571 = vsel %vm2507, %v2314, 0.0
    %v2572 = vsel %vm2508, %v2315, 0.0
    %vm2573 = vcmask 261120
    %v2574 = vsel %vm2573, %v2509, 0.0
    %v2575 = vsel %vm2573, %v2510, 0.0
    %v2576 = vadd.f32 %v2574, %v2575
    %v2577 = vsel %vm2573, %v2511, 0.0
    %v2578 = vadd.f32 %v2576, %v2577
    %v2579 = vsel %vm2573, %v2512, 0.0
    %v2580 = vadd.f32 %v2578, %v2579
    %v2581 = vsel %vm2573, %v2513, 0.0
    %v2582 = vadd.f32 %v2580, %v2581
    %v2583 = vsel %vm2573, %v2514, 0.0
    %v2584 = vadd.f32 %v2582, %v2583
    %v2585 = vsel %vm2573, %v2515, 0.0
    %v2586 = vadd.f32 %v2584, %v2585
    %v2587 = vsel %vm2573, %v2516, 0.0
    %v2588 = vadd.f32 %v2586, %v2587
    %v2589 = vsel %vm2573, %v2517, 0.0
    %v2590 = vadd.f32 %v2588, %v2589
    %v2591 = vsel %vm2573, %v2518, 0.0
    %v2592 = vadd.f32 %v2590, %v2591
    %v2593 = vsel %vm2573, %v2519, 0.0
    %v2594 = vadd.f32 %v2592, %v2593
    %v2595 = vsel %vm2573, %v2520, 0.0
    %v2596 = vadd.f32 %v2594, %v2595
    %v2597 = vsel %vm2573, %v2521, 0.0
    %v2598 = vadd.f32 %v2596, %v2597
    %v2599 = vsel %vm2573, %v2522, 0.0
    %v2600 = vadd.f32 %v2598, %v2599
    %v2601 = vsel %vm2573, %v2523, 0.0
    %v2602 = vadd.f32 %v2600, %v2601
    %v2603 = vsel %vm2573, %v2524, 0.0
    %v2604 = vadd.f32 %v2602, %v2603
    %v2605 = vsel %vm2573, %v2525, 0.0
    %v2606 = vadd.f32 %v2604, %v2605
    %v2607 = vsel %vm2573, %v2526, 0.0
    %v2608 = vadd.f32 %v2606, %v2607
    %v2609 = vsel %vm2573, %v2527, 0.0
    %v2610 = vadd.f32 %v2608, %v2609
    %v2611 = vsel %vm2573, %v2528, 0.0
    %v2612 = vadd.f32 %v2610, %v2611
    %v2613 = vsel %vm2573, %v2529, 0.0
    %v2614 = vadd.f32 %v2612, %v2613
    %v2615 = vsel %vm2573, %v2530, 0.0
    %v2616 = vadd.f32 %v2614, %v2615
    %v2617 = vsel %vm2573, %v2531, 0.0
    %v2618 = vadd.f32 %v2616, %v2617
    %v2619 = vsel %vm2573, %v2532, 0.0
    %v2620 = vadd.f32 %v2618, %v2619
    %v2621 = vsel %vm2573, %v2533, 0.0
    %v2622 = vadd.f32 %v2620, %v2621
    %v2623 = vsel %vm2573, %v2534, 0.0
    %v2624 = vadd.f32 %v2622, %v2623
    %v2625 = vsel %vm2573, %v2535, 0.0
    %v2626 = vadd.f32 %v2624, %v2625
    %v2627 = vsel %vm2573, %v2536, 0.0
    %v2628 = vadd.f32 %v2626, %v2627
    %v2629 = vsel %vm2573, %v2537, 0.0
    %v2630 = vadd.f32 %v2628, %v2629
    %v2631 = vsel %vm2573, %v2538, 0.0
    %v2632 = vadd.f32 %v2630, %v2631
    %v2633 = vsel %vm2573, %v2539, 0.0
    %v2634 = vadd.f32 %v2632, %v2633
    %v2635 = vsel %vm2573, %v2540, 0.0
    %v2636 = vadd.f32 %v2634, %v2635
    %v2637 = vsel %vm2573, %v2541, 0.0
    %v2638 = vadd.f32 %v2636, %v2637
    %v2639 = vsel %vm2573, %v2542, 0.0
    %v2640 = vadd.f32 %v2638, %v2639
    %v2641 = vsel %vm2573, %v2543, 0.0
    %v2642 = vadd.f32 %v2640, %v2641
    %v2643 = vsel %vm2573, %v2544, 0.0
    %v2644 = vadd.f32 %v2642, %v2643
    %v2645 = vsel %vm2573, %v2545, 0.0
    %v2646 = vadd.f32 %v2644, %v2645
    %v2647 = vsel %vm2573, %v2546, 0.0
    %v2648 = vadd.f32 %v2646, %v2647
    %v2649 = vsel %vm2573, %v2547, 0.0
    %v2650 = vadd.f32 %v2648, %v2649
    %v2651 = vsel %vm2573, %v2548, 0.0
    %v2652 = vadd.f32 %v2650, %v2651
    %v2653 = vsel %vm2573, %v2549, 0.0
    %v2654 = vadd.f32 %v2652, %v2653
    %v2655 = vsel %vm2573, %v2550, 0.0
    %v2656 = vadd.f32 %v2654, %v2655
    %v2657 = vsel %vm2573, %v2551, 0.0
    %v2658 = vadd.f32 %v2656, %v2657
    %v2659 = vsel %vm2573, %v2552, 0.0
    %v2660 = vadd.f32 %v2658, %v2659
    %v2661 = vsel %vm2573, %v2553, 0.0
    %v2662 = vadd.f32 %v2660, %v2661
    %v2663 = vsel %vm2573, %v2554, 0.0
    %v2664 = vadd.f32 %v2662, %v2663
    %v2665 = vsel %vm2573, %v2555, 0.0
    %v2666 = vadd.f32 %v2664, %v2665
    %v2667 = vsel %vm2573, %v2556, 0.0
    %v2668 = vadd.f32 %v2666, %v2667
    %v2669 = vsel %vm2573, %v2557, 0.0
    %v2670 = vadd.f32 %v2668, %v2669
    %v2671 = vsel %vm2573, %v2558, 0.0
    %v2672 = vadd.f32 %v2670, %v2671
    %v2673 = vsel %vm2573, %v2559, 0.0
    %v2674 = vadd.f32 %v2672, %v2673
    %v2675 = vsel %vm2573, %v2560, 0.0
    %v2676 = vadd.f32 %v2674, %v2675
    %v2677 = vsel %vm2573, %v2561, 0.0
    %v2678 = vadd.f32 %v2676, %v2677
    %v2679 = vsel %vm2573, %v2562, 0.0
    %v2680 = vadd.f32 %v2678, %v2679
    %v2681 = vsel %vm2573, %v2563, 0.0
    %v2682 = vadd.f32 %v2680, %v2681
    %v2683 = vsel %vm2573, %v2564, 0.0
    %v2684 = vadd.f32 %v2682, %v2683
    %v2685 = vsel %vm2573, %v2565, 0.0
    %v2686 = vadd.f32 %v2684, %v2685
    %v2687 = vsel %vm2573, %v2566, 0.0
    %v2688 = vadd.f32 %v2686, %v2687
    %v2689 = vsel %vm2573, %v2567, 0.0
    %v2690 = vadd.f32 %v2688, %v2689
    %v2691 = vsel %vm2573, %v2568, 0.0
    %v2692 = vadd.f32 %v2690, %v2691
    %v2693 = vsel %vm2573, %v2569, 0.0
    %v2694 = vadd.f32 %v2692, %v2693
    %v2695 = vsel %vm2573, %v2570, 0.0
    %v2696 = vadd.f32 %v2694, %v2695
    %v2697 = vsel %vm2573, %v2571, 0.0
    %v2698 = vadd.f32 %v2696, %v2697
    %v2699 = vsel %vm2573, %v2572, 0.0
    %v2700 = vadd.f32 %v2698, %v2699
    %v2701 = vrot.slane %v2700, 4
    %v2702 = vadd.f32 %v2700, %v2701
    %v2703 = vrot.slane %v2702, 2
    %v2704 = vadd.f32 %v2702, %v2703
    %v2705 = vrot.slane %v2704, 1
    %v2706 = vadd.f32 %v2704, %v2705
    %v2707 = vmul.f32 %v2706, 0.0020833334
    %v2708 = vsub.f32 %v2252, %v2707
    %v2709 = vsub.f32 %v2253, %v2707
    %v2710 = vsub.f32 %v2254, %v2707
    %v2711 = vsub.f32 %v2255, %v2707
    %v2712 = vsub.f32 %v2256, %v2707
    %v2713 = vsub.f32 %v2257, %v2707
    %v2714 = vsub.f32 %v2258, %v2707
    %v2715 = vsub.f32 %v2259, %v2707
    %v2716 = vsub.f32 %v2260, %v2707
    %v2717 = vsub.f32 %v2261, %v2707
    %v2718 = vsub.f32 %v2262, %v2707
    %v2719 = vsub.f32 %v2263, %v2707
    %v2720 = vsub.f32 %v2264, %v2707
    %v2721 = vsub.f32 %v2265, %v2707
    %v2722 = vsub.f32 %v2266, %v2707
    %v2723 = vsub.f32 %v2267, %v2707
    %v2724 = vsub.f32 %v2268, %v2707
    %v2725 = vsub.f32 %v2269, %v2707
    %v2726 = vsub.f32 %v2270, %v2707
    %v2727 = vsub.f32 %v2271, %v2707
    %v2728 = vsub.f32 %v2272, %v2707
    %v2729 = vsub.f32 %v2273, %v2707
    %v2730 = vsub.f32 %v2274, %v2707
    %v2731 = vsub.f32 %v2275, %v2707
    %v2732 = vsub.f32 %v2276, %v2707
    %v2733 = vsub.f32 %v2277, %v2707
    %v2734 = vsub.f32 %v2278, %v2707
    %v2735 = vsub.f32 %v2279, %v2707
    %v2736 = vsub.f32 %v2280, %v2707
    %v2737 = vsub.f32 %v2281, %v2707
    %v2738 = vsub.f32 %v2282, %v2707
    %v2739 = vsub.f32 %v2283, %v2707
    %v2740 = vsub.f32 %v2284, %v2707
    %v2741 = vsub.f32 %v2285, %v2707
    %v2742 = vsub.f32 %v2286, %v2707
    %v2743 = vsub.f32 %v2287, %v2707
    %v2744 = vsub.f32 %v2288, %v2707
    %v2745 = vsub.f32 %v2289, %v2707
    %v2746 = vsub.f32 %v2290, %v2707
    %v2747 = vsub.f32 %v2291, %v2707
    %v2748 = vsub.f32 %v2292, %v2707
    %v2749 = vsub.f32 %v2293, %v2707
    %v2750 = vsub.f32 %v2294, %v2707
    %v2751 = vsub.f32 %v2295, %v2707
    %v2752 = vsub.f32 %v2296, %v2707
    %v2753 = vsub.f32 %v2297, %v2707
    %v2754 = vsub.f32 %v2298, %v2707
    %v2755 = vsub.f32 %v2299, %v2707
    %v2756 = vsub.f32 %v2300, %v2707
    %v2757 = vsub.f32 %v2301, %v2707
    %v2758 = vsub.f32 %v2302, %v2707
    %v2759 = vsub.f32 %v2303, %v2707
    %v2760 = vsub.f32 %v2304, %v2707
    %v2761 = vsub.f32 %v2305, %v2707
    %v2762 = vsub.f32 %v2306, %v2707
    %v2763 = vsub.f32 %v2307, %v2707
    %v2764 = vsub.f32 %v2308, %v2707
    %v2765 = vsub.f32 %v2309, %v2707
    %v2766 = vsub.f32 %v2310, %v2707
    %v2767 = vsub.f32 %v2311, %v2707
    %v2768 = vsub.f32 %v2312, %v2707
    %v2769 = vsub.f32 %v2313, %v2707
    %v2770 = vsub.f32 %v2314, %v2707
    %v2771 = vsub.f32 %v2315, %v2707
    %v2772 = vsel %vm2445, %v2708, 0.0
    %v2773 = vsel %vm2446, %v2709, 0.0
    %v2774 = vsel %vm2447, %v2710, 0.0
    %v2775 = vsel %vm2448, %v2711, 0.0
    %v2776 = vsel %vm2449, %v2712, 0.0
    %v2777 = vsel %vm2450, %v2713, 0.0
    %v2778 = vsel %vm2451, %v2714, 0.0
    %v2779 = vsel %vm2452, %v2715, 0.0
    %v2780 = vsel %vm2453, %v2716, 0.0
    %v2781 = vsel %vm2454, %v2717, 0.0
    %v2782 = vsel %vm2455, %v2718, 0.0
    %v2783 = vsel %vm2456, %v2719, 0.0
    %v2784 = vsel %vm2457, %v2720, 0.0
    %v2785 = vsel %vm2458, %v2721, 0.0
    %v2786 = vsel %vm2459, %v2722, 0.0
    %v2787 = vsel %vm2460, %v2723, 0.0
    %v2788 = vsel %vm2461, %v2724, 0.0
    %v2789 = vsel %vm2462, %v2725, 0.0
    %v2790 = vsel %vm2463, %v2726, 0.0
    %v2791 = vsel %vm2464, %v2727, 0.0
    %v2792 = vsel %vm2465, %v2728, 0.0
    %v2793 = vsel %vm2466, %v2729, 0.0
    %v2794 = vsel %vm2467, %v2730, 0.0
    %v2795 = vsel %vm2468, %v2731, 0.0
    %v2796 = vsel %vm2469, %v2732, 0.0
    %v2797 = vsel %vm2470, %v2733, 0.0
    %v2798 = vsel %vm2471, %v2734, 0.0
    %v2799 = vsel %vm2472, %v2735, 0.0
    %v2800 = vsel %vm2473, %v2736, 0.0
    %v2801 = vsel %vm2474, %v2737, 0.0
    %v2802 = vsel %vm2475, %v2738, 0.0
    %v2803 = vsel %vm2476, %v2739, 0.0
    %v2804 = vsel %vm2477, %v2740, 0.0
    %v2805 = vsel %vm2478, %v2741, 0.0
    %v2806 = vsel %vm2479, %v2742, 0.0
    %v2807 = vsel %vm2480, %v2743, 0.0
    %v2808 = vsel %vm2481, %v2744, 0.0
    %v2809 = vsel %vm2482, %v2745, 0.0
    %v2810 = vsel %vm2483, %v2746, 0.0
    %v2811 = vsel %vm2484, %v2747, 0.0
    %v2812 = vsel %vm2485, %v2748, 0.0
    %v2813 = vsel %vm2486, %v2749, 0.0
    %v2814 = vsel %vm2487, %v2750, 0.0
    %v2815 = vsel %vm2488, %v2751, 0.0
    %v2816 = vsel %vm2489, %v2752, 0.0
    %v2817 = vsel %vm2490, %v2753, 0.0
    %v2818 = vsel %vm2491, %v2754, 0.0
    %v2819 = vsel %vm2492, %v2755, 0.0
    %v2820 = vsel %vm2493, %v2756, 0.0
    %v2821 = vsel %vm2494, %v2757, 0.0
    %v2822 = vsel %vm2495, %v2758, 0.0
    %v2823 = vsel %vm2496, %v2759, 0.0
    %v2824 = vsel %vm2497, %v2760, 0.0
    %v2825 = vsel %vm2498, %v2761, 0.0
    %v2826 = vsel %vm2499, %v2762, 0.0
    %v2827 = vsel %vm2500, %v2763, 0.0
    %v2828 = vsel %vm2501, %v2764, 0.0
    %v2829 = vsel %vm2502, %v2765, 0.0
    %v2830 = vsel %vm2503, %v2766, 0.0
    %v2831 = vsel %vm2504, %v2767, 0.0
    %v2832 = vsel %vm2505, %v2768, 0.0
    %v2833 = vsel %vm2506, %v2769, 0.0
    %v2834 = vsel %vm2507, %v2770, 0.0
    %v2835 = vsel %vm2508, %v2771, 0.0
    %v2836 = vmul.f32 %v2772, %v2772
    %v2837 = vmul.f32 %v2773, %v2773
    %v2838 = vmul.f32 %v2774, %v2774
    %v2839 = vmul.f32 %v2775, %v2775
    %v2840 = vmul.f32 %v2776, %v2776
    %v2841 = vmul.f32 %v2777, %v2777
    %v2842 = vmul.f32 %v2778, %v2778
    %v2843 = vmul.f32 %v2779, %v2779
    %v2844 = vmul.f32 %v2780, %v2780
    %v2845 = vmul.f32 %v2781, %v2781
    %v2846 = vmul.f32 %v2782, %v2782
    %v2847 = vmul.f32 %v2783, %v2783
    %v2848 = vmul.f32 %v2784, %v2784
    %v2849 = vmul.f32 %v2785, %v2785
    %v2850 = vmul.f32 %v2786, %v2786
    %v2851 = vmul.f32 %v2787, %v2787
    %v2852 = vmul.f32 %v2788, %v2788
    %v2853 = vmul.f32 %v2789, %v2789
    %v2854 = vmul.f32 %v2790, %v2790
    %v2855 = vmul.f32 %v2791, %v2791
    %v2856 = vmul.f32 %v2792, %v2792
    %v2857 = vmul.f32 %v2793, %v2793
    %v2858 = vmul.f32 %v2794, %v2794
    %v2859 = vmul.f32 %v2795, %v2795
    %v2860 = vmul.f32 %v2796, %v2796
    %v2861 = vmul.f32 %v2797, %v2797
    %v2862 = vmul.f32 %v2798, %v2798
    %v2863 = vmul.f32 %v2799, %v2799
    %v2864 = vmul.f32 %v2800, %v2800
    %v2865 = vmul.f32 %v2801, %v2801
    %v2866 = vmul.f32 %v2802, %v2802
    %v2867 = vmul.f32 %v2803, %v2803
    %v2868 = vmul.f32 %v2804, %v2804
    %v2869 = vmul.f32 %v2805, %v2805
    %v2870 = vmul.f32 %v2806, %v2806
    %v2871 = vmul.f32 %v2807, %v2807
    %v2872 = vmul.f32 %v2808, %v2808
    %v2873 = vmul.f32 %v2809, %v2809
    %v2874 = vmul.f32 %v2810, %v2810
    %v2875 = vmul.f32 %v2811, %v2811
    %v2876 = vmul.f32 %v2812, %v2812
    %v2877 = vmul.f32 %v2813, %v2813
    %v2878 = vmul.f32 %v2814, %v2814
    %v2879 = vmul.f32 %v2815, %v2815
    %v2880 = vmul.f32 %v2816, %v2816
    %v2881 = vmul.f32 %v2817, %v2817
    %v2882 = vmul.f32 %v2818, %v2818
    %v2883 = vmul.f32 %v2819, %v2819
    %v2884 = vmul.f32 %v2820, %v2820
    %v2885 = vmul.f32 %v2821, %v2821
    %v2886 = vmul.f32 %v2822, %v2822
    %v2887 = vmul.f32 %v2823, %v2823
    %v2888 = vmul.f32 %v2824, %v2824
    %v2889 = vmul.f32 %v2825, %v2825
    %v2890 = vmul.f32 %v2826, %v2826
    %v2891 = vmul.f32 %v2827, %v2827
    %v2892 = vmul.f32 %v2828, %v2828
    %v2893 = vmul.f32 %v2829, %v2829
    %v2894 = vmul.f32 %v2830, %v2830
    %v2895 = vmul.f32 %v2831, %v2831
    %v2896 = vmul.f32 %v2832, %v2832
    %v2897 = vmul.f32 %v2833, %v2833
    %v2898 = vmul.f32 %v2834, %v2834
    %v2899 = vmul.f32 %v2835, %v2835
    %v2900 = vsel %vm2573, %v2836, 0.0
    %v2901 = vsel %vm2573, %v2837, 0.0
    %v2902 = vadd.f32 %v2900, %v2901
    %v2903 = vsel %vm2573, %v2838, 0.0
    %v2904 = vadd.f32 %v2902, %v2903
    %v2905 = vsel %vm2573, %v2839, 0.0
    %v2906 = vadd.f32 %v2904, %v2905
    %v2907 = vsel %vm2573, %v2840, 0.0
    %v2908 = vadd.f32 %v2906, %v2907
    %v2909 = vsel %vm2573, %v2841, 0.0
    %v2910 = vadd.f32 %v2908, %v2909
    %v2911 = vsel %vm2573, %v2842, 0.0
    %v2912 = vadd.f32 %v2910, %v2911
    %v2913 = vsel %vm2573, %v2843, 0.0
    %v2914 = vadd.f32 %v2912, %v2913
    %v2915 = vsel %vm2573, %v2844, 0.0
    %v2916 = vadd.f32 %v2914, %v2915
    %v2917 = vsel %vm2573, %v2845, 0.0
    %v2918 = vadd.f32 %v2916, %v2917
    %v2919 = vsel %vm2573, %v2846, 0.0
    %v2920 = vadd.f32 %v2918, %v2919
    %v2921 = vsel %vm2573, %v2847, 0.0
    %v2922 = vadd.f32 %v2920, %v2921
    %v2923 = vsel %vm2573, %v2848, 0.0
    %v2924 = vadd.f32 %v2922, %v2923
    %v2925 = vsel %vm2573, %v2849, 0.0
    %v2926 = vadd.f32 %v2924, %v2925
    %v2927 = vsel %vm2573, %v2850, 0.0
    %v2928 = vadd.f32 %v2926, %v2927
    %v2929 = vsel %vm2573, %v2851, 0.0
    %v2930 = vadd.f32 %v2928, %v2929
    %v2931 = vsel %vm2573, %v2852, 0.0
    %v2932 = vadd.f32 %v2930, %v2931
    %v2933 = vsel %vm2573, %v2853, 0.0
    %v2934 = vadd.f32 %v2932, %v2933
    %v2935 = vsel %vm2573, %v2854, 0.0
    %v2936 = vadd.f32 %v2934, %v2935
    %v2937 = vsel %vm2573, %v2855, 0.0
    %v2938 = vadd.f32 %v2936, %v2937
    %v2939 = vsel %vm2573, %v2856, 0.0
    %v2940 = vadd.f32 %v2938, %v2939
    %v2941 = vsel %vm2573, %v2857, 0.0
    %v2942 = vadd.f32 %v2940, %v2941
    %v2943 = vsel %vm2573, %v2858, 0.0
    %v2944 = vadd.f32 %v2942, %v2943
    %v2945 = vsel %vm2573, %v2859, 0.0
    %v2946 = vadd.f32 %v2944, %v2945
    %v2947 = vsel %vm2573, %v2860, 0.0
    %v2948 = vadd.f32 %v2946, %v2947
    %v2949 = vsel %vm2573, %v2861, 0.0
    %v2950 = vadd.f32 %v2948, %v2949
    %v2951 = vsel %vm2573, %v2862, 0.0
    %v2952 = vadd.f32 %v2950, %v2951
    %v2953 = vsel %vm2573, %v2863, 0.0
    %v2954 = vadd.f32 %v2952, %v2953
    %v2955 = vsel %vm2573, %v2864, 0.0
    %v2956 = vadd.f32 %v2954, %v2955
    %v2957 = vsel %vm2573, %v2865, 0.0
    %v2958 = vadd.f32 %v2956, %v2957
    %v2959 = vsel %vm2573, %v2866, 0.0
    %v2960 = vadd.f32 %v2958, %v2959
    %v2961 = vsel %vm2573, %v2867, 0.0
    %v2962 = vadd.f32 %v2960, %v2961
    %v2963 = vsel %vm2573, %v2868, 0.0
    %v2964 = vadd.f32 %v2962, %v2963
    %v2965 = vsel %vm2573, %v2869, 0.0
    %v2966 = vadd.f32 %v2964, %v2965
    %v2967 = vsel %vm2573, %v2870, 0.0
    %v2968 = vadd.f32 %v2966, %v2967
    %v2969 = vsel %vm2573, %v2871, 0.0
    %v2970 = vadd.f32 %v2968, %v2969
    %v2971 = vsel %vm2573, %v2872, 0.0
    %v2972 = vadd.f32 %v2970, %v2971
    %v2973 = vsel %vm2573, %v2873, 0.0
    %v2974 = vadd.f32 %v2972, %v2973
    %v2975 = vsel %vm2573, %v2874, 0.0
    %v2976 = vadd.f32 %v2974, %v2975
    %v2977 = vsel %vm2573, %v2875, 0.0
    %v2978 = vadd.f32 %v2976, %v2977
    %v2979 = vsel %vm2573, %v2876, 0.0
    %v2980 = vadd.f32 %v2978, %v2979
    %v2981 = vsel %vm2573, %v2877, 0.0
    %v2982 = vadd.f32 %v2980, %v2981
    %v2983 = vsel %vm2573, %v2878, 0.0
    %v2984 = vadd.f32 %v2982, %v2983
    %v2985 = vsel %vm2573, %v2879, 0.0
    %v2986 = vadd.f32 %v2984, %v2985
    %v2987 = vsel %vm2573, %v2880, 0.0
    %v2988 = vadd.f32 %v2986, %v2987
    %v2989 = vsel %vm2573, %v2881, 0.0
    %v2990 = vadd.f32 %v2988, %v2989
    %v2991 = vsel %vm2573, %v2882, 0.0
    %v2992 = vadd.f32 %v2990, %v2991
    %v2993 = vsel %vm2573, %v2883, 0.0
    %v2994 = vadd.f32 %v2992, %v2993
    %v2995 = vsel %vm2573, %v2884, 0.0
    %v2996 = vadd.f32 %v2994, %v2995
    %v2997 = vsel %vm2573, %v2885, 0.0
    %v2998 = vadd.f32 %v2996, %v2997
    %v2999 = vsel %vm2573, %v2886, 0.0
    %v3000 = vadd.f32 %v2998, %v2999
    %v3001 = vsel %vm2573, %v2887, 0.0
    %v3002 = vadd.f32 %v3000, %v3001
    %v3003 = vsel %vm2573, %v2888, 0.0
    %v3004 = vadd.f32 %v3002, %v3003
    %v3005 = vsel %vm2573, %v2889, 0.0
    %v3006 = vadd.f32 %v3004, %v3005
    %v3007 = vsel %vm2573, %v2890, 0.0
    %v3008 = vadd.f32 %v3006, %v3007
    %v3009 = vsel %vm2573, %v2891, 0.0
    %v3010 = vadd.f32 %v3008, %v3009
    %v3011 = vsel %vm2573, %v2892, 0.0
    %v3012 = vadd.f32 %v3010, %v3011
    %v3013 = vsel %vm2573, %v2893, 0.0
    %v3014 = vadd.f32 %v3012, %v3013
    %v3015 = vsel %vm2573, %v2894, 0.0
    %v3016 = vadd.f32 %v3014, %v3015
    %v3017 = vsel %vm2573, %v2895, 0.0
    %v3018 = vadd.f32 %v3016, %v3017
    %v3019 = vsel %vm2573, %v2896, 0.0
    %v3020 = vadd.f32 %v3018, %v3019
    %v3021 = vsel %vm2573, %v2897, 0.0
    %v3022 = vadd.f32 %v3020, %v3021
    %v3023 = vsel %vm2573, %v2898, 0.0
    %v3024 = vadd.f32 %v3022, %v3023
    %v3025 = vsel %vm2573, %v2899, 0.0
    %v3026 = vadd.f32 %v3024, %v3025
    %v3027 = vrot.slane %v3026, 4
    %v3028 = vadd.f32 %v3026, %v3027
    %v3029 = vrot.slane %v3028, 2
    %v3030 = vadd.f32 %v3028, %v3029
    %v3031 = vrot.slane %v3030, 1
    %v3032 = vadd.f32 %v3030, %v3031
    %v3033 = vmul.f32 %v3032, 0.0020833334
    %v3034 = vld [vmem:[%s7] sm:$0x1]
    %v3035 = vadd.f32 %v3033, 1e-05
    %v3036 = vrsqrt.pop %v3035
    %v3037 = vmul.f32 %v3034, %v3036
    %v3038 = vld [vmem:[%s8] sm:$0x1]
    %v3039 = vmul.f32 %v2707, %v3037
    %v3040 = vsub.f32 %v3038, %v3039
    %v3042 = vlaneseq
    %v3043 = vshrl.u32 %v3042, 7
    %v3044 = vsub.s32 0, %v3043
    %v3045 = vrot.slane %v3037, %v3044
    %v3047 = vmul.f32 %v2252, %v3045
    %v3048 = vmul.f32 %v2253, %v3045
    %v3049 = vmul.f32 %v2254, %v3045
    %v3050 = vmul.f32 %v2255, %v3045
    %v3051 = vmul.f32 %v2256, %v3045
    %v3052 = vmul.f32 %v2257, %v3045
    %v3053 = vmul.f32 %v2258, %v3045
    %v3054 = vmul.f32 %v2259, %v3045
    %v3055 = vmul.f32 %v2260, %v3045
    %v3056 = vmul.f32 %v2261, %v3045
    %v3057 = vmul.f32 %v2262, %v3045
    %v3058 = vmul.f32 %v2263, %v3045
    %v3059 = vmul.f32 %v2264, %v3045
    %v3060 = vmul.f32 %v2265, %v3045
    %v3061 = vmul.f32 %v2266, %v3045
    %v3062 = vmul.f32 %v2267, %v3045
    %v3063 = vmul.f32 %v2268, %v3045
    %v3064 = vmul.f32 %v2269, %v3045
    %v3065 = vmul.f32 %v2270, %v3045
    %v3066 = vmul.f32 %v2271, %v3045
    %v3067 = vmul.f32 %v2272, %v3045
    %v3068 = vmul.f32 %v2273, %v3045
    %v3069 = vmul.f32 %v2274, %v3045
    %v3070 = vmul.f32 %v2275, %v3045
    %v3071 = vmul.f32 %v2276, %v3045
    %v3072 = vmul.f32 %v2277, %v3045
    %v3073 = vmul.f32 %v2278, %v3045
    %v3074 = vmul.f32 %v2279, %v3045
    %v3075 = vmul.f32 %v2280, %v3045
    %v3076 = vmul.f32 %v2281, %v3045
    %v3077 = vmul.f32 %v2282, %v3045
    %v3078 = vmul.f32 %v2283, %v3045
    %v3079 = vmul.f32 %v2284, %v3045
    %v3080 = vmul.f32 %v2285, %v3045
    %v3081 = vmul.f32 %v2286, %v3045
    %v3082 = vmul.f32 %v2287, %v3045
    %v3083 = vmul.f32 %v2288, %v3045
    %v3084 = vmul.f32 %v2289, %v3045
    %v3085 = vmul.f32 %v2290, %v3045
    %v3086 = vmul.f32 %v2291, %v3045
    %v3087 = vmul.f32 %v2292, %v3045
    %v3088 = vmul.f32 %v2293, %v3045
    %v3089 = vmul.f32 %v2294, %v3045
    %v3090 = vmul.f32 %v2295, %v3045
    %v3091 = vmul.f32 %v2296, %v3045
    %v3092 = vmul.f32 %v2297, %v3045
    %v3093 = vmul.f32 %v2298, %v3045
    %v3094 = vmul.f32 %v2299, %v3045
    %v3095 = vmul.f32 %v2300, %v3045
    %v3096 = vmul.f32 %v2301, %v3045
    %v3097 = vmul.f32 %v2302, %v3045
    %v3098 = vmul.f32 %v2303, %v3045
    %v3099 = vmul.f32 %v2304, %v3045
    %v3100 = vmul.f32 %v2305, %v3045
    %v3101 = vmul.f32 %v2306, %v3045
    %v3102 = vmul.f32 %v2307, %v3045
    %v3103 = vmul.f32 %v2308, %v3045
    %v3104 = vmul.f32 %v2309, %v3045
    %v3105 = vmul.f32 %v2310, %v3045
    %v3106 = vmul.f32 %v2311, %v3045
    %v3107 = vmul.f32 %v2312, %v3045
    %v3108 = vmul.f32 %v2313, %v3045
    %v3109 = vmul.f32 %v2314, %v3045
    %v3110 = vmul.f32 %v2315, %v3045
    %v3112 = vlaneseq
    %v3113 = vshrl.u32 %v3112, 7
    %v3114 = vsub.s32 0, %v3113
    %v3115 = vrot.slane %v3040, %v3114
    %v3117 = vadd.f32 %v3047, %v3115
    %v3118 = vadd.f32 %v3048, %v3115
    %v3119 = vadd.f32 %v3049, %v3115
    %v3120 = vadd.f32 %v3050, %v3115
    %v3121 = vadd.f32 %v3051, %v3115
    %v3122 = vadd.f32 %v3052, %v3115
    %v3123 = vadd.f32 %v3053, %v3115
    %v3124 = vadd.f32 %v3054, %v3115
    %v3125 = vadd.f32 %v3055, %v3115
    %v3126 = vadd.f32 %v3056, %v3115
    %v3127 = vadd.f32 %v3057, %v3115
    %v3128 = vadd.f32 %v3058, %v3115
    %v3129 = vadd.f32 %v3059, %v3115
    %v3130 = vadd.f32 %v3060, %v3115
    %v3131 = vadd.f32 %v3061, %v3115
    %v3132 = vadd.f32 %v3062, %v3115
    %v3133 = vadd.f32 %v3063, %v3115
    %v3134 = vadd.f32 %v3064, %v3115
    %v3135 = vadd.f32 %v3065, %v3115
    %v3136 = vadd.f32 %v3066, %v3115
    %v3137 = vadd.f32 %v3067, %v3115
    %v3138 = vadd.f32 %v3068, %v3115
    %v3139 = vadd.f32 %v3069, %v3115
    %v3140 = vadd.f32 %v3070, %v3115
    %v3141 = vadd.f32 %v3071, %v3115
    %v3142 = vadd.f32 %v3072, %v3115
    %v3143 = vadd.f32 %v3073, %v3115
    %v3144 = vadd.f32 %v3074, %v3115
    %v3145 = vadd.f32 %v3075, %v3115
    %v3146 = vadd.f32 %v3076, %v3115
    %v3147 = vadd.f32 %v3077, %v3115
    %v3148 = vadd.f32 %v3078, %v3115
    %v3149 = vadd.f32 %v3079, %v3115
    %v3150 = vadd.f32 %v3080, %v3115
    %v3151 = vadd.f32 %v3081, %v3115
    %v3152 = vadd.f32 %v3082, %v3115
    %v3153 = vadd.f32 %v3083, %v3115
    %v3154 = vadd.f32 %v3084, %v3115
    %v3155 = vadd.f32 %v3085, %v3115
    %v3156 = vadd.f32 %v3086, %v3115
    %v3157 = vadd.f32 %v3087, %v3115
    %v3158 = vadd.f32 %v3088, %v3115
    %v3159 = vadd.f32 %v3089, %v3115
    %v3160 = vadd.f32 %v3090, %v3115
    %v3161 = vadd.f32 %v3091, %v3115
    %v3162 = vadd.f32 %v3092, %v3115
    %v3163 = vadd.f32 %v3093, %v3115
    %v3164 = vadd.f32 %v3094, %v3115
    %v3165 = vadd.f32 %v3095, %v3115
    %v3166 = vadd.f32 %v3096, %v3115
    %v3167 = vadd.f32 %v3097, %v3115
    %v3168 = vadd.f32 %v3098, %v3115
    %v3169 = vadd.f32 %v3099, %v3115
    %v3170 = vadd.f32 %v3100, %v3115
    %v3171 = vadd.f32 %v3101, %v3115
    %v3172 = vadd.f32 %v3102, %v3115
    %v3173 = vadd.f32 %v3103, %v3115
    %v3174 = vadd.f32 %v3104, %v3115
    %v3175 = vadd.f32 %v3105, %v3115
    %v3176 = vadd.f32 %v3106, %v3115
    %v3177 = vadd.f32 %v3107, %v3115
    %v3178 = vadd.f32 %v3108, %v3115
    %v3179 = vadd.f32 %v3109, %v3115
    %v3180 = vadd.f32 %v3110, %v3115
    %v3181 = vmax.f32 %v3117, 0.0
    %v3182 = vmax.f32 %v3118, 0.0
    %v3183 = vmax.f32 %v3119, 0.0
    %v3184 = vmax.f32 %v3120, 0.0
    %v3185 = vmax.f32 %v3121, 0.0
    %v3186 = vmax.f32 %v3122, 0.0
    %v3187 = vmax.f32 %v3123, 0.0
    %v3188 = vmax.f32 %v3124, 0.0
    %v3189 = vmax.f32 %v3125, 0.0
    %v3190 = vmax.f32 %v3126, 0.0
    %v3191 = vmax.f32 %v3127, 0.0
    %v3192 = vmax.f32 %v3128, 0.0
    %v3193 = vmax.f32 %v3129, 0.0
    %v3194 = vmax.f32 %v3130, 0.0
    %v3195 = vmax.f32 %v3131, 0.0
    %v3196 = vmax.f32 %v3132, 0.0
    %v3197 = vmax.f32 %v3133, 0.0
    %v3198 = vmax.f32 %v3134, 0.0
    %v3199 = vmax.f32 %v3135, 0.0
    %v3200 = vmax.f32 %v3136, 0.0
    %v3201 = vmax.f32 %v3137, 0.0
    %v3202 = vmax.f32 %v3138, 0.0
    %v3203 = vmax.f32 %v3139, 0.0
    %v3204 = vmax.f32 %v3140, 0.0
    %v3205 = vmax.f32 %v3141, 0.0
    %v3206 = vmax.f32 %v3142, 0.0
    %v3207 = vmax.f32 %v3143, 0.0
    %v3208 = vmax.f32 %v3144, 0.0
    %v3209 = vmax.f32 %v3145, 0.0
    %v3210 = vmax.f32 %v3146, 0.0
    %v3211 = vmax.f32 %v3147, 0.0
    %v3212 = vmax.f32 %v3148, 0.0
    %v3213 = vmax.f32 %v3149, 0.0
    %v3214 = vmax.f32 %v3150, 0.0
    %v3215 = vmax.f32 %v3151, 0.0
    %v3216 = vmax.f32 %v3152, 0.0
    %v3217 = vmax.f32 %v3153, 0.0
    %v3218 = vmax.f32 %v3154, 0.0
    %v3219 = vmax.f32 %v3155, 0.0
    %v3220 = vmax.f32 %v3156, 0.0
    %v3221 = vmax.f32 %v3157, 0.0
    %v3222 = vmax.f32 %v3158, 0.0
    %v3223 = vmax.f32 %v3159, 0.0
    %v3224 = vmax.f32 %v3160, 0.0
    %v3225 = vmax.f32 %v3161, 0.0
    %v3226 = vmax.f32 %v3162, 0.0
    %v3227 = vmax.f32 %v3163, 0.0
    %v3228 = vmax.f32 %v3164, 0.0
    %v3229 = vmax.f32 %v3165, 0.0
    %v3230 = vmax.f32 %v3166, 0.0
    %v3231 = vmax.f32 %v3167, 0.0
    %v3232 = vmax.f32 %v3168, 0.0
    %v3233 = vmax.f32 %v3169, 0.0
    %v3234 = vmax.f32 %v3170, 0.0
    %v3235 = vmax.f32 %v3171, 0.0
    %v3236 = vmax.f32 %v3172, 0.0
    %v3237 = vmax.f32 %v3173, 0.0
    %v3238 = vmax.f32 %v3174, 0.0
    %v3239 = vmax.f32 %v3175, 0.0
    %v3240 = vmax.f32 %v3176, 0.0
    %v3241 = vmax.f32 %v3177, 0.0
    %v3242 = vmax.f32 %v3178, 0.0
    %v3243 = vmax.f32 %v3179, 0.0
    %v3244 = vmax.f32 %v3180, 0.0
    %v3245 = vsel %vm2445, %v3181, 0.0
    %v3246 = vsel %vm2446, %v3182, 0.0
    %v3247 = vsel %vm2447, %v3183, 0.0
    %v3248 = vsel %vm2448, %v3184, 0.0
    %v3249 = vsel %vm2449, %v3185, 0.0
    %v3250 = vsel %vm2450, %v3186, 0.0
    %v3251 = vsel %vm2451, %v3187, 0.0
    %v3252 = vsel %vm2452, %v3188, 0.0
    %v3253 = vsel %vm2453, %v3189, 0.0
    %v3254 = vsel %vm2454, %v3190, 0.0
    %v3255 = vsel %vm2455, %v3191, 0.0
    %v3256 = vsel %vm2456, %v3192, 0.0
    %v3257 = vsel %vm2457, %v3193, 0.0
    %v3258 = vsel %vm2458, %v3194, 0.0
    %v3259 = vsel %vm2459, %v3195, 0.0
    %v3260 = vsel %vm2460, %v3196, 0.0
    %v3261 = vsel %vm2461, %v3197, 0.0
    %v3262 = vsel %vm2462, %v3198, 0.0
    %v3263 = vsel %vm2463, %v3199, 0.0
    %v3264 = vsel %vm2464, %v3200, 0.0
    %v3265 = vsel %vm2465, %v3201, 0.0
    %v3266 = vsel %vm2466, %v3202, 0.0
    %v3267 = vsel %vm2467, %v3203, 0.0
    %v3268 = vsel %vm2468, %v3204, 0.0
    %v3269 = vsel %vm2469, %v3205, 0.0
    %v3270 = vsel %vm2470, %v3206, 0.0
    %v3271 = vsel %vm2471, %v3207, 0.0
    %v3272 = vsel %vm2472, %v3208, 0.0
    %v3273 = vsel %vm2473, %v3209, 0.0
    %v3274 = vsel %vm2474, %v3210, 0.0
    %v3275 = vsel %vm2475, %v3211, 0.0
    %v3276 = vsel %vm2476, %v3212, 0.0
    %v3277 = vsel %vm2477, %v3213, 0.0
    %v3278 = vsel %vm2478, %v3214, 0.0
    %v3279 = vsel %vm2479, %v3215, 0.0
    %v3280 = vsel %vm2480, %v3216, 0.0
    %v3281 = vsel %vm2481, %v3217, 0.0
    %v3282 = vsel %vm2482, %v3218, 0.0
    %v3283 = vsel %vm2483, %v3219, 0.0
    %v3284 = vsel %vm2484, %v3220, 0.0
    %v3285 = vsel %vm2485, %v3221, 0.0
    %v3286 = vsel %vm2486, %v3222, 0.0
    %v3287 = vsel %vm2487, %v3223, 0.0
    %v3288 = vsel %vm2488, %v3224, 0.0
    %v3289 = vsel %vm2489, %v3225, 0.0
    %v3290 = vsel %vm2490, %v3226, 0.0
    %v3291 = vsel %vm2491, %v3227, 0.0
    %v3292 = vsel %vm2492, %v3228, 0.0
    %v3293 = vsel %vm2493, %v3229, 0.0
    %v3294 = vsel %vm2494, %v3230, 0.0
    %v3295 = vsel %vm2495, %v3231, 0.0
    %v3296 = vsel %vm2496, %v3232, 0.0
    %v3297 = vsel %vm2497, %v3233, 0.0
    %v3298 = vsel %vm2498, %v3234, 0.0
    %v3299 = vsel %vm2499, %v3235, 0.0
    %v3300 = vsel %vm2500, %v3236, 0.0
    %v3301 = vsel %vm2501, %v3237, 0.0
    %v3302 = vsel %vm2502, %v3238, 0.0
    %v3303 = vsel %vm2503, %v3239, 0.0
    %v3304 = vsel %vm2504, %v3240, 0.0
    %v3305 = vsel %vm2505, %v3241, 0.0
    %v3306 = vsel %vm2506, %v3242, 0.0
    %v3307 = vsel %vm2507, %v3243, 0.0
    %v3308 = vsel %vm2508, %v3244, 0.0
    %3309 = vst.msk [vmem:[#allocation2] sm:$0xff] %vm2573, 0.0
    %3310 = vst.msk [vmem:[#allocation2 + $0x8] sm:$0xff] %vm2573, %v3245
    %3311 = vst.msk [vmem:[#allocation2 + $0x10] sm:$0xff] %vm2573, %v3246
    %3312 = vst.msk [vmem:[#allocation2 + $0x18] sm:$0xff] %vm2573, %v3247
    %3313 = vst.msk [vmem:[#allocation2 + $0x20] sm:$0xff] %vm2573, %v3248
    %3314 = vst.msk [vmem:[#allocation2 + $0x28] sm:$0xff] %vm2573, %v3249
    %3315 = vst.msk [vmem:[#allocation2 + $0x30] sm:$0xff] %vm2573, %v3250
    %3316 = vst.msk [vmem:[#allocation2 + $0x38] sm:$0xff] %vm2573, %v3251
    %3317 = vst.msk [vmem:[#allocation2 + $0x40] sm:$0xff] %vm2573, %v3252
    %3318 = vst.msk [vmem:[#allocation2 + $0x48] sm:$0xff] %vm2573, %v3253
    %3319 = vst.msk [vmem:[#allocation2 + $0x50] sm:$0xff] %vm2573, %v3254
    %3320 = vst.msk [vmem:[#allocation2 + $0x58] sm:$0xff] %vm2573, %v3255
    %3321 = vst.msk [vmem:[#allocation2 + $0x60] sm:$0xff] %vm2573, %v3256
    %3322 = vst.msk [vmem:[#allocation2 + $0x68] sm:$0xff] %vm2573, %v3257
    %3323 = vst.msk [vmem:[#allocation2 + $0x70] sm:$0xff] %vm2573, %v3258
    %3324 = vst.msk [vmem:[#allocation2 + $0x78] sm:$0xff] %vm2573, %v3259
    %3325 = vst.msk [vmem:[#allocation2 + $0x80] sm:$0xff] %vm2573, %v3260
    %3326 = vst.msk [vmem:[#allocation2 + $0x88] sm:$0xff] %vm2573, %v3261
    %3327 = vst.msk [vmem:[#allocation2 + $0x90] sm:$0xff] %vm2573, %v3262
    %3328 = vst.msk [vmem:[#allocation2 + $0x98] sm:$0xff] %vm2573, %v3263
    %3329 = vst.msk [vmem:[#allocation2 + $0xa0] sm:$0xff] %vm2573, %v3264
    %3330 = vst.msk [vmem:[#allocation2 + $0xa8] sm:$0xff] %vm2573, %v3265
    %3331 = vst.msk [vmem:[#allocation2 + $0xb0] sm:$0xff] %vm2573, %v3266
    %3332 = vst.msk [vmem:[#allocation2 + $0xb8] sm:$0xff] %vm2573, %v3267
    %3333 = vst.msk [vmem:[#allocation2 + $0xc0] sm:$0xff] %vm2573, %v3268
    %3334 = vst.msk [vmem:[#allocation2 + $0xc8] sm:$0xff] %vm2573, %v3269
    %3335 = vst.msk [vmem:[#allocation2 + $0xd0] sm:$0xff] %vm2573, %v3270
    %3336 = vst.msk [vmem:[#allocation2 + $0xd8] sm:$0xff] %vm2573, %v3271
    %3337 = vst.msk [vmem:[#allocation2 + $0xe0] sm:$0xff] %vm2573, %v3272
    %3338 = vst.msk [vmem:[#allocation2 + $0xe8] sm:$0xff] %vm2573, %v3273
    %3339 = vst.msk [vmem:[#allocation2 + $0xf0] sm:$0xff] %vm2573, %v3274
    %3340 = vst.msk [vmem:[#allocation2 + $0xf8] sm:$0xff] %vm2573, %v3275
    %3341 = vst.msk [vmem:[#allocation2 + $0x100] sm:$0xff] %vm2573, %v3276
    %3342 = vst.msk [vmem:[#allocation2 + $0x108] sm:$0xff] %vm2573, %v3277
    %3343 = vst.msk [vmem:[#allocation2 + $0x110] sm:$0xff] %vm2573, %v3278
    %3344 = vst.msk [vmem:[#allocation2 + $0x118] sm:$0xff] %vm2573, %v3279
    %3345 = vst.msk [vmem:[#allocation2 + $0x120] sm:$0xff] %vm2573, %v3280
    %3346 = vst.msk [vmem:[#allocation2 + $0x128] sm:$0xff] %vm2573, %v3281
    %3347 = vst.msk [vmem:[#allocation2 + $0x130] sm:$0xff] %vm2573, %v3282
    %3348 = vst.msk [vmem:[#allocation2 + $0x138] sm:$0xff] %vm2573, %v3283
    %3349 = vst.msk [vmem:[#allocation2 + $0x140] sm:$0xff] %vm2573, %v3284
    %3350 = vst.msk [vmem:[#allocation2 + $0x148] sm:$0xff] %vm2573, %v3285
    %3351 = vst.msk [vmem:[#allocation2 + $0x150] sm:$0xff] %vm2573, %v3286
    %3352 = vst.msk [vmem:[#allocation2 + $0x158] sm:$0xff] %vm2573, %v3287
    %3353 = vst.msk [vmem:[#allocation2 + $0x160] sm:$0xff] %vm2573, %v3288
    %3354 = vst.msk [vmem:[#allocation2 + $0x168] sm:$0xff] %vm2573, %v3289
    %3355 = vst.msk [vmem:[#allocation2 + $0x170] sm:$0xff] %vm2573, %v3290
    %3356 = vst.msk [vmem:[#allocation2 + $0x178] sm:$0xff] %vm2573, %v3291
    %3357 = vst.msk [vmem:[#allocation2 + $0x180] sm:$0xff] %vm2573, %v3292
    %3358 = vst.msk [vmem:[#allocation2 + $0x188] sm:$0xff] %vm2573, %v3293
    %3359 = vst.msk [vmem:[#allocation2 + $0x190] sm:$0xff] %vm2573, %v3294
    %3360 = vst.msk [vmem:[#allocation2 + $0x198] sm:$0xff] %vm2573, %v3295
    %3361 = vst.msk [vmem:[#allocation2 + $0x1a0] sm:$0xff] %vm2573, %v3296
    %3362 = vst.msk [vmem:[#allocation2 + $0x1a8] sm:$0xff] %vm2573, %v3297
    %3363 = vst.msk [vmem:[#allocation2 + $0x1b0] sm:$0xff] %vm2573, %v3298
    %3364 = vst.msk [vmem:[#allocation2 + $0x1b8] sm:$0xff] %vm2573, %v3299
    %3365 = vst.msk [vmem:[#allocation2 + $0x1c0] sm:$0xff] %vm2573, %v3300
    %3366 = vst.msk [vmem:[#allocation2 + $0x1c8] sm:$0xff] %vm2573, %v3301
    %3367 = vst.msk [vmem:[#allocation2 + $0x1d0] sm:$0xff] %vm2573, %v3302
    %3368 = vst.msk [vmem:[#allocation2 + $0x1d8] sm:$0xff] %vm2573, %v3303
    %3369 = vst.msk [vmem:[#allocation2 + $0x1e0] sm:$0xff] %vm2573, %v3304
    %3370 = vst.msk [vmem:[#allocation2 + $0x1e8] sm:$0xff] %vm2573, %v3305
    %3371 = vst.msk [vmem:[#allocation2 + $0x1f0] sm:$0xff] %vm2573, %v3306
    %3372 = vst.msk [vmem:[#allocation2 + $0x1f8] sm:$0xff] %vm2573, %v3307
    %3373 = vst.msk [vmem:[#allocation2 + $0x200] sm:$0xff] %vm2573, %v3308
    %3374 = vst.msk [vmem:[#allocation2 + $0x208] sm:$0xff] %vm2573, 0.0
    %s3375 = scalar_lea.vmem [#allocation2], 6
    %v3376 = vld [vmem:[%s3375] ss:$2 sm:$0xff]
    %s3377 = scalar_lea.vmem [#allocation2], 22
    %v3378 = vld [vmem:[%s3377] ss:$2 sm:$0xff]
    %s3379 = scalar_lea.vmem [#allocation2], 38
    %v3380 = vld [vmem:[%s3379] ss:$2 sm:$0xff]
    %s3381 = scalar_lea.vmem [#allocation2], 54
    %v3382 = vld [vmem:[%s3381] ss:$2 sm:$0xff]
    %s3383 = scalar_lea.vmem [#allocation2], 70
    %v3384 = vld [vmem:[%s3383] ss:$2 sm:$0xff]
    %s3385 = scalar_lea.vmem [#allocation2], 86
    %v3386 = vld [vmem:[%s3385] ss:$2 sm:$0xff]
    %s3387 = scalar_lea.vmem [#allocation2], 102
    %v3388 = vld [vmem:[%s3387] ss:$2 sm:$0xff]
    %s3389 = scalar_lea.vmem [#allocation2], 118
    %v3390 = vld [vmem:[%s3389] ss:$2 sm:$0xff]
    %s3391 = scalar_lea.vmem [#allocation2], 134
    %v3392 = vld [vmem:[%s3391] ss:$2 sm:$0xff]
    %s3393 = scalar_lea.vmem [#allocation2], 150
    %v3394 = vld [vmem:[%s3393] ss:$2 sm:$0xff]
    %s3395 = scalar_lea.vmem [#allocation2], 166
    %v3396 = vld [vmem:[%s3395] ss:$2 sm:$0xff]
    %s3397 = scalar_lea.vmem [#allocation2], 182
    %v3398 = vld [vmem:[%s3397] ss:$2 sm:$0xff]
    %s3399 = scalar_lea.vmem [#allocation2], 198
    %v3400 = vld [vmem:[%s3399] ss:$2 sm:$0xff]
    %s3401 = scalar_lea.vmem [#allocation2], 214
    %v3402 = vld [vmem:[%s3401] ss:$2 sm:$0xff]
    %s3403 = scalar_lea.vmem [#allocation2], 230
    %v3404 = vld [vmem:[%s3403] ss:$2 sm:$0xff]
    %s3405 = scalar_lea.vmem [#allocation2], 246
    %v3406 = vld [vmem:[%s3405] ss:$2 sm:$0xff]
    %s3407 = scalar_lea.vmem [#allocation2], 262
    %v3408 = vld [vmem:[%s3407] ss:$2 sm:$0xff]
    %s3409 = scalar_lea.vmem [#allocation2], 278
    %v3410 = vld [vmem:[%s3409] ss:$2 sm:$0xff]
    %s3411 = scalar_lea.vmem [#allocation2], 294
    %v3412 = vld [vmem:[%s3411] ss:$2 sm:$0xff]
    %s3413 = scalar_lea.vmem [#allocation2], 310
    %v3414 = vld [vmem:[%s3413] ss:$2 sm:$0xff]
    %s3415 = scalar_lea.vmem [#allocation2], 326
    %v3416 = vld [vmem:[%s3415] ss:$2 sm:$0xff]
    %s3417 = scalar_lea.vmem [#allocation2], 342
    %v3418 = vld [vmem:[%s3417] ss:$2 sm:$0xff]
    %s3419 = scalar_lea.vmem [#allocation2], 358
    %v3420 = vld [vmem:[%s3419] ss:$2 sm:$0xff]
    %s3421 = scalar_lea.vmem [#allocation2], 374
    %v3422 = vld [vmem:[%s3421] ss:$2 sm:$0xff]
    %s3423 = scalar_lea.vmem [#allocation2], 390
    %v3424 = vld [vmem:[%s3423] ss:$2 sm:$0xff]
    %s3425 = scalar_lea.vmem [#allocation2], 406
    %v3426 = vld [vmem:[%s3425] ss:$2 sm:$0xff]
    %s3427 = scalar_lea.vmem [#allocation2], 422
    %v3428 = vld [vmem:[%s3427] ss:$2 sm:$0xff]
    %s3429 = scalar_lea.vmem [#allocation2], 438
    %v3430 = vld [vmem:[%s3429] ss:$2 sm:$0xff]
    %s3431 = scalar_lea.vmem [#allocation2], 454
    %v3432 = vld [vmem:[%s3431] ss:$2 sm:$0xff]
    %s3433 = scalar_lea.vmem [#allocation2], 470
    %v3434 = vld [vmem:[%s3433] ss:$2 sm:$0xff]
    %s3435 = scalar_lea.vmem [#allocation2], 486
    %v3436 = vld [vmem:[%s3435] ss:$2 sm:$0xff]
    %s3437 = scalar_lea.vmem [#allocation2], 502
    %v3438 = vld [vmem:[%s3437] ss:$2 sm:$0xff]
    %s3439 = scalar_lea.vmem [#allocation2], 7
    %v3440 = vld [vmem:[%s3439] ss:$2 sm:$0xff]
    %s3441 = scalar_lea.vmem [#allocation2], 23
    %v3442 = vld [vmem:[%s3441] ss:$2 sm:$0xff]
    %s3443 = scalar_lea.vmem [#allocation2], 39
    %v3444 = vld [vmem:[%s3443] ss:$2 sm:$0xff]
    %s3445 = scalar_lea.vmem [#allocation2], 55
    %v3446 = vld [vmem:[%s3445] ss:$2 sm:$0xff]
    %s3447 = scalar_lea.vmem [#allocation2], 71
    %v3448 = vld [vmem:[%s3447] ss:$2 sm:$0xff]
    %s3449 = scalar_lea.vmem [#allocation2], 87
    %v3450 = vld [vmem:[%s3449] ss:$2 sm:$0xff]
    %s3451 = scalar_lea.vmem [#allocation2], 103
    %v3452 = vld [vmem:[%s3451] ss:$2 sm:$0xff]
    %s3453 = scalar_lea.vmem [#allocation2], 119
    %v3454 = vld [vmem:[%s3453] ss:$2 sm:$0xff]
    %s3455 = scalar_lea.vmem [#allocation2], 135
    %v3456 = vld [vmem:[%s3455] ss:$2 sm:$0xff]
    %s3457 = scalar_lea.vmem [#allocation2], 151
    %v3458 = vld [vmem:[%s3457] ss:$2 sm:$0xff]
    %s3459 = scalar_lea.vmem [#allocation2], 167
    %v3460 = vld [vmem:[%s3459] ss:$2 sm:$0xff]
    %s3461 = scalar_lea.vmem [#allocation2], 183
    %v3462 = vld [vmem:[%s3461] ss:$2 sm:$0xff]
    %s3463 = scalar_lea.vmem [#allocation2], 199
    %v3464 = vld [vmem:[%s3463] ss:$2 sm:$0xff]
    %s3465 = scalar_lea.vmem [#allocation2], 215
    %v3466 = vld [vmem:[%s3465] ss:$2 sm:$0xff]
    %s3467 = scalar_lea.vmem [#allocation2], 231
    %v3468 = vld [vmem:[%s3467] ss:$2 sm:$0xff]
    %s3469 = scalar_lea.vmem [#allocation2], 247
    %v3470 = vld [vmem:[%s3469] ss:$2 sm:$0xff]
    %s3471 = scalar_lea.vmem [#allocation2], 263
    %v3472 = vld [vmem:[%s3471] ss:$2 sm:$0xff]
    %s3473 = scalar_lea.vmem [#allocation2], 279
    %v3474 = vld [vmem:[%s3473] ss:$2 sm:$0xff]
    %s3475 = scalar_lea.vmem [#allocation2], 295
    %v3476 = vld [vmem:[%s3475] ss:$2 sm:$0xff]
    %s3477 = scalar_lea.vmem [#allocation2], 311
    %v3478 = vld [vmem:[%s3477] ss:$2 sm:$0xff]
    %s3479 = scalar_lea.vmem [#allocation2], 327
    %v3480 = vld [vmem:[%s3479] ss:$2 sm:$0xff]
    %s3481 = scalar_lea.vmem [#allocation2], 343
    %v3482 = vld [vmem:[%s3481] ss:$2 sm:$0xff]
    %s3483 = scalar_lea.vmem [#allocation2], 359
    %v3484 = vld [vmem:[%s3483] ss:$2 sm:$0xff]
    %s3485 = scalar_lea.vmem [#allocation2], 375
    %v3486 = vld [vmem:[%s3485] ss:$2 sm:$0xff]
    %s3487 = scalar_lea.vmem [#allocation2], 391
    %v3488 = vld [vmem:[%s3487] ss:$2 sm:$0xff]
    %s3489 = scalar_lea.vmem [#allocation2], 407
    %v3490 = vld [vmem:[%s3489] ss:$2 sm:$0xff]
    %s3491 = scalar_lea.vmem [#allocation2], 423
    %v3492 = vld [vmem:[%s3491] ss:$2 sm:$0xff]
    %s3493 = scalar_lea.vmem [#allocation2], 439
    %v3494 = vld [vmem:[%s3493] ss:$2 sm:$0xff]
    %s3495 = scalar_lea.vmem [#allocation2], 455
    %v3496 = vld [vmem:[%s3495] ss:$2 sm:$0xff]
    %s3497 = scalar_lea.vmem [#allocation2], 471
    %v3498 = vld [vmem:[%s3497] ss:$2 sm:$0xff]
    %s3499 = scalar_lea.vmem [#allocation2], 487
    %v3500 = vld [vmem:[%s3499] ss:$2 sm:$0xff]
    %s3501 = scalar_lea.vmem [#allocation2], 503
    %v3502 = vld [vmem:[%s3501] ss:$2 sm:$0xff]
    %s3503 = scalar_lea.vmem [#allocation2], 8
    %v3504 = vld [vmem:[%s3503] ss:$2 sm:$0xff]
    %s3505 = scalar_lea.vmem [#allocation2], 24
    %v3506 = vld [vmem:[%s3505] ss:$2 sm:$0xff]
    %s3507 = scalar_lea.vmem [#allocation2], 40
    %v3508 = vld [vmem:[%s3507] ss:$2 sm:$0xff]
    %s3509 = scalar_lea.vmem [#allocation2], 56
    %v3510 = vld [vmem:[%s3509] ss:$2 sm:$0xff]
    %s3511 = scalar_lea.vmem [#allocation2], 72
    %v3512 = vld [vmem:[%s3511] ss:$2 sm:$0xff]
    %s3513 = scalar_lea.vmem [#allocation2], 88
    %v3514 = vld [vmem:[%s3513] ss:$2 sm:$0xff]
    %s3515 = scalar_lea.vmem [#allocation2], 104
    %v3516 = vld [vmem:[%s3515] ss:$2 sm:$0xff]
    %s3517 = scalar_lea.vmem [#allocation2], 120
    %v3518 = vld [vmem:[%s3517] ss:$2 sm:$0xff]
    %s3519 = scalar_lea.vmem [#allocation2], 136
    %v3520 = vld [vmem:[%s3519] ss:$2 sm:$0xff]
    %s3521 = scalar_lea.vmem [#allocation2], 152
    %v3522 = vld [vmem:[%s3521] ss:$2 sm:$0xff]
    %s3523 = scalar_lea.vmem [#allocation2], 168
    %v3524 = vld [vmem:[%s3523] ss:$2 sm:$0xff]
    %s3525 = scalar_lea.vmem [#allocation2], 184
    %v3526 = vld [vmem:[%s3525] ss:$2 sm:$0xff]
    %s3527 = scalar_lea.vmem [#allocation2], 200
    %v3528 = vld [vmem:[%s3527] ss:$2 sm:$0xff]
    %s3529 = scalar_lea.vmem [#allocation2], 216
    %v3530 = vld [vmem:[%s3529] ss:$2 sm:$0xff]
    %s3531 = scalar_lea.vmem [#allocation2], 232
    %v3532 = vld [vmem:[%s3531] ss:$2 sm:$0xff]
    %s3533 = scalar_lea.vmem [#allocation2], 248
    %v3534 = vld [vmem:[%s3533] ss:$2 sm:$0xff]
    %s3535 = scalar_lea.vmem [#allocation2], 264
    %v3536 = vld [vmem:[%s3535] ss:$2 sm:$0xff]
    %s3537 = scalar_lea.vmem [#allocation2], 280
    %v3538 = vld [vmem:[%s3537] ss:$2 sm:$0xff]
    %s3539 = scalar_lea.vmem [#allocation2], 296
    %v3540 = vld [vmem:[%s3539] ss:$2 sm:$0xff]
    %s3541 = scalar_lea.vmem [#allocation2], 312
    %v3542 = vld [vmem:[%s3541] ss:$2 sm:$0xff]
    %s3543 = scalar_lea.vmem [#allocation2], 328
    %v3544 = vld [vmem:[%s3543] ss:$2 sm:$0xff]
    %s3545 = scalar_lea.vmem [#allocation2], 344
    %v3546 = vld [vmem:[%s3545] ss:$2 sm:$0xff]
    %s3547 = scalar_lea.vmem [#allocation2], 360
    %v3548 = vld [vmem:[%s3547] ss:$2 sm:$0xff]
    %s3549 = scalar_lea.vmem [#allocation2], 376
    %v3550 = vld [vmem:[%s3549] ss:$2 sm:$0xff]
    %s3551 = scalar_lea.vmem [#allocation2], 392
    %v3552 = vld [vmem:[%s3551] ss:$2 sm:$0xff]
    %s3553 = scalar_lea.vmem [#allocation2], 408
    %v3554 = vld [vmem:[%s3553] ss:$2 sm:$0xff]
    %s3555 = scalar_lea.vmem [#allocation2], 424
    %v3556 = vld [vmem:[%s3555] ss:$2 sm:$0xff]
    %s3557 = scalar_lea.vmem [#allocation2], 440
    %v3558 = vld [vmem:[%s3557] ss:$2 sm:$0xff]
    %s3559 = scalar_lea.vmem [#allocation2], 456
    %v3560 = vld [vmem:[%s3559] ss:$2 sm:$0xff]
    %s3561 = scalar_lea.vmem [#allocation2], 472
    %v3562 = vld [vmem:[%s3561] ss:$2 sm:$0xff]
    %s3563 = scalar_lea.vmem [#allocation2], 488
    %v3564 = vld [vmem:[%s3563] ss:$2 sm:$0xff]
    %s3565 = scalar_lea.vmem [#allocation2], 504
    %v3566 = vld [vmem:[%s3565] ss:$2 sm:$0xff]
    %s3567 = scalar_lea.vmem [#allocation2], 9
    %v3568 = vld [vmem:[%s3567] ss:$2 sm:$0xff]
    %s3569 = scalar_lea.vmem [#allocation2], 25
    %v3570 = vld [vmem:[%s3569] ss:$2 sm:$0xff]
    %s3571 = scalar_lea.vmem [#allocation2], 41
    %v3572 = vld [vmem:[%s3571] ss:$2 sm:$0xff]
    %s3573 = scalar_lea.vmem [#allocation2], 57
    %v3574 = vld [vmem:[%s3573] ss:$2 sm:$0xff]
    %s3575 = scalar_lea.vmem [#allocation2], 73
    %v3576 = vld [vmem:[%s3575] ss:$2 sm:$0xff]
    %s3577 = scalar_lea.vmem [#allocation2], 89
    %v3578 = vld [vmem:[%s3577] ss:$2 sm:$0xff]
    %s3579 = scalar_lea.vmem [#allocation2], 105
    %v3580 = vld [vmem:[%s3579] ss:$2 sm:$0xff]
    %s3581 = scalar_lea.vmem [#allocation2], 121
    %v3582 = vld [vmem:[%s3581] ss:$2 sm:$0xff]
    %s3583 = scalar_lea.vmem [#allocation2], 137
    %v3584 = vld [vmem:[%s3583] ss:$2 sm:$0xff]
    %s3585 = scalar_lea.vmem [#allocation2], 153
    %v3586 = vld [vmem:[%s3585] ss:$2 sm:$0xff]
    %s3587 = scalar_lea.vmem [#allocation2], 169
    %v3588 = vld [vmem:[%s3587] ss:$2 sm:$0xff]
    %s3589 = scalar_lea.vmem [#allocation2], 185
    %v3590 = vld [vmem:[%s3589] ss:$2 sm:$0xff]
    %s3591 = scalar_lea.vmem [#allocation2], 201
    %v3592 = vld [vmem:[%s3591] ss:$2 sm:$0xff]
    %s3593 = scalar_lea.vmem [#allocation2], 217
    %v3594 = vld [vmem:[%s3593] ss:$2 sm:$0xff]
    %s3595 = scalar_lea.vmem [#allocation2], 233
    %v3596 = vld [vmem:[%s3595] ss:$2 sm:$0xff]
    %s3597 = scalar_lea.vmem [#allocation2], 249
    %v3598 = vld [vmem:[%s3597] ss:$2 sm:$0xff]
    %s3599 = scalar_lea.vmem [#allocation2], 265
    %v3600 = vld [vmem:[%s3599] ss:$2 sm:$0xff]
    %s3601 = scalar_lea.vmem [#allocation2], 281
    %v3602 = vld [vmem:[%s3601] ss:$2 sm:$0xff]
    %s3603 = scalar_lea.vmem [#allocation2], 297
    %v3604 = vld [vmem:[%s3603] ss:$2 sm:$0xff]
    %s3605 = scalar_lea.vmem [#allocation2], 313
    %v3606 = vld [vmem:[%s3605] ss:$2 sm:$0xff]
    %s3607 = scalar_lea.vmem [#allocation2], 329
    %v3608 = vld [vmem:[%s3607] ss:$2 sm:$0xff]
    %s3609 = scalar_lea.vmem [#allocation2], 345
    %v3610 = vld [vmem:[%s3609] ss:$2 sm:$0xff]
    %s3611 = scalar_lea.vmem [#allocation2], 361
    %v3612 = vld [vmem:[%s3611] ss:$2 sm:$0xff]
    %s3613 = scalar_lea.vmem [#allocation2], 377
    %v3614 = vld [vmem:[%s3613] ss:$2 sm:$0xff]
    %s3615 = scalar_lea.vmem [#allocation2], 393
    %v3616 = vld [vmem:[%s3615] ss:$2 sm:$0xff]
    %s3617 = scalar_lea.vmem [#allocation2], 409
    %v3618 = vld [vmem:[%s3617] ss:$2 sm:$0xff]
    %s3619 = scalar_lea.vmem [#allocation2], 425
    %v3620 = vld [vmem:[%s3619] ss:$2 sm:$0xff]
    %s3621 = scalar_lea.vmem [#allocation2], 441
    %v3622 = vld [vmem:[%s3621] ss:$2 sm:$0xff]
    %s3623 = scalar_lea.vmem [#allocation2], 457
    %v3624 = vld [vmem:[%s3623] ss:$2 sm:$0xff]
    %s3625 = scalar_lea.vmem [#allocation2], 473
    %v3626 = vld [vmem:[%s3625] ss:$2 sm:$0xff]
    %s3627 = scalar_lea.vmem [#allocation2], 489
    %v3628 = vld [vmem:[%s3627] ss:$2 sm:$0xff]
    %s3629 = scalar_lea.vmem [#allocation2], 505
    %v3630 = vld [vmem:[%s3629] ss:$2 sm:$0xff]
    %s3631 = scalar_lea.vmem [#allocation2], 10
    %v3632 = vld [vmem:[%s3631] ss:$2 sm:$0xff]
    %s3633 = scalar_lea.vmem [#allocation2], 26
    %v3634 = vld [vmem:[%s3633] ss:$2 sm:$0xff]
    %s3635 = scalar_lea.vmem [#allocation2], 42
    %v3636 = vld [vmem:[%s3635] ss:$2 sm:$0xff]
    %s3637 = scalar_lea.vmem [#allocation2], 58
    %v3638 = vld [vmem:[%s3637] ss:$2 sm:$0xff]
    %s3639 = scalar_lea.vmem [#allocation2], 74
    %v3640 = vld [vmem:[%s3639] ss:$2 sm:$0xff]
    %s3641 = scalar_lea.vmem [#allocation2], 90
    %v3642 = vld [vmem:[%s3641] ss:$2 sm:$0xff]
    %s3643 = scalar_lea.vmem [#allocation2], 106
    %v3644 = vld [vmem:[%s3643] ss:$2 sm:$0xff]
    %s3645 = scalar_lea.vmem [#allocation2], 122
    %v3646 = vld [vmem:[%s3645] ss:$2 sm:$0xff]
    %s3647 = scalar_lea.vmem [#allocation2], 138
    %v3648 = vld [vmem:[%s3647] ss:$2 sm:$0xff]
    %s3649 = scalar_lea.vmem [#allocation2], 154
    %v3650 = vld [vmem:[%s3649] ss:$2 sm:$0xff]
    %s3651 = scalar_lea.vmem [#allocation2], 170
    %v3652 = vld [vmem:[%s3651] ss:$2 sm:$0xff]
    %s3653 = scalar_lea.vmem [#allocation2], 186
    %v3654 = vld [vmem:[%s3653] ss:$2 sm:$0xff]
    %s3655 = scalar_lea.vmem [#allocation2], 202
    %v3656 = vld [vmem:[%s3655] ss:$2 sm:$0xff]
    %s3657 = scalar_lea.vmem [#allocation2], 218
    %v3658 = vld [vmem:[%s3657] ss:$2 sm:$0xff]
    %s3659 = scalar_lea.vmem [#allocation2], 234
    %v3660 = vld [vmem:[%s3659] ss:$2 sm:$0xff]
    %s3661 = scalar_lea.vmem [#allocation2], 250
    %v3662 = vld [vmem:[%s3661] ss:$2 sm:$0xff]
    %s3663 = scalar_lea.vmem [#allocation2], 266
    %v3664 = vld [vmem:[%s3663] ss:$2 sm:$0xff]
    %s3665 = scalar_lea.vmem [#allocation2], 282
    %v3666 = vld [vmem:[%s3665] ss:$2 sm:$0xff]
    %s3667 = scalar_lea.vmem [#allocation2], 298
    %v3668 = vld [vmem:[%s3667] ss:$2 sm:$0xff]
    %s3669 = scalar_lea.vmem [#allocation2], 314
    %v3670 = vld [vmem:[%s3669] ss:$2 sm:$0xff]
    %s3671 = scalar_lea.vmem [#allocation2], 330
    %v3672 = vld [vmem:[%s3671] ss:$2 sm:$0xff]
    %s3673 = scalar_lea.vmem [#allocation2], 346
    %v3674 = vld [vmem:[%s3673] ss:$2 sm:$0xff]
    %s3675 = scalar_lea.vmem [#allocation2], 362
    %v3676 = vld [vmem:[%s3675] ss:$2 sm:$0xff]
    %s3677 = scalar_lea.vmem [#allocation2], 378
    %v3678 = vld [vmem:[%s3677] ss:$2 sm:$0xff]
    %s3679 = scalar_lea.vmem [#allocation2], 394
    %v3680 = vld [vmem:[%s3679] ss:$2 sm:$0xff]
    %s3681 = scalar_lea.vmem [#allocation2], 410
    %v3682 = vld [vmem:[%s3681] ss:$2 sm:$0xff]
    %s3683 = scalar_lea.vmem [#allocation2], 426
    %v3684 = vld [vmem:[%s3683] ss:$2 sm:$0xff]
    %s3685 = scalar_lea.vmem [#allocation2], 442
    %v3686 = vld [vmem:[%s3685] ss:$2 sm:$0xff]
    %s3687 = scalar_lea.vmem [#allocation2], 458
    %v3688 = vld [vmem:[%s3687] ss:$2 sm:$0xff]
    %s3689 = scalar_lea.vmem [#allocation2], 474
    %v3690 = vld [vmem:[%s3689] ss:$2 sm:$0xff]
    %s3691 = scalar_lea.vmem [#allocation2], 490
    %v3692 = vld [vmem:[%s3691] ss:$2 sm:$0xff]
    %s3693 = scalar_lea.vmem [#allocation2], 506
    %v3694 = vld [vmem:[%s3693] ss:$2 sm:$0xff]
    %3727 = vrot.lane.b32.xlu0 %v3440, 32
    %v3728 = vpop.permute.xlu0 %3727
    %3729 = vrot.lane.b32.xlu0 %v3442, 32
    %v3730 = vpop.permute.xlu0 %3729
    %3731 = vrot.lane.b32.xlu0 %v3444, 32
    %v3732 = vpop.permute.xlu0 %3731
    %3733 = vrot.lane.b32.xlu0 %v3446, 32
    %v3734 = vpop.permute.xlu0 %3733
    %3735 = vrot.lane.b32.xlu0 %v3448, 32
    %v3736 = vpop.permute.xlu0 %3735
    %3737 = vrot.lane.b32.xlu0 %v3450, 32
    %v3738 = vpop.permute.xlu0 %3737
    %3739 = vrot.lane.b32.xlu0 %v3452, 32
    %v3740 = vpop.permute.xlu0 %3739
    %3741 = vrot.lane.b32.xlu0 %v3454, 32
    %v3742 = vpop.permute.xlu0 %3741
    %3743 = vrot.lane.b32.xlu0 %v3456, 32
    %v3744 = vpop.permute.xlu0 %3743
    %3745 = vrot.lane.b32.xlu0 %v3458, 32
    %v3746 = vpop.permute.xlu0 %3745
    %3747 = vrot.lane.b32.xlu0 %v3460, 32
    %v3748 = vpop.permute.xlu0 %3747
    %3749 = vrot.lane.b32.xlu0 %v3462, 32
    %v3750 = vpop.permute.xlu0 %3749
    %3751 = vrot.lane.b32.xlu0 %v3464, 32
    %v3752 = vpop.permute.xlu0 %3751
    %3753 = vrot.lane.b32.xlu0 %v3466, 32
    %v3754 = vpop.permute.xlu0 %3753
    %3755 = vrot.lane.b32.xlu0 %v3468, 32
    %v3756 = vpop.permute.xlu0 %3755
    %3757 = vrot.lane.b32.xlu0 %v3470, 32
    %v3758 = vpop.permute.xlu0 %3757
    %3759 = vrot.lane.b32.xlu0 %v3472, 32
    %v3760 = vpop.permute.xlu0 %3759
    %3761 = vrot.lane.b32.xlu0 %v3474, 32
    %v3762 = vpop.permute.xlu0 %3761
    %3763 = vrot.lane.b32.xlu0 %v3476, 32
    %v3764 = vpop.permute.xlu0 %3763
    %3765 = vrot.lane.b32.xlu0 %v3478, 32
    %v3766 = vpop.permute.xlu0 %3765
    %3767 = vrot.lane.b32.xlu0 %v3480, 32
    %v3768 = vpop.permute.xlu0 %3767
    %3769 = vrot.lane.b32.xlu0 %v3482, 32
    %v3770 = vpop.permute.xlu0 %3769
    %3771 = vrot.lane.b32.xlu0 %v3484, 32
    %v3772 = vpop.permute.xlu0 %3771
    %3773 = vrot.lane.b32.xlu0 %v3486, 32
    %v3774 = vpop.permute.xlu0 %3773
    %3775 = vrot.lane.b32.xlu0 %v3488, 32
    %v3776 = vpop.permute.xlu0 %3775
    %3777 = vrot.lane.b32.xlu0 %v3490, 32
    %v3778 = vpop.permute.xlu0 %3777
    %3779 = vrot.lane.b32.xlu0 %v3492, 32
    %v3780 = vpop.permute.xlu0 %3779
    %3781 = vrot.lane.b32.xlu0 %v3494, 32
    %v3782 = vpop.permute.xlu0 %3781
    %3783 = vrot.lane.b32.xlu0 %v3496, 32
    %v3784 = vpop.permute.xlu0 %3783
    %3785 = vrot.lane.b32.xlu0 %v3498, 32
    %v3786 = vpop.permute.xlu0 %3785
    %3787 = vrot.lane.b32.xlu0 %v3500, 32
    %v3788 = vpop.permute.xlu0 %3787
    %3789 = vrot.lane.b32.xlu0 %v3502, 32
    %v3790 = vpop.permute.xlu0 %3789
    %3855 = vrot.lane.b32.xlu0 %v3504, 64
    %v3856 = vpop.permute.xlu0 %3855
    %3857 = vrot.lane.b32.xlu0 %v3506, 64
    %v3858 = vpop.permute.xlu0 %3857
    %3859 = vrot.lane.b32.xlu0 %v3508, 64
    %v3860 = vpop.permute.xlu0 %3859
    %3861 = vrot.lane.b32.xlu0 %v3510, 64
    %v3862 = vpop.permute.xlu0 %3861
    %3863 = vrot.lane.b32.xlu0 %v3512, 64
    %v3864 = vpop.permute.xlu0 %3863
    %3865 = vrot.lane.b32.xlu0 %v3514, 64
    %v3866 = vpop.permute.xlu0 %3865
    %3867 = vrot.lane.b32.xlu0 %v3516, 64
    %v3868 = vpop.permute.xlu0 %3867
    %3869 = vrot.lane.b32.xlu0 %v3518, 64
    %v3870 = vpop.permute.xlu0 %3869
    %3871 = vrot.lane.b32.xlu0 %v3520, 64
    %v3872 = vpop.permute.xlu0 %3871
    %3873 = vrot.lane.b32.xlu0 %v3522, 64
    %v3874 = vpop.permute.xlu0 %3873
    %3875 = vrot.lane.b32.xlu0 %v3524, 64
    %v3876 = vpop.permute.xlu0 %3875
    %3877 = vrot.lane.b32.xlu0 %v3526, 64
    %v3878 = vpop.permute.xlu0 %3877
    %3879 = vrot.lane.b32.xlu0 %v3528, 64
    %v3880 = vpop.permute.xlu0 %3879
    %3881 = vrot.lane.b32.xlu0 %v3530, 64
    %v3882 = vpop.permute.xlu0 %3881
    %3883 = vrot.lane.b32.xlu0 %v3532, 64
    %v3884 = vpop.permute.xlu0 %3883
    %3885 = vrot.lane.b32.xlu0 %v3534, 64
    %v3886 = vpop.permute.xlu0 %3885
    %3887 = vrot.lane.b32.xlu0 %v3536, 64
    %v3888 = vpop.permute.xlu0 %3887
    %3889 = vrot.lane.b32.xlu0 %v3538, 64
    %v3890 = vpop.permute.xlu0 %3889
    %3891 = vrot.lane.b32.xlu0 %v3540, 64
    %v3892 = vpop.permute.xlu0 %3891
    %3893 = vrot.lane.b32.xlu0 %v3542, 64
    %v3894 = vpop.permute.xlu0 %3893
    %3895 = vrot.lane.b32.xlu0 %v3544, 64
    %v3896 = vpop.permute.xlu0 %3895
    %3897 = vrot.lane.b32.xlu0 %v3546, 64
    %v3898 = vpop.permute.xlu0 %3897
    %3899 = vrot.lane.b32.xlu0 %v3548, 64
    %v3900 = vpop.permute.xlu0 %3899
    %3901 = vrot.lane.b32.xlu0 %v3550, 64
    %v3902 = vpop.permute.xlu0 %3901
    %3903 = vrot.lane.b32.xlu0 %v3552, 64
    %v3904 = vpop.permute.xlu0 %3903
    %3905 = vrot.lane.b32.xlu0 %v3554, 64
    %v3906 = vpop.permute.xlu0 %3905
    %3907 = vrot.lane.b32.xlu0 %v3556, 64
    %v3908 = vpop.permute.xlu0 %3907
    %3909 = vrot.lane.b32.xlu0 %v3558, 64
    %v3910 = vpop.permute.xlu0 %3909
    %3911 = vrot.lane.b32.xlu0 %v3560, 64
    %v3912 = vpop.permute.xlu0 %3911
    %3913 = vrot.lane.b32.xlu0 %v3562, 64
    %v3914 = vpop.permute.xlu0 %3913
    %3915 = vrot.lane.b32.xlu0 %v3564, 64
    %v3916 = vpop.permute.xlu0 %3915
    %3917 = vrot.lane.b32.xlu0 %v3566, 64
    %v3918 = vpop.permute.xlu0 %3917
    %3983 = vrot.lane.b32.xlu0 %v3568, 96
    %v3984 = vpop.permute.xlu0 %3983
    %3985 = vrot.lane.b32.xlu0 %v3570, 96
    %v3986 = vpop.permute.xlu0 %3985
    %3987 = vrot.lane.b32.xlu0 %v3572, 96
    %v3988 = vpop.permute.xlu0 %3987
    %3989 = vrot.lane.b32.xlu0 %v3574, 96
    %v3990 = vpop.permute.xlu0 %3989
    %3991 = vrot.lane.b32.xlu0 %v3576, 96
    %v3992 = vpop.permute.xlu0 %3991
    %3993 = vrot.lane.b32.xlu0 %v3578, 96
    %v3994 = vpop.permute.xlu0 %3993
    %3995 = vrot.lane.b32.xlu0 %v3580, 96
    %v3996 = vpop.permute.xlu0 %3995
    %3997 = vrot.lane.b32.xlu0 %v3582, 96
    %v3998 = vpop.permute.xlu0 %3997
    %3999 = vrot.lane.b32.xlu0 %v3584, 96
    %v4000 = vpop.permute.xlu0 %3999
    %4001 = vrot.lane.b32.xlu0 %v3586, 96
    %v4002 = vpop.permute.xlu0 %4001
    %4003 = vrot.lane.b32.xlu0 %v3588, 96
    %v4004 = vpop.permute.xlu0 %4003
    %4005 = vrot.lane.b32.xlu0 %v3590, 96
    %v4006 = vpop.permute.xlu0 %4005
    %4007 = vrot.lane.b32.xlu0 %v3592, 96
    %v4008 = vpop.permute.xlu0 %4007
    %4009 = vrot.lane.b32.xlu0 %v3594, 96
    %v4010 = vpop.permute.xlu0 %4009
    %4011 = vrot.lane.b32.xlu0 %v3596, 96
    %v4012 = vpop.permute.xlu0 %4011
    %4013 = vrot.lane.b32.xlu0 %v3598, 96
    %v4014 = vpop.permute.xlu0 %4013
    %4015 = vrot.lane.b32.xlu0 %v3600, 96
    %v4016 = vpop.permute.xlu0 %4015
    %4017 = vrot.lane.b32.xlu0 %v3602, 96
    %v4018 = vpop.permute.xlu0 %4017
    %4019 = vrot.lane.b32.xlu0 %v3604, 96
    %v4020 = vpop.permute.xlu0 %4019
    %4021 = vrot.lane.b32.xlu0 %v3606, 96
    %v4022 = vpop.permute.xlu0 %4021
    %4023 = vrot.lane.b32.xlu0 %v3608, 96
    %v4024 = vpop.permute.xlu0 %4023
    %4025 = vrot.lane.b32.xlu0 %v3610, 96
    %v4026 = vpop.permute.xlu0 %4025
    %4027 = vrot.lane.b32.xlu0 %v3612, 96
    %v4028 = vpop.permute.xlu0 %4027
    %4029 = vrot.lane.b32.xlu0 %v3614, 96
    %v4030 = vpop.permute.xlu0 %4029
    %4031 = vrot.lane.b32.xlu0 %v3616, 96
    %v4032 = vpop.permute.xlu0 %4031
    %4033 = vrot.lane.b32.xlu0 %v3618, 96
    %v4034 = vpop.permute.xlu0 %4033
    %4035 = vrot.lane.b32.xlu0 %v3620, 96
    %v4036 = vpop.permute.xlu0 %4035
    %4037 = vrot.lane.b32.xlu0 %v3622, 96
    %v4038 = vpop.permute.xlu0 %4037
    %4039 = vrot.lane.b32.xlu0 %v3624, 96
    %v4040 = vpop.permute.xlu0 %4039
    %4041 = vrot.lane.b32.xlu0 %v3626, 96
    %v4042 = vpop.permute.xlu0 %4041
    %4043 = vrot.lane.b32.xlu0 %v3628, 96
    %v4044 = vpop.permute.xlu0 %4043
    %4045 = vrot.lane.b32.xlu0 %v3630, 96
    %v4046 = vpop.permute.xlu0 %4045
    %v4079 = vsel %vm2573, %v3376, %v3728
    %v4080 = vsel %vm2573, %v3378, %v3730
    %v4081 = vsel %vm2573, %v3380, %v3732
    %v4082 = vsel %vm2573, %v3382, %v3734
    %v4083 = vsel %vm2573, %v3384, %v3736
    %v4084 = vsel %vm2573, %v3386, %v3738
    %v4085 = vsel %vm2573, %v3388, %v3740
    %v4086 = vsel %vm2573, %v3390, %v3742
    %v4087 = vsel %vm2573, %v3392, %v3744
    %v4088 = vsel %vm2573, %v3394, %v3746
    %v4089 = vsel %vm2573, %v3396, %v3748
    %v4090 = vsel %vm2573, %v3398, %v3750
    %v4091 = vsel %vm2573, %v3400, %v3752
    %v4092 = vsel %vm2573, %v3402, %v3754
    %v4093 = vsel %vm2573, %v3404, %v3756
    %v4094 = vsel %vm2573, %v3406, %v3758
    %v4095 = vsel %vm2573, %v3408, %v3760
    %v4096 = vsel %vm2573, %v3410, %v3762
    %v4097 = vsel %vm2573, %v3412, %v3764
    %v4098 = vsel %vm2573, %v3414, %v3766
    %v4099 = vsel %vm2573, %v3416, %v3768
    %v4100 = vsel %vm2573, %v3418, %v3770
    %v4101 = vsel %vm2573, %v3420, %v3772
    %v4102 = vsel %vm2573, %v3422, %v3774
    %v4103 = vsel %vm2573, %v3424, %v3776
    %v4104 = vsel %vm2573, %v3426, %v3778
    %v4105 = vsel %vm2573, %v3428, %v3780
    %v4106 = vsel %vm2573, %v3430, %v3782
    %v4107 = vsel %vm2573, %v3432, %v3784
    %v4108 = vsel %vm2573, %v3434, %v3786
    %v4109 = vsel %vm2573, %v3436, %v3788
    %v4110 = vsel %vm2573, %v3438, %v3790
    %vm4111 = vcmask 523264
    %v4112 = vsel %vm4111, %v4079, %v3856
    %v4113 = vsel %vm4111, %v4080, %v3858
    %v4114 = vsel %vm4111, %v4081, %v3860
    %v4115 = vsel %vm4111, %v4082, %v3862
    %v4116 = vsel %vm4111, %v4083, %v3864
    %v4117 = vsel %vm4111, %v4084, %v3866
    %v4118 = vsel %vm4111, %v4085, %v3868
    %v4119 = vsel %vm4111, %v4086, %v3870
    %v4120 = vsel %vm4111, %v4087, %v3872
    %v4121 = vsel %vm4111, %v4088, %v3874
    %v4122 = vsel %vm4111, %v4089, %v3876
    %v4123 = vsel %vm4111, %v4090, %v3878
    %v4124 = vsel %vm4111, %v4091, %v3880
    %v4125 = vsel %vm4111, %v4092, %v3882
    %v4126 = vsel %vm4111, %v4093, %v3884
    %v4127 = vsel %vm4111, %v4094, %v3886
    %v4128 = vsel %vm4111, %v4095, %v3888
    %v4129 = vsel %vm4111, %v4096, %v3890
    %v4130 = vsel %vm4111, %v4097, %v3892
    %v4131 = vsel %vm4111, %v4098, %v3894
    %v4132 = vsel %vm4111, %v4099, %v3896
    %v4133 = vsel %vm4111, %v4100, %v3898
    %v4134 = vsel %vm4111, %v4101, %v3900
    %v4135 = vsel %vm4111, %v4102, %v3902
    %v4136 = vsel %vm4111, %v4103, %v3904
    %v4137 = vsel %vm4111, %v4104, %v3906
    %v4138 = vsel %vm4111, %v4105, %v3908
    %v4139 = vsel %vm4111, %v4106, %v3910
    %v4140 = vsel %vm4111, %v4107, %v3912
    %v4141 = vsel %vm4111, %v4108, %v3914
    %v4142 = vsel %vm4111, %v4109, %v3916
    %v4143 = vsel %vm4111, %v4110, %v3918
    %vm4144 = vcmask 785408
    %v4145 = vsel %vm4144, %v4112, %v3984
    %v4146 = vsel %vm4144, %v4113, %v3986
    %v4147 = vsel %vm4144, %v4114, %v3988
    %v4148 = vsel %vm4144, %v4115, %v3990
    %v4149 = vsel %vm4144, %v4116, %v3992
    %v4150 = vsel %vm4144, %v4117, %v3994
    %v4151 = vsel %vm4144, %v4118, %v3996
    %v4152 = vsel %vm4144, %v4119, %v3998
    %v4153 = vsel %vm4144, %v4120, %v4000
    %v4154 = vsel %vm4144, %v4121, %v4002
    %v4155 = vsel %vm4144, %v4122, %v4004
    %v4156 = vsel %vm4144, %v4123, %v4006
    %v4157 = vsel %vm4144, %v4124, %v4008
    %v4158 = vsel %vm4144, %v4125, %v4010
    %v4159 = vsel %vm4144, %v4126, %v4012
    %v4160 = vsel %vm4144, %v4127, %v4014
    %v4161 = vsel %vm4144, %v4128, %v4016
    %v4162 = vsel %vm4144, %v4129, %v4018
    %v4163 = vsel %vm4144, %v4130, %v4020
    %v4164 = vsel %vm4144, %v4131, %v4022
    %v4165 = vsel %vm4144, %v4132, %v4024
    %v4166 = vsel %vm4144, %v4133, %v4026
    %v4167 = vsel %vm4144, %v4134, %v4028
    %v4168 = vsel %vm4144, %v4135, %v4030
    %v4169 = vsel %vm4144, %v4136, %v4032
    %v4170 = vsel %vm4144, %v4137, %v4034
    %v4171 = vsel %vm4144, %v4138, %v4036
    %v4172 = vsel %vm4144, %v4139, %v4038
    %v4173 = vsel %vm4144, %v4140, %v4040
    %v4174 = vsel %vm4144, %v4141, %v4042
    %v4175 = vsel %vm4144, %v4142, %v4044
    %v4176 = vsel %vm4144, %v4143, %v4046
    %v4177 = vld [vmem:[%s2] sm:$0xff]
    %v4178 = vld [vmem:[%s2 + $0x8] sm:$0xff]
    %v4179 = vld [vmem:[%s2 + $0x10] sm:$0xff]
    %v4180 = vld [vmem:[%s2 + $0x18] sm:$0xff]
    %v4181 = vld [vmem:[%s2 + $0x20] sm:$0xff]
    %v4182 = vld [vmem:[%s2 + $0x28] sm:$0xff]
    %v4183 = vld [vmem:[%s2 + $0x30] sm:$0xff]
    %v4184 = vld [vmem:[%s2 + $0x38] sm:$0xff]
    %v4185 = vld [vmem:[%s2 + $0x40] sm:$0xff]
    %v4186 = vld [vmem:[%s2 + $0x48] sm:$0xff]
    %v4187 = vld [vmem:[%s2 + $0x50] sm:$0xff]
    %v4188 = vld [vmem:[%s2 + $0x58] sm:$0xff]
    %v4189 = vld [vmem:[%s2 + $0x60] sm:$0xff]
    %v4190 = vld [vmem:[%s2 + $0x68] sm:$0xff]
    %v4191 = vld [vmem:[%s2 + $0x70] sm:$0xff]
    %v4192 = vld [vmem:[%s2 + $0x78] sm:$0xff]
    %v4193 = vld [vmem:[%s2 + $0x80] sm:$0xff]
    %v4194 = vld [vmem:[%s2 + $0x88] sm:$0xff]
    %v4195 = vld [vmem:[%s2 + $0x90] sm:$0xff]
    %v4196 = vld [vmem:[%s2 + $0x98] sm:$0xff]
    %v4198 = vsel %vm2573, %v3632, 0
    %v4201 = vsel %vm2573, %v3634, 0
    %v4204 = vsel %vm2573, %v3636, 0
    %v4207 = vsel %vm2573, %v3638, 0
    %v4210 = vsel %vm2573, %v3640, 0
    %v4213 = vsel %vm2573, %v3642, 0
    %v4216 = vsel %vm2573, %v3644, 0
    %v4219 = vsel %vm2573, %v3646, 0
    %v4222 = vsel %vm2573, %v3648, 0
    %v4225 = vsel %vm2573, %v3650, 0
    %v4228 = vsel %vm2573, %v3652, 0
    %v4231 = vsel %vm2573, %v3654, 0
    %v4234 = vsel %vm2573, %v3656, 0
    %v4237 = vsel %vm2573, %v3658, 0
    %v4240 = vsel %vm2573, %v3660, 0
    %v4243 = vsel %vm2573, %v3662, 0
    %v4246 = vsel %vm2573, %v3664, 0
    %v4249 = vsel %vm2573, %v3666, 0
    %v4252 = vsel %vm2573, %v3668, 0
    %v4255 = vsel %vm2573, %v3670, 0
    %v4258 = vsel %vm2573, %v3672, 0
    %v4261 = vsel %vm2573, %v3674, 0
    %v4264 = vsel %vm2573, %v3676, 0
    %v4267 = vsel %vm2573, %v3678, 0
    %v4270 = vsel %vm2573, %v3680, 0
    %v4273 = vsel %vm2573, %v3682, 0
    %v4276 = vsel %vm2573, %v3684, 0
    %v4279 = vsel %vm2573, %v3686, 0
    %v4282 = vsel %vm2573, %v3688, 0
    %v4285 = vsel %vm2573, %v3690, 0
    %v4288 = vsel %vm2573, %v3692, 0
    %v4291 = vsel %vm2573, %v3694, 0
    %4293 = vmatprep.subr.mxu0 0.0
    %4294 = vmatpush1.msra.mxu0 %v4177
    %4295 = vmatprep.subr.mxu0 0.0
    %4296 = vmatpush1.msra.mxu0 %v4178
    %4297 = vmatprep.subr.mxu0 0.0
    %4298 = vmatpush1.msra.mxu0 %v4179
    %4299 = vmatprep.subr.mxu0 0.0
    %4300 = vmatpush1.msra.mxu0 %v4180
    %4301 = vmatprep.subr.mxu0 0.0
    %4302 = vmatpush1.msra.mxu0 %v4181
    %4303 = vmatprep.subr.mxu0 0.0
    %4304 = vmatpush1.msra.mxu0 %v4182
    %4305 = vmatprep.subr.mxu0 0.0
    %4306 = vmatpush1.msra.mxu0 %v4183
    %4307 = vmatprep.subr.mxu0 0.0
    %4308 = vmatpush1.msra.mxu0 %v4184
    %4309 = vmatprep.subr.mxu0 0.0
    %4310 = vmatpush1.msra.mxu0 %v4185
    %4311 = vmatprep.subr.mxu0 0.0
    %4312 = vmatpush1.msra.mxu0 %v4186
    %4313 = vmatprep.subr.mxu0 0.0
    %4314 = vmatpush1.msra.mxu0 %v4187
    %4315 = vmatprep.subr.mxu0 0.0
    %4316 = vmatpush1.msra.mxu0 %v4188
    %4317 = vmatprep.subr.mxu0 0.0
    %4318 = vmatpush1.msra.mxu0 %v4189
    %4319 = vmatprep.subr.mxu0 0.0
    %4320 = vmatpush1.msra.mxu0 %v4190
    %4321 = vmatprep.subr.mxu0 0.0
    %4322 = vmatpush1.msra.mxu0 %v4191
    %4323 = vmatprep.subr.mxu0 0.0
    %4324 = vmatpush1.msra.mxu0 %v4192
    %4325 = vmatprep.subr.mxu0 0.0
    %4326 = vmatpush1.msra.mxu0 %v4193
    %4327 = vmatprep.subr.mxu0 0.0
    %4328 = vmatpush1.msra.mxu0 %v4194
    %4329 = vmatprep.subr.mxu0 0.0
    %4330 = vmatpush1.msra.mxu0 %v4195
    %4331 = vmatprep.subr.mxu0 0.0
    %4332 = vmatpush1.msra.mxu0 %v4196
    %4333 = vmatprep.subr.mxu0 0.0
    %4334 = vmatpush1.msra.mxu0 0.0
    %4335 = vmatprep.subr.mxu0 0.0
    %4336 = vmatpush1.msra.mxu0 0.0
    %4337 = vmatprep.subr.mxu0 0.0
    %4338 = vmatpush1.msra.mxu0 0.0
    %4339 = vmatprep.subr.mxu0 0.0
    %4340 = vmatpush1.msra.mxu0 0.0
    %4341 = vmatprep.subr.mxu0 0.0
    %4342 = vmatpush1.msra.mxu0 0.0
    %4343 = vmatprep.subr.mxu0 0.0
    %4344 = vmatpush1.msra.mxu0 0.0
    %4345 = vmatprep.subr.mxu0 0.0
    %4346 = vmatpush1.msra.mxu0 0.0
    %4347 = vmatprep.subr.mxu0 0.0
    %4348 = vmatpush1.msra.mxu0 0.0
    %4349 = vmatprep.subr.mxu0 0.0
    %4350 = vmatpush1.msra.mxu0 0.0
    %4351 = vmatprep.subr.mxu0 0.0
    %4352 = vmatpush1.msra.mxu0 0.0
    %4353 = vmatprep.subr.mxu0 0.0
    %4354 = vmatpush1.msra.mxu0 0.0
    %4355 = vmatprep.subr.mxu0 0.0
    %4356 = vmatpush1.msra.mxu0 0.0
    %4357 = vmatprep.mubr.f32.mxu0 %v4198
    %4358 = vmatmul.mubr.f32.gmra.mrb[0].mxu0 %v4145
    %v4359 = vpop.f32.mrb[0].mxu0
    %v4360 = vadd.f32 0.0, %v4359
    %v4361 = vpop.f32.mrb[0].mxu0
    %4362 = vmatprep.mubr.f32.mxu0 %v4201
    %4363 = vmatmul.mubr.f32.gmra.mrb[0].mxu0 %v4146
    %v4364 = vpop.f32.mrb[0].mxu0
    %v4365 = vadd.f32 0.0, %v4364
    %v4366 = vpop.f32.mrb[0].mxu0
    %4367 = vmatprep.mubr.f32.mxu0 %v4204
    %4368 = vmatmul.mubr.f32.gmra.mrb[0].mxu0 %v4147
    %v4369 = vpop.f32.mrb[0].mxu0
    %v4370 = vadd.f32 0.0, %v4369
    %v4371 = vpop.f32.mrb[0].mxu0
    %4372 = vmatprep.mubr.f32.mxu0 %v4207
    %4373 = vmatmul.mubr.f32.gmra.mrb[0].mxu0 %v4148
    %v4374 = vpop.f32.mrb[0].mxu0
    %v4375 = vadd.f32 0.0, %v4374
    %v4376 = vpop.f32.mrb[0].mxu0
    %4377 = vmatprep.mubr.f32.mxu0 %v4210
    %4378 = vmatmul.mubr.f32.gmra.mrb[0].mxu0 %v4149
    %v4379 = vpop.f32.mrb[0].mxu0
    %v4380 = vadd.f32 0.0, %v4379
    %v4381 = vpop.f32.mrb[0].mxu0
    %4382 = vmatprep.mubr.f32.mxu0 %v4213
    %4383 = vmatmul.mubr.f32.gmra.mrb[0].mxu0 %v4150
    %v4384 = vpop.f32.mrb[0].mxu0
    %v4385 = vadd.f32 0.0, %v4384
    %v4386 = vpop.f32.mrb[0].mxu0
    %4387 = vmatprep.mubr.f32.mxu0 %v4216
    %4388 = vmatmul.mubr.f32.gmra.mrb[0].mxu0 %v4151
    %v4389 = vpop.f32.mrb[0].mxu0
    %v4390 = vadd.f32 0.0, %v4389
    %v4391 = vpop.f32.mrb[0].mxu0
    %4392 = vmatprep.mubr.f32.mxu0 %v4219
    %4393 = vmatmul.mubr.f32.gmra.mrb[0].mxu0 %v4152
    %v4394 = vpop.f32.mrb[0].mxu0
    %v4395 = vadd.f32 0.0, %v4394
    %v4396 = vpop.f32.mrb[0].mxu0
    %4397 = vmatprep.mubr.f32.mxu0 %v4222
    %4398 = vmatmul.mubr.f32.gmra.mrb[0].mxu0 %v4153
    %v4399 = vpop.f32.mrb[0].mxu0
    %v4400 = vadd.f32 0.0, %v4399
    %v4401 = vpop.f32.mrb[0].mxu0
    %4402 = vmatprep.mubr.f32.mxu0 %v4225
    %4403 = vmatmul.mubr.f32.gmra.mrb[0].mxu0 %v4154
    %v4404 = vpop.f32.mrb[0].mxu0
    %v4405 = vadd.f32 0.0, %v4404
    %v4406 = vpop.f32.mrb[0].mxu0
    %4407 = vmatprep.mubr.f32.mxu0 %v4228
    %4408 = vmatmul.mubr.f32.gmra.mrb[0].mxu0 %v4155
    %v4409 = vpop.f32.mrb[0].mxu0
    %v4410 = vadd.f32 0.0, %v4409
    %v4411 = vpop.f32.mrb[0].mxu0
    %4412 = vmatprep.mubr.f32.mxu0 %v4231
    %4413 = vmatmul.mubr.f32.gmra.mrb[0].mxu0 %v4156
    %v4414 = vpop.f32.mrb[0].mxu0
    %v4415 = vadd.f32 0.0, %v4414
    %v4416 = vpop.f32.mrb[0].mxu0
    %4417 = vmatprep.mubr.f32.mxu0 %v4234
    %4418 = vmatmul.mubr.f32.gmra.mrb[0].mxu0 %v4157
    %v4419 = vpop.f32.mrb[0].mxu0
    %v4420 = vadd.f32 0.0, %v4419
    %v4421 = vpop.f32.mrb[0].mxu0
    %4422 = vmatprep.mubr.f32.mxu0 %v4237
    %4423 = vmatmul.mubr.f32.gmra.mrb[0].mxu0 %v4158
    %v4424 = vpop.f32.mrb[0].mxu0
    %v4425 = vadd.f32 0.0, %v4424
    %v4426 = vpop.f32.mrb[0].mxu0
    %4427 = vmatprep.mubr.f32.mxu0 %v4240
    %4428 = vmatmul.mubr.f32.gmra.mrb[0].mxu0 %v4159
    %v4429 = vpop.f32.mrb[0].mxu0
    %v4430 = vadd.f32 0.0, %v4429
    %v4431 = vpop.f32.mrb[0].mxu0
    %4432 = vmatprep.mubr.f32.mxu0 %v4243
    %4433 = vmatmul.mubr.f32.gmra.mrb[0].mxu0 %v4160
    %v4434 = vpop.f32.mrb[0].mxu0
    %v4435 = vadd.f32 0.0, %v4434
    %v4436 = vpop.f32.mrb[0].mxu0
    %4437 = vmatprep.mubr.f32.mxu0 %v4246
    %4438 = vmatmul.mubr.f32.gmra.mrb[0].mxu0 %v4161
    %v4439 = vpop.f32.mrb[0].mxu0
    %v4440 = vadd.f32 0.0, %v4439
    %v4441 = vpop.f32.mrb[0].mxu0
    %4442 = vmatprep.mubr.f32.mxu0 %v4249
    %4443 = vmatmul.mubr.f32.gmra.mrb[0].mxu0 %v4162
    %v4444 = vpop.f32.mrb[0].mxu0
    %v4445 = vadd.f32 0.0, %v4444
    %v4446 = vpop.f32.mrb[0].mxu0
    %4447 = vmatprep.mubr.f32.mxu0 %v4252
    %4448 = vmatmul.mubr.f32.gmra.mrb[0].mxu0 %v4163
    %v4449 = vpop.f32.mrb[0].mxu0
    %v4450 = vadd.f32 0.0, %v4449
    %v4451 = vpop.f32.mrb[0].mxu0
    %4452 = vmatprep.mubr.f32.mxu0 %v4255
    %4453 = vmatmul.mubr.f32.gmra.mrb[0].mxu0 %v4164
    %v4454 = vpop.f32.mrb[0].mxu0
    %v4455 = vadd.f32 0.0, %v4454
    %v4456 = vpop.f32.mrb[0].mxu0
    %4457 = vmatprep.mubr.f32.mxu0 %v4258
    %4458 = vmatmul.mubr.f32.gmra.mrb[0].mxu0 %v4165
    %v4459 = vpop.f32.mrb[0].mxu0
    %v4460 = vadd.f32 0.0, %v4459
    %v4461 = vpop.f32.mrb[0].mxu0
    %4462 = vmatprep.mubr.f32.mxu0 %v4261
    %4463 = vmatmul.mubr.f32.gmra.mrb[0].mxu0 %v4166
    %v4464 = vpop.f32.mrb[0].mxu0
    %v4465 = vadd.f32 0.0, %v4464
    %v4466 = vpop.f32.mrb[0].mxu0
    %4467 = vmatprep.mubr.f32.mxu0 %v4264
    %4468 = vmatmul.mubr.f32.gmra.mrb[0].mxu0 %v4167
    %v4469 = vpop.f32.mrb[0].mxu0
    %v4470 = vadd.f32 0.0, %v4469
    %v4471 = vpop.f32.mrb[0].mxu0
    %4472 = vmatprep.mubr.f32.mxu0 %v4267
    %4473 = vmatmul.mubr.f32.gmra.mrb[0].mxu0 %v4168
    %v4474 = vpop.f32.mrb[0].mxu0
    %v4475 = vadd.f32 0.0, %v4474
    %v4476 = vpop.f32.mrb[0].mxu0
    %4477 = vmatprep.mubr.f32.mxu0 %v4270
    %4478 = vmatmul.mubr.f32.gmra.mrb[0].mxu0 %v4169
    %v4479 = vpop.f32.mrb[0].mxu0
    %v4480 = vadd.f32 0.0, %v4479
    %v4481 = vpop.f32.mrb[0].mxu0
    %4482 = vmatprep.mubr.f32.mxu0 %v4273
    %4483 = vmatmul.mubr.f32.gmra.mrb[0].mxu0 %v4170
    %v4484 = vpop.f32.mrb[0].mxu0
    %v4485 = vadd.f32 0.0, %v4484
    %v4486 = vpop.f32.mrb[0].mxu0
    %4487 = vmatprep.mubr.f32.mxu0 %v4276
    %4488 = vmatmul.mubr.f32.gmra.mrb[0].mxu0 %v4171
    %v4489 = vpop.f32.mrb[0].mxu0
    %v4490 = vadd.f32 0.0, %v4489
    %v4491 = vpop.f32.mrb[0].mxu0
    %4492 = vmatprep.mubr.f32.mxu0 %v4279
    %4493 = vmatmul.mubr.f32.gmra.mrb[0].mxu0 %v4172
    %v4494 = vpop.f32.mrb[0].mxu0
    %v4495 = vadd.f32 0.0, %v4494
    %v4496 = vpop.f32.mrb[0].mxu0
    %4497 = vmatprep.mubr.f32.mxu0 %v4282
    %4498 = vmatmul.mubr.f32.gmra.mrb[0].mxu0 %v4173
    %v4499 = vpop.f32.mrb[0].mxu0
    %v4500 = vadd.f32 0.0, %v4499
    %v4501 = vpop.f32.mrb[0].mxu0
    %4502 = vmatprep.mubr.f32.mxu0 %v4285
    %4503 = vmatmul.mubr.f32.gmra.mrb[0].mxu0 %v4174
    %v4504 = vpop.f32.mrb[0].mxu0
    %v4505 = vadd.f32 0.0, %v4504
    %v4506 = vpop.f32.mrb[0].mxu0
    %4507 = vmatprep.mubr.f32.mxu0 %v4288
    %4508 = vmatmul.mubr.f32.gmra.mrb[0].mxu0 %v4175
    %v4509 = vpop.f32.mrb[0].mxu0
    %v4510 = vadd.f32 0.0, %v4509
    %v4511 = vpop.f32.mrb[0].mxu0
    %4512 = vmatprep.mubr.f32.mxu0 %v4291
    %4513 = vmatmul.mubr.f32.gmra.mrb[0].mxu0 %v4176
    %v4514 = vpop.f32.mrb[0].mxu0
    %v4515 = vadd.f32 0.0, %v4514
    %v4516 = vpop.f32.mrb[0].mxu0
    %4517 = vdwg.mxu0
    %v4518 = vand.u32 %v2317, 31
    %v4519 = vand.u32 %v2318, 31
    %v4520 = vand.u32 %v2319, 31
    %v4521 = vand.u32 %v2320, 31
    %v4522 = vand.u32 %v2321, 31
    %v4523 = vand.u32 %v2322, 31
    %v4524 = vand.u32 %v2323, 31
    %v4525 = vand.u32 %v2324, 31
    %v4526 = vand.u32 %v2325, 31
    %v4527 = vand.u32 %v2326, 31
    %v4528 = vand.u32 %v2327, 31
    %v4529 = vand.u32 %v2328, 31
    %v4530 = vand.u32 %v2329, 31
    %v4531 = vand.u32 %v2330, 31
    %v4532 = vand.u32 %v2331, 31
    %v4533 = vand.u32 %v2332, 31
    %v4534 = vand.u32 %v2333, 31
    %v4535 = vand.u32 %v2334, 31
    %v4536 = vand.u32 %v2335, 31
    %v4537 = vand.u32 %v2336, 31
    %v4538 = vand.u32 %v2337, 31
    %v4539 = vand.u32 %v2338, 31
    %v4540 = vand.u32 %v2339, 31
    %v4541 = vand.u32 %v2340, 31
    %v4542 = vand.u32 %v2341, 31
    %v4543 = vand.u32 %v2342, 31
    %v4544 = vand.u32 %v2343, 31
    %v4545 = vand.u32 %v2344, 31
    %v4546 = vand.u32 %v2345, 31
    %v4547 = vand.u32 %v2346, 31
    %v4548 = vand.u32 %v2347, 31
    %v4549 = vand.u32 %v2348, 31
    %vm4550 = vcmp.lt.s32.totalorder %v4518, 30
    %vm4551 = vcmp.lt.s32.totalorder %v4519, 30
    %vm4552 = vcmp.lt.s32.totalorder %v4520, 30
    %vm4553 = vcmp.lt.s32.totalorder %v4521, 30
    %vm4554 = vcmp.lt.s32.totalorder %v4522, 30
    %vm4555 = vcmp.lt.s32.totalorder %v4523, 30
    %vm4556 = vcmp.lt.s32.totalorder %v4524, 30
    %vm4557 = vcmp.lt.s32.totalorder %v4525, 30
    %vm4558 = vcmp.lt.s32.totalorder %v4526, 30
    %vm4559 = vcmp.lt.s32.totalorder %v4527, 30
    %vm4560 = vcmp.lt.s32.totalorder %v4528, 30
    %vm4561 = vcmp.lt.s32.totalorder %v4529, 30
    %vm4562 = vcmp.lt.s32.totalorder %v4530, 30
    %vm4563 = vcmp.lt.s32.totalorder %v4531, 30
    %vm4564 = vcmp.lt.s32.totalorder %v4532, 30
    %vm4565 = vcmp.lt.s32.totalorder %v4533, 30
    %vm4566 = vcmp.lt.s32.totalorder %v4534, 30
    %vm4567 = vcmp.lt.s32.totalorder %v4535, 30
    %vm4568 = vcmp.lt.s32.totalorder %v4536, 30
    %vm4569 = vcmp.lt.s32.totalorder %v4537, 30
    %vm4570 = vcmp.lt.s32.totalorder %v4538, 30
    %vm4571 = vcmp.lt.s32.totalorder %v4539, 30
    %vm4572 = vcmp.lt.s32.totalorder %v4540, 30
    %vm4573 = vcmp.lt.s32.totalorder %v4541, 30
    %vm4574 = vcmp.lt.s32.totalorder %v4542, 30
    %vm4575 = vcmp.lt.s32.totalorder %v4543, 30
    %vm4576 = vcmp.lt.s32.totalorder %v4544, 30
    %vm4577 = vcmp.lt.s32.totalorder %v4545, 30
    %vm4578 = vcmp.lt.s32.totalorder %v4546, 30
    %vm4579 = vcmp.lt.s32.totalorder %v4547, 30
    %vm4580 = vcmp.lt.s32.totalorder %v4548, 30
    %vm4581 = vcmp.lt.s32.totalorder %v4549, 30
    %v4582 = vsel %vm4550, %v4360, 0.0
    %v4583 = vsel %vm4551, %v4365, 0.0
    %v4584 = vsel %vm4552, %v4370, 0.0
    %v4585 = vsel %vm4553, %v4375, 0.0
    %v4586 = vsel %vm4554, %v4380, 0.0
    %v4587 = vsel %vm4555, %v4385, 0.0
    %v4588 = vsel %vm4556, %v4390, 0.0
    %v4589 = vsel %vm4557, %v4395, 0.0
    %v4590 = vsel %vm4558, %v4400, 0.0
    %v4591 = vsel %vm4559, %v4405, 0.0
    %v4592 = vsel %vm4560, %v4410, 0.0
    %v4593 = vsel %vm4561, %v4415, 0.0
    %v4594 = vsel %vm4562, %v4420, 0.0
    %v4595 = vsel %vm4563, %v4425, 0.0
    %v4596 = vsel %vm4564, %v4430, 0.0
    %v4597 = vsel %vm4565, %v4435, 0.0
    %v4598 = vsel %vm4566, %v4440, 0.0
    %v4599 = vsel %vm4567, %v4445, 0.0
    %v4600 = vsel %vm4568, %v4450, 0.0
    %v4601 = vsel %vm4569, %v4455, 0.0
    %v4602 = vsel %vm4570, %v4460, 0.0
    %v4603 = vsel %vm4571, %v4465, 0.0
    %v4604 = vsel %vm4572, %v4470, 0.0
    %v4605 = vsel %vm4573, %v4475, 0.0
    %v4606 = vsel %vm4574, %v4480, 0.0
    %v4607 = vsel %vm4575, %v4485, 0.0
    %v4608 = vsel %vm4576, %v4490, 0.0
    %v4609 = vsel %vm4577, %v4495, 0.0
    %v4610 = vsel %vm4578, %v4500, 0.0
    %v4611 = vsel %vm4579, %v4505, 0.0
    %v4612 = vsel %vm4580, %v4510, 0.0
    %v4613 = vsel %vm4581, %v4515, 0.0
    %v4614 = vsel %vm2573, %v4582, 0.0
    %v4615 = vsel %vm2573, %v4583, 0.0
    %v4616 = vadd.f32 %v4614, %v4615
    %v4617 = vsel %vm2573, %v4584, 0.0
    %v4618 = vadd.f32 %v4616, %v4617
    %v4619 = vsel %vm2573, %v4585, 0.0
    %v4620 = vadd.f32 %v4618, %v4619
    %v4621 = vsel %vm2573, %v4586, 0.0
    %v4622 = vadd.f32 %v4620, %v4621
    %v4623 = vsel %vm2573, %v4587, 0.0
    %v4624 = vadd.f32 %v4622, %v4623
    %v4625 = vsel %vm2573, %v4588, 0.0
    %v4626 = vadd.f32 %v4624, %v4625
    %v4627 = vsel %vm2573, %v4589, 0.0
    %v4628 = vadd.f32 %v4626, %v4627
    %v4629 = vsel %vm2573, %v4590, 0.0
    %v4630 = vadd.f32 %v4628, %v4629
    %v4631 = vsel %vm2573, %v4591, 0.0
    %v4632 = vadd.f32 %v4630, %v4631
    %v4633 = vsel %vm2573, %v4592, 0.0
    %v4634 = vadd.f32 %v4632, %v4633
    %v4635 = vsel %vm2573, %v4593, 0.0
    %v4636 = vadd.f32 %v4634, %v4635
    %v4637 = vsel %vm2573, %v4594, 0.0
    %v4638 = vadd.f32 %v4636, %v4637
    %v4639 = vsel %vm2573, %v4595, 0.0
    %v4640 = vadd.f32 %v4638, %v4639
    %v4641 = vsel %vm2573, %v4596, 0.0
    %v4642 = vadd.f32 %v4640, %v4641
    %v4643 = vsel %vm2573, %v4597, 0.0
    %v4644 = vadd.f32 %v4642, %v4643
    %v4645 = vsel %vm2573, %v4598, 0.0
    %v4646 = vadd.f32 %v4644, %v4645
    %v4647 = vsel %vm2573, %v4599, 0.0
    %v4648 = vadd.f32 %v4646, %v4647
    %v4649 = vsel %vm2573, %v4600, 0.0
    %v4650 = vadd.f32 %v4648, %v4649
    %v4651 = vsel %vm2573, %v4601, 0.0
    %v4652 = vadd.f32 %v4650, %v4651
    %v4653 = vsel %vm2573, %v4602, 0.0
    %v4654 = vadd.f32 %v4652, %v4653
    %v4655 = vsel %vm2573, %v4603, 0.0
    %v4656 = vadd.f32 %v4654, %v4655
    %v4657 = vsel %vm2573, %v4604, 0.0
    %v4658 = vadd.f32 %v4656, %v4657
    %v4659 = vsel %vm2573, %v4605, 0.0
    %v4660 = vadd.f32 %v4658, %v4659
    %v4661 = vsel %vm2573, %v4606, 0.0
    %v4662 = vadd.f32 %v4660, %v4661
    %v4663 = vsel %vm2573, %v4607, 0.0
    %v4664 = vadd.f32 %v4662, %v4663
    %v4665 = vsel %vm2573, %v4608, 0.0
    %v4666 = vadd.f32 %v4664, %v4665
    %v4667 = vsel %vm2573, %v4609, 0.0
    %v4668 = vadd.f32 %v4666, %v4667
    %v4669 = vsel %vm2573, %v4610, 0.0
    %v4670 = vadd.f32 %v4668, %v4669
    %v4671 = vsel %vm2573, %v4611, 0.0
    %v4672 = vadd.f32 %v4670, %v4671
    %v4673 = vsel %vm2573, %v4612, 0.0
    %v4674 = vadd.f32 %v4672, %v4673
    %v4675 = vsel %vm2573, %v4613, 0.0
    %v4676 = vadd.f32 %v4674, %v4675
    %v4677 = vrot.slane %v4676, 4
    %v4678 = vadd.f32 %v4676, %v4677
    %v4679 = vrot.slane %v4678, 2
    %v4680 = vadd.f32 %v4678, %v4679
    %v4681 = vrot.slane %v4680, 1
    %v4682 = vadd.f32 %v4680, %v4681
    %v4683 = vmul.f32 %v4682, 0.004166667
    %v4684 = vsub.f32 %v4360, %v4683
    %v4685 = vsub.f32 %v4365, %v4683
    %v4686 = vsub.f32 %v4370, %v4683
    %v4687 = vsub.f32 %v4375, %v4683
    %v4688 = vsub.f32 %v4380, %v4683
    %v4689 = vsub.f32 %v4385, %v4683
    %v4690 = vsub.f32 %v4390, %v4683
    %v4691 = vsub.f32 %v4395, %v4683
    %v4692 = vsub.f32 %v4400, %v4683
    %v4693 = vsub.f32 %v4405, %v4683
    %v4694 = vsub.f32 %v4410, %v4683
    %v4695 = vsub.f32 %v4415, %v4683
    %v4696 = vsub.f32 %v4420, %v4683
    %v4697 = vsub.f32 %v4425, %v4683
    %v4698 = vsub.f32 %v4430, %v4683
    %v4699 = vsub.f32 %v4435, %v4683
    %v4700 = vsub.f32 %v4440, %v4683
    %v4701 = vsub.f32 %v4445, %v4683
    %v4702 = vsub.f32 %v4450, %v4683
    %v4703 = vsub.f32 %v4455, %v4683
    %v4704 = vsub.f32 %v4460, %v4683
    %v4705 = vsub.f32 %v4465, %v4683
    %v4706 = vsub.f32 %v4470, %v4683
    %v4707 = vsub.f32 %v4475, %v4683
    %v4708 = vsub.f32 %v4480, %v4683
    %v4709 = vsub.f32 %v4485, %v4683
    %v4710 = vsub.f32 %v4490, %v4683
    %v4711 = vsub.f32 %v4495, %v4683
    %v4712 = vsub.f32 %v4500, %v4683
    %v4713 = vsub.f32 %v4505, %v4683
    %v4714 = vsub.f32 %v4510, %v4683
    %v4715 = vsub.f32 %v4515, %v4683
    %v4716 = vsel %vm4550, %v4684, 0.0
    %v4717 = vsel %vm4551, %v4685, 0.0
    %v4718 = vsel %vm4552, %v4686, 0.0
    %v4719 = vsel %vm4553, %v4687, 0.0
    %v4720 = vsel %vm4554, %v4688, 0.0
    %v4721 = vsel %vm4555, %v4689, 0.0
    %v4722 = vsel %vm4556, %v4690, 0.0
    %v4723 = vsel %vm4557, %v4691, 0.0
    %v4724 = vsel %vm4558, %v4692, 0.0
    %v4725 = vsel %vm4559, %v4693, 0.0
    %v4726 = vsel %vm4560, %v4694, 0.0
    %v4727 = vsel %vm4561, %v4695, 0.0
    %v4728 = vsel %vm4562, %v4696, 0.0
    %v4729 = vsel %vm4563, %v4697, 0.0
    %v4730 = vsel %vm4564, %v4698, 0.0
    %v4731 = vsel %vm4565, %v4699, 0.0
    %v4732 = vsel %vm4566, %v4700, 0.0
    %v4733 = vsel %vm4567, %v4701, 0.0
    %v4734 = vsel %vm4568, %v4702, 0.0
    %v4735 = vsel %vm4569, %v4703, 0.0
    %v4736 = vsel %vm4570, %v4704, 0.0
    %v4737 = vsel %vm4571, %v4705, 0.0
    %v4738 = vsel %vm4572, %v4706, 0.0
    %v4739 = vsel %vm4573, %v4707, 0.0
    %v4740 = vsel %vm4574, %v4708, 0.0
    %v4741 = vsel %vm4575, %v4709, 0.0
    %v4742 = vsel %vm4576, %v4710, 0.0
    %v4743 = vsel %vm4577, %v4711, 0.0
    %v4744 = vsel %vm4578, %v4712, 0.0
    %v4745 = vsel %vm4579, %v4713, 0.0
    %v4746 = vsel %vm4580, %v4714, 0.0
    %v4747 = vsel %vm4581, %v4715, 0.0
    %v4748 = vmul.f32 %v4716, %v4716
    %v4749 = vmul.f32 %v4717, %v4717
    %v4750 = vmul.f32 %v4718, %v4718
    %v4751 = vmul.f32 %v4719, %v4719
    %v4752 = vmul.f32 %v4720, %v4720
    %v4753 = vmul.f32 %v4721, %v4721
    %v4754 = vmul.f32 %v4722, %v4722
    %v4755 = vmul.f32 %v4723, %v4723
    %v4756 = vmul.f32 %v4724, %v4724
    %v4757 = vmul.f32 %v4725, %v4725
    %v4758 = vmul.f32 %v4726, %v4726
    %v4759 = vmul.f32 %v4727, %v4727
    %v4760 = vmul.f32 %v4728, %v4728
    %v4761 = vmul.f32 %v4729, %v4729
    %v4762 = vmul.f32 %v4730, %v4730
    %v4763 = vmul.f32 %v4731, %v4731
    %v4764 = vmul.f32 %v4732, %v4732
    %v4765 = vmul.f32 %v4733, %v4733
    %v4766 = vmul.f32 %v4734, %v4734
    %v4767 = vmul.f32 %v4735, %v4735
    %v4768 = vmul.f32 %v4736, %v4736
    %v4769 = vmul.f32 %v4737, %v4737
    %v4770 = vmul.f32 %v4738, %v4738
    %v4771 = vmul.f32 %v4739, %v4739
    %v4772 = vmul.f32 %v4740, %v4740
    %v4773 = vmul.f32 %v4741, %v4741
    %v4774 = vmul.f32 %v4742, %v4742
    %v4775 = vmul.f32 %v4743, %v4743
    %v4776 = vmul.f32 %v4744, %v4744
    %v4777 = vmul.f32 %v4745, %v4745
    %v4778 = vmul.f32 %v4746, %v4746
    %v4779 = vmul.f32 %v4747, %v4747
    %v4780 = vsel %vm2573, %v4748, 0.0
    %v4781 = vsel %vm2573, %v4749, 0.0
    %v4782 = vadd.f32 %v4780, %v4781
    %v4783 = vsel %vm2573, %v4750, 0.0
    %v4784 = vadd.f32 %v4782, %v4783
    %v4785 = vsel %vm2573, %v4751, 0.0
    %v4786 = vadd.f32 %v4784, %v4785
    %v4787 = vsel %vm2573, %v4752, 0.0
    %v4788 = vadd.f32 %v4786, %v4787
    %v4789 = vsel %vm2573, %v4753, 0.0
    %v4790 = vadd.f32 %v4788, %v4789
    %v4791 = vsel %vm2573, %v4754, 0.0
    %v4792 = vadd.f32 %v4790, %v4791
    %v4793 = vsel %vm2573, %v4755, 0.0
    %v4794 = vadd.f32 %v4792, %v4793
    %v4795 = vsel %vm2573, %v4756, 0.0
    %v4796 = vadd.f32 %v4794, %v4795
    %v4797 = vsel %vm2573, %v4757, 0.0
    %v4798 = vadd.f32 %v4796, %v4797
    %v4799 = vsel %vm2573, %v4758, 0.0
    %v4800 = vadd.f32 %v4798, %v4799
    %v4801 = vsel %vm2573, %v4759, 0.0
    %v4802 = vadd.f32 %v4800, %v4801
    %v4803 = vsel %vm2573, %v4760, 0.0
    %v4804 = vadd.f32 %v4802, %v4803
    %v4805 = vsel %vm2573, %v4761, 0.0
    %v4806 = vadd.f32 %v4804, %v4805
    %v4807 = vsel %vm2573, %v4762, 0.0
    %v4808 = vadd.f32 %v4806, %v4807
    %v4809 = vsel %vm2573, %v4763, 0.0
    %v4810 = vadd.f32 %v4808, %v4809
    %v4811 = vsel %vm2573, %v4764, 0.0
    %v4812 = vadd.f32 %v4810, %v4811
    %v4813 = vsel %vm2573, %v4765, 0.0
    %v4814 = vadd.f32 %v4812, %v4813
    %v4815 = vsel %vm2573, %v4766, 0.0
    %v4816 = vadd.f32 %v4814, %v4815
    %v4817 = vsel %vm2573, %v4767, 0.0
    %v4818 = vadd.f32 %v4816, %v4817
    %v4819 = vsel %vm2573, %v4768, 0.0
    %v4820 = vadd.f32 %v4818, %v4819
    %v4821 = vsel %vm2573, %v4769, 0.0
    %v4822 = vadd.f32 %v4820, %v4821
    %v4823 = vsel %vm2573, %v4770, 0.0
    %v4824 = vadd.f32 %v4822, %v4823
    %v4825 = vsel %vm2573, %v4771, 0.0
    %v4826 = vadd.f32 %v4824, %v4825
    %v4827 = vsel %vm2573, %v4772, 0.0
    %v4828 = vadd.f32 %v4826, %v4827
    %v4829 = vsel %vm2573, %v4773, 0.0
    %v4830 = vadd.f32 %v4828, %v4829
    %v4831 = vsel %vm2573, %v4774, 0.0
    %v4832 = vadd.f32 %v4830, %v4831
    %v4833 = vsel %vm2573, %v4775, 0.0
    %v4834 = vadd.f32 %v4832, %v4833
    %v4835 = vsel %vm2573, %v4776, 0.0
    %v4836 = vadd.f32 %v4834, %v4835
    %v4837 = vsel %vm2573, %v4777, 0.0
    %v4838 = vadd.f32 %v4836, %v4837
    %v4839 = vsel %vm2573, %v4778, 0.0
    %v4840 = vadd.f32 %v4838, %v4839
    %v4841 = vsel %vm2573, %v4779, 0.0
    %v4842 = vadd.f32 %v4840, %v4841
    %v4843 = vrot.slane %v4842, 4
    %v4844 = vadd.f32 %v4842, %v4843
    %v4845 = vrot.slane %v4844, 2
    %v4846 = vadd.f32 %v4844, %v4845
    %v4847 = vrot.slane %v4846, 1
    %v4848 = vadd.f32 %v4846, %v4847
    %v4849 = vmul.f32 %v4848, 0.004166667
    %v4850 = vld [vmem:[%s9] sm:$0x1]
    %v4851 = vadd.f32 %v4849, 1e-05
    %v4852 = vrsqrt.pop %v4851
    %v4853 = vmul.f32 %v4850, %v4852
    %v4854 = vld [vmem:[%s10] sm:$0x1]
    %v4855 = vmul.f32 %v4683, %v4853
    %v4856 = vsub.f32 %v4854, %v4855
    %v4858 = vlaneseq
    %v4859 = vshrl.u32 %v4858, 7
    %v4860 = vsub.s32 0, %v4859
    %v4861 = vrot.slane %v4853, %v4860
    %v4863 = vmul.f32 %v4360, %v4861
    %v4864 = vmul.f32 %v4365, %v4861
    %v4865 = vmul.f32 %v4370, %v4861
    %v4866 = vmul.f32 %v4375, %v4861
    %v4867 = vmul.f32 %v4380, %v4861
    %v4868 = vmul.f32 %v4385, %v4861
    %v4869 = vmul.f32 %v4390, %v4861
    %v4870 = vmul.f32 %v4395, %v4861
    %v4871 = vmul.f32 %v4400, %v4861
    %v4872 = vmul.f32 %v4405, %v4861
    %v4873 = vmul.f32 %v4410, %v4861
    %v4874 = vmul.f32 %v4415, %v4861
    %v4875 = vmul.f32 %v4420, %v4861
    %v4876 = vmul.f32 %v4425, %v4861
    %v4877 = vmul.f32 %v4430, %v4861
    %v4878 = vmul.f32 %v4435, %v4861
    %v4879 = vmul.f32 %v4440, %v4861
    %v4880 = vmul.f32 %v4445, %v4861
    %v4881 = vmul.f32 %v4450, %v4861
    %v4882 = vmul.f32 %v4455, %v4861
    %v4883 = vmul.f32 %v4460, %v4861
    %v4884 = vmul.f32 %v4465, %v4861
    %v4885 = vmul.f32 %v4470, %v4861
    %v4886 = vmul.f32 %v4475, %v4861
    %v4887 = vmul.f32 %v4480, %v4861
    %v4888 = vmul.f32 %v4485, %v4861
    %v4889 = vmul.f32 %v4490, %v4861
    %v4890 = vmul.f32 %v4495, %v4861
    %v4891 = vmul.f32 %v4500, %v4861
    %v4892 = vmul.f32 %v4505, %v4861
    %v4893 = vmul.f32 %v4510, %v4861
    %v4894 = vmul.f32 %v4515, %v4861
    %v4896 = vlaneseq
    %v4897 = vshrl.u32 %v4896, 7
    %v4898 = vsub.s32 0, %v4897
    %v4899 = vrot.slane %v4856, %v4898
    %v4901 = vadd.f32 %v4863, %v4899
    %v4902 = vadd.f32 %v4864, %v4899
    %v4903 = vadd.f32 %v4865, %v4899
    %v4904 = vadd.f32 %v4866, %v4899
    %v4905 = vadd.f32 %v4867, %v4899
    %v4906 = vadd.f32 %v4868, %v4899
    %v4907 = vadd.f32 %v4869, %v4899
    %v4908 = vadd.f32 %v4870, %v4899
    %v4909 = vadd.f32 %v4871, %v4899
    %v4910 = vadd.f32 %v4872, %v4899
    %v4911 = vadd.f32 %v4873, %v4899
    %v4912 = vadd.f32 %v4874, %v4899
    %v4913 = vadd.f32 %v4875, %v4899
    %v4914 = vadd.f32 %v4876, %v4899
    %v4915 = vadd.f32 %v4877, %v4899
    %v4916 = vadd.f32 %v4878, %v4899
    %v4917 = vadd.f32 %v4879, %v4899
    %v4918 = vadd.f32 %v4880, %v4899
    %v4919 = vadd.f32 %v4881, %v4899
    %v4920 = vadd.f32 %v4882, %v4899
    %v4921 = vadd.f32 %v4883, %v4899
    %v4922 = vadd.f32 %v4884, %v4899
    %v4923 = vadd.f32 %v4885, %v4899
    %v4924 = vadd.f32 %v4886, %v4899
    %v4925 = vadd.f32 %v4887, %v4899
    %v4926 = vadd.f32 %v4888, %v4899
    %v4927 = vadd.f32 %v4889, %v4899
    %v4928 = vadd.f32 %v4890, %v4899
    %v4929 = vadd.f32 %v4891, %v4899
    %v4930 = vadd.f32 %v4892, %v4899
    %v4931 = vadd.f32 %v4893, %v4899
    %v4932 = vadd.f32 %v4894, %v4899
    %v4933 = vmax.f32 %v4901, 0.0
    %v4934 = vmax.f32 %v4902, 0.0
    %v4935 = vmax.f32 %v4903, 0.0
    %v4936 = vmax.f32 %v4904, 0.0
    %v4937 = vmax.f32 %v4905, 0.0
    %v4938 = vmax.f32 %v4906, 0.0
    %v4939 = vmax.f32 %v4907, 0.0
    %v4940 = vmax.f32 %v4908, 0.0
    %v4941 = vmax.f32 %v4909, 0.0
    %v4942 = vmax.f32 %v4910, 0.0
    %v4943 = vmax.f32 %v4911, 0.0
    %v4944 = vmax.f32 %v4912, 0.0
    %v4945 = vmax.f32 %v4913, 0.0
    %v4946 = vmax.f32 %v4914, 0.0
    %v4947 = vmax.f32 %v4915, 0.0
    %v4948 = vmax.f32 %v4916, 0.0
    %v4949 = vmax.f32 %v4917, 0.0
    %v4950 = vmax.f32 %v4918, 0.0
    %v4951 = vmax.f32 %v4919, 0.0
    %v4952 = vmax.f32 %v4920, 0.0
    %v4953 = vmax.f32 %v4921, 0.0
    %v4954 = vmax.f32 %v4922, 0.0
    %v4955 = vmax.f32 %v4923, 0.0
    %v4956 = vmax.f32 %v4924, 0.0
    %v4957 = vmax.f32 %v4925, 0.0
    %v4958 = vmax.f32 %v4926, 0.0
    %v4959 = vmax.f32 %v4927, 0.0
    %v4960 = vmax.f32 %v4928, 0.0
    %v4961 = vmax.f32 %v4929, 0.0
    %v4962 = vmax.f32 %v4930, 0.0
    %v4963 = vmax.f32 %v4931, 0.0
    %v4964 = vmax.f32 %v4932, 0.0
    %v4965 = vsel %vm4550, %v4933, 0.0
    %v4966 = vsel %vm4551, %v4934, 0.0
    %v4967 = vsel %vm4552, %v4935, 0.0
    %v4968 = vsel %vm4553, %v4936, 0.0
    %v4969 = vsel %vm4554, %v4937, 0.0
    %v4970 = vsel %vm4555, %v4938, 0.0
    %v4971 = vsel %vm4556, %v4939, 0.0
    %v4972 = vsel %vm4557, %v4940, 0.0
    %v4973 = vsel %vm4558, %v4941, 0.0
    %v4974 = vsel %vm4559, %v4942, 0.0
    %v4975 = vsel %vm4560, %v4943, 0.0
    %v4976 = vsel %vm4561, %v4944, 0.0
    %v4977 = vsel %vm4562, %v4945, 0.0
    %v4978 = vsel %vm4563, %v4946, 0.0
    %v4979 = vsel %vm4564, %v4947, 0.0
    %v4980 = vsel %vm4565, %v4948, 0.0
    %v4981 = vsel %vm4566, %v4949, 0.0
    %v4982 = vsel %vm4567, %v4950, 0.0
    %v4983 = vsel %vm4568, %v4951, 0.0
    %v4984 = vsel %vm4569, %v4952, 0.0
    %v4985 = vsel %vm4570, %v4953, 0.0
    %v4986 = vsel %vm4571, %v4954, 0.0
    %v4987 = vsel %vm4572, %v4955, 0.0
    %v4988 = vsel %vm4573, %v4956, 0.0
    %v4989 = vsel %vm4574, %v4957, 0.0
    %v4990 = vsel %vm4575, %v4958, 0.0
    %v4991 = vsel %vm4576, %v4959, 0.0
    %v4992 = vsel %vm4577, %v4960, 0.0
    %v4993 = vsel %vm4578, %v4961, 0.0
    %v4994 = vsel %vm4579, %v4962, 0.0
    %v4995 = vsel %vm4580, %v4963, 0.0
    %v4996 = vsel %vm4581, %v4964, 0.0
    %4997 = vst.msk [vmem:[#allocation3] sm:$0xff] %vm2573, 0.0
    %4998 = vst.msk [vmem:[#allocation3 + $0x8] sm:$0xff] %vm2573, %v4965
    %4999 = vst.msk [vmem:[#allocation3 + $0x10] sm:$0xff] %vm2573, %v4966
    %5000 = vst.msk [vmem:[#allocation3 + $0x18] sm:$0xff] %vm2573, %v4967
    %5001 = vst.msk [vmem:[#allocation3 + $0x20] sm:$0xff] %vm2573, %v4968
    %5002 = vst.msk [vmem:[#allocation3 + $0x28] sm:$0xff] %vm2573, %v4969
    %5003 = vst.msk [vmem:[#allocation3 + $0x30] sm:$0xff] %vm2573, %v4970
    %5004 = vst.msk [vmem:[#allocation3 + $0x38] sm:$0xff] %vm2573, %v4971
    %5005 = vst.msk [vmem:[#allocation3 + $0x40] sm:$0xff] %vm2573, %v4972
    %5006 = vst.msk [vmem:[#allocation3 + $0x48] sm:$0xff] %vm2573, %v4973
    %5007 = vst.msk [vmem:[#allocation3 + $0x50] sm:$0xff] %vm2573, %v4974
    %5008 = vst.msk [vmem:[#allocation3 + $0x58] sm:$0xff] %vm2573, %v4975
    %5009 = vst.msk [vmem:[#allocation3 + $0x60] sm:$0xff] %vm2573, %v4976
    %5010 = vst.msk [vmem:[#allocation3 + $0x68] sm:$0xff] %vm2573, %v4977
    %5011 = vst.msk [vmem:[#allocation3 + $0x70] sm:$0xff] %vm2573, %v4978
    %5012 = vst.msk [vmem:[#allocation3 + $0x78] sm:$0xff] %vm2573, %v4979
    %5013 = vst.msk [vmem:[#allocation3 + $0x80] sm:$0xff] %vm2573, %v4980
    %5014 = vst.msk [vmem:[#allocation3 + $0x88] sm:$0xff] %vm2573, %v4981
    %5015 = vst.msk [vmem:[#allocation3 + $0x90] sm:$0xff] %vm2573, %v4982
    %5016 = vst.msk [vmem:[#allocation3 + $0x98] sm:$0xff] %vm2573, %v4983
    %5017 = vst.msk [vmem:[#allocation3 + $0xa0] sm:$0xff] %vm2573, %v4984
    %5018 = vst.msk [vmem:[#allocation3 + $0xa8] sm:$0xff] %vm2573, %v4985
    %5019 = vst.msk [vmem:[#allocation3 + $0xb0] sm:$0xff] %vm2573, %v4986
    %5020 = vst.msk [vmem:[#allocation3 + $0xb8] sm:$0xff] %vm2573, %v4987
    %5021 = vst.msk [vmem:[#allocation3 + $0xc0] sm:$0xff] %vm2573, %v4988
    %5022 = vst.msk [vmem:[#allocation3 + $0xc8] sm:$0xff] %vm2573, %v4989
    %5023 = vst.msk [vmem:[#allocation3 + $0xd0] sm:$0xff] %vm2573, %v4990
    %5024 = vst.msk [vmem:[#allocation3 + $0xd8] sm:$0xff] %vm2573, %v4991
    %5025 = vst.msk [vmem:[#allocation3 + $0xe0] sm:$0xff] %vm2573, %v4992
    %5026 = vst.msk [vmem:[#allocation3 + $0xe8] sm:$0xff] %vm2573, %v4993
    %5027 = vst.msk [vmem:[#allocation3 + $0xf0] sm:$0xff] %vm2573, %v4994
    %5028 = vst.msk [vmem:[#allocation3 + $0xf8] sm:$0xff] %vm2573, %v4995
    %5029 = vst.msk [vmem:[#allocation3 + $0x100] sm:$0xff] %vm2573, %v4996
    %5030 = vst.msk [vmem:[#allocation3 + $0x108] sm:$0xff] %vm2573, 0.0
    %s5031 = scalar_lea.vmem [#allocation3], 6
    %v5032 = vld [vmem:[%s5031] ss:$2 sm:$0xff]
    %s5033 = scalar_lea.vmem [#allocation3], 22
    %v5034 = vld [vmem:[%s5033] ss:$2 sm:$0xff]
    %s5035 = scalar_lea.vmem [#allocation3], 38
    %v5036 = vld [vmem:[%s5035] ss:$2 sm:$0xff]
    %s5037 = scalar_lea.vmem [#allocation3], 54
    %v5038 = vld [vmem:[%s5037] ss:$2 sm:$0xff]
    %s5039 = scalar_lea.vmem [#allocation3], 70
    %v5040 = vld [vmem:[%s5039] ss:$2 sm:$0xff]
    %s5041 = scalar_lea.vmem [#allocation3], 86
    %v5042 = vld [vmem:[%s5041] ss:$2 sm:$0xff]
    %s5043 = scalar_lea.vmem [#allocation3], 102
    %v5044 = vld [vmem:[%s5043] ss:$2 sm:$0xff]
    %s5045 = scalar_lea.vmem [#allocation3], 118
    %v5046 = vld [vmem:[%s5045] ss:$2 sm:$0xff]
    %s5047 = scalar_lea.vmem [#allocation3], 134
    %v5048 = vld [vmem:[%s5047] ss:$2 sm:$0xff]
    %s5049 = scalar_lea.vmem [#allocation3], 150
    %v5050 = vld [vmem:[%s5049] ss:$2 sm:$0xff]
    %s5051 = scalar_lea.vmem [#allocation3], 166
    %v5052 = vld [vmem:[%s5051] ss:$2 sm:$0xff]
    %s5053 = scalar_lea.vmem [#allocation3], 182
    %v5054 = vld [vmem:[%s5053] ss:$2 sm:$0xff]
    %s5055 = scalar_lea.vmem [#allocation3], 198
    %v5056 = vld [vmem:[%s5055] ss:$2 sm:$0xff]
    %s5057 = scalar_lea.vmem [#allocation3], 214
    %v5058 = vld [vmem:[%s5057] ss:$2 sm:$0xff]
    %s5059 = scalar_lea.vmem [#allocation3], 230
    %v5060 = vld [vmem:[%s5059] ss:$2 sm:$0xff]
    %s5061 = scalar_lea.vmem [#allocation3], 246
    %v5062 = vld [vmem:[%s5061] ss:$2 sm:$0xff]
    %s5063 = scalar_lea.vmem [#allocation3], 7
    %v5064 = vld [vmem:[%s5063] ss:$2 sm:$0xff]
    %s5065 = scalar_lea.vmem [#allocation3], 23
    %v5066 = vld [vmem:[%s5065] ss:$2 sm:$0xff]
    %s5067 = scalar_lea.vmem [#allocation3], 39
    %v5068 = vld [vmem:[%s5067] ss:$2 sm:$0xff]
    %s5069 = scalar_lea.vmem [#allocation3], 55
    %v5070 = vld [vmem:[%s5069] ss:$2 sm:$0xff]
    %s5071 = scalar_lea.vmem [#allocation3], 71
    %v5072 = vld [vmem:[%s5071] ss:$2 sm:$0xff]
    %s5073 = scalar_lea.vmem [#allocation3], 87
    %v5074 = vld [vmem:[%s5073] ss:$2 sm:$0xff]
    %s5075 = scalar_lea.vmem [#allocation3], 103
    %v5076 = vld [vmem:[%s5075] ss:$2 sm:$0xff]
    %s5077 = scalar_lea.vmem [#allocation3], 119
    %v5078 = vld [vmem:[%s5077] ss:$2 sm:$0xff]
    %s5079 = scalar_lea.vmem [#allocation3], 135
    %v5080 = vld [vmem:[%s5079] ss:$2 sm:$0xff]
    %s5081 = scalar_lea.vmem [#allocation3], 151
    %v5082 = vld [vmem:[%s5081] ss:$2 sm:$0xff]
    %s5083 = scalar_lea.vmem [#allocation3], 167
    %v5084 = vld [vmem:[%s5083] ss:$2 sm:$0xff]
    %s5085 = scalar_lea.vmem [#allocation3], 183
    %v5086 = vld [vmem:[%s5085] ss:$2 sm:$0xff]
    %s5087 = scalar_lea.vmem [#allocation3], 199
    %v5088 = vld [vmem:[%s5087] ss:$2 sm:$0xff]
    %s5089 = scalar_lea.vmem [#allocation3], 215
    %v5090 = vld [vmem:[%s5089] ss:$2 sm:$0xff]
    %s5091 = scalar_lea.vmem [#allocation3], 231
    %v5092 = vld [vmem:[%s5091] ss:$2 sm:$0xff]
    %s5093 = scalar_lea.vmem [#allocation3], 247
    %v5094 = vld [vmem:[%s5093] ss:$2 sm:$0xff]
    %s5095 = scalar_lea.vmem [#allocation3], 8
    %v5096 = vld [vmem:[%s5095] ss:$2 sm:$0xff]
    %s5097 = scalar_lea.vmem [#allocation3], 24
    %v5098 = vld [vmem:[%s5097] ss:$2 sm:$0xff]
    %s5099 = scalar_lea.vmem [#allocation3], 40
    %v5100 = vld [vmem:[%s5099] ss:$2 sm:$0xff]
    %s5101 = scalar_lea.vmem [#allocation3], 56
    %v5102 = vld [vmem:[%s5101] ss:$2 sm:$0xff]
    %s5103 = scalar_lea.vmem [#allocation3], 72
    %v5104 = vld [vmem:[%s5103] ss:$2 sm:$0xff]
    %s5105 = scalar_lea.vmem [#allocation3], 88
    %v5106 = vld [vmem:[%s5105] ss:$2 sm:$0xff]
    %s5107 = scalar_lea.vmem [#allocation3], 104
    %v5108 = vld [vmem:[%s5107] ss:$2 sm:$0xff]
    %s5109 = scalar_lea.vmem [#allocation3], 120
    %v5110 = vld [vmem:[%s5109] ss:$2 sm:$0xff]
    %s5111 = scalar_lea.vmem [#allocation3], 136
    %v5112 = vld [vmem:[%s5111] ss:$2 sm:$0xff]
    %s5113 = scalar_lea.vmem [#allocation3], 152
    %v5114 = vld [vmem:[%s5113] ss:$2 sm:$0xff]
    %s5115 = scalar_lea.vmem [#allocation3], 168
    %v5116 = vld [vmem:[%s5115] ss:$2 sm:$0xff]
    %s5117 = scalar_lea.vmem [#allocation3], 184
    %v5118 = vld [vmem:[%s5117] ss:$2 sm:$0xff]
    %s5119 = scalar_lea.vmem [#allocation3], 200
    %v5120 = vld [vmem:[%s5119] ss:$2 sm:$0xff]
    %s5121 = scalar_lea.vmem [#allocation3], 216
    %v5122 = vld [vmem:[%s5121] ss:$2 sm:$0xff]
    %s5123 = scalar_lea.vmem [#allocation3], 232
    %v5124 = vld [vmem:[%s5123] ss:$2 sm:$0xff]
    %s5125 = scalar_lea.vmem [#allocation3], 248
    %v5126 = vld [vmem:[%s5125] ss:$2 sm:$0xff]
    %s5127 = scalar_lea.vmem [#allocation3], 9
    %v5128 = vld [vmem:[%s5127] ss:$2 sm:$0xff]
    %s5129 = scalar_lea.vmem [#allocation3], 25
    %v5130 = vld [vmem:[%s5129] ss:$2 sm:$0xff]
    %s5131 = scalar_lea.vmem [#allocation3], 41
    %v5132 = vld [vmem:[%s5131] ss:$2 sm:$0xff]
    %s5133 = scalar_lea.vmem [#allocation3], 57
    %v5134 = vld [vmem:[%s5133] ss:$2 sm:$0xff]
    %s5135 = scalar_lea.vmem [#allocation3], 73
    %v5136 = vld [vmem:[%s5135] ss:$2 sm:$0xff]
    %s5137 = scalar_lea.vmem [#allocation3], 89
    %v5138 = vld [vmem:[%s5137] ss:$2 sm:$0xff]
    %s5139 = scalar_lea.vmem [#allocation3], 105
    %v5140 = vld [vmem:[%s5139] ss:$2 sm:$0xff]
    %s5141 = scalar_lea.vmem [#allocation3], 121
    %v5142 = vld [vmem:[%s5141] ss:$2 sm:$0xff]
    %s5143 = scalar_lea.vmem [#allocation3], 137
    %v5144 = vld [vmem:[%s5143] ss:$2 sm:$0xff]
    %s5145 = scalar_lea.vmem [#allocation3], 153
    %v5146 = vld [vmem:[%s5145] ss:$2 sm:$0xff]
    %s5147 = scalar_lea.vmem [#allocation3], 169
    %v5148 = vld [vmem:[%s5147] ss:$2 sm:$0xff]
    %s5149 = scalar_lea.vmem [#allocation3], 185
    %v5150 = vld [vmem:[%s5149] ss:$2 sm:$0xff]
    %s5151 = scalar_lea.vmem [#allocation3], 201
    %v5152 = vld [vmem:[%s5151] ss:$2 sm:$0xff]
    %s5153 = scalar_lea.vmem [#allocation3], 217
    %v5154 = vld [vmem:[%s5153] ss:$2 sm:$0xff]
    %s5155 = scalar_lea.vmem [#allocation3], 233
    %v5156 = vld [vmem:[%s5155] ss:$2 sm:$0xff]
    %s5157 = scalar_lea.vmem [#allocation3], 249
    %v5158 = vld [vmem:[%s5157] ss:$2 sm:$0xff]
    %s5159 = scalar_lea.vmem [#allocation3], 10
    %v5160 = vld [vmem:[%s5159] ss:$2 sm:$0xff]
    %s5161 = scalar_lea.vmem [#allocation3], 26
    %v5162 = vld [vmem:[%s5161] ss:$2 sm:$0xff]
    %s5163 = scalar_lea.vmem [#allocation3], 42
    %v5164 = vld [vmem:[%s5163] ss:$2 sm:$0xff]
    %s5165 = scalar_lea.vmem [#allocation3], 58
    %v5166 = vld [vmem:[%s5165] ss:$2 sm:$0xff]
    %s5167 = scalar_lea.vmem [#allocation3], 74
    %v5168 = vld [vmem:[%s5167] ss:$2 sm:$0xff]
    %s5169 = scalar_lea.vmem [#allocation3], 90
    %v5170 = vld [vmem:[%s5169] ss:$2 sm:$0xff]
    %s5171 = scalar_lea.vmem [#allocation3], 106
    %v5172 = vld [vmem:[%s5171] ss:$2 sm:$0xff]
    %s5173 = scalar_lea.vmem [#allocation3], 122
    %v5174 = vld [vmem:[%s5173] ss:$2 sm:$0xff]
    %s5175 = scalar_lea.vmem [#allocation3], 138
    %v5176 = vld [vmem:[%s5175] ss:$2 sm:$0xff]
    %s5177 = scalar_lea.vmem [#allocation3], 154
    %v5178 = vld [vmem:[%s5177] ss:$2 sm:$0xff]
    %s5179 = scalar_lea.vmem [#allocation3], 170
    %v5180 = vld [vmem:[%s5179] ss:$2 sm:$0xff]
    %s5181 = scalar_lea.vmem [#allocation3], 186
    %v5182 = vld [vmem:[%s5181] ss:$2 sm:$0xff]
    %s5183 = scalar_lea.vmem [#allocation3], 202
    %v5184 = vld [vmem:[%s5183] ss:$2 sm:$0xff]
    %s5185 = scalar_lea.vmem [#allocation3], 218
    %v5186 = vld [vmem:[%s5185] ss:$2 sm:$0xff]
    %s5187 = scalar_lea.vmem [#allocation3], 234
    %v5188 = vld [vmem:[%s5187] ss:$2 sm:$0xff]
    %s5189 = scalar_lea.vmem [#allocation3], 250
    %v5190 = vld [vmem:[%s5189] ss:$2 sm:$0xff]
    %5207 = vrot.lane.b32.xlu0 %v5064, 32
    %v5208 = vpop.permute.xlu0 %5207
    %5209 = vrot.lane.b32.xlu0 %v5066, 32
    %v5210 = vpop.permute.xlu0 %5209
    %5211 = vrot.lane.b32.xlu0 %v5068, 32
    %v5212 = vpop.permute.xlu0 %5211
    %5213 = vrot.lane.b32.xlu0 %v5070, 32
    %v5214 = vpop.permute.xlu0 %5213
    %5215 = vrot.lane.b32.xlu0 %v5072, 32
    %v5216 = vpop.permute.xlu0 %5215
    %5217 = vrot.lane.b32.xlu0 %v5074, 32
    %v5218 = vpop.permute.xlu0 %5217
    %5219 = vrot.lane.b32.xlu0 %v5076, 32
    %v5220 = vpop.permute.xlu0 %5219
    %5221 = vrot.lane.b32.xlu0 %v5078, 32
    %v5222 = vpop.permute.xlu0 %5221
    %5223 = vrot.lane.b32.xlu0 %v5080, 32
    %v5224 = vpop.permute.xlu0 %5223
    %5225 = vrot.lane.b32.xlu0 %v5082, 32
    %v5226 = vpop.permute.xlu0 %5225
    %5227 = vrot.lane.b32.xlu0 %v5084, 32
    %v5228 = vpop.permute.xlu0 %5227
    %5229 = vrot.lane.b32.xlu0 %v5086, 32
    %v5230 = vpop.permute.xlu0 %5229
    %5231 = vrot.lane.b32.xlu0 %v5088, 32
    %v5232 = vpop.permute.xlu0 %5231
    %5233 = vrot.lane.b32.xlu0 %v5090, 32
    %v5234 = vpop.permute.xlu0 %5233
    %5235 = vrot.lane.b32.xlu0 %v5092, 32
    %v5236 = vpop.permute.xlu0 %5235
    %5237 = vrot.lane.b32.xlu0 %v5094, 32
    %v5238 = vpop.permute.xlu0 %5237
    %5271 = vrot.lane.b32.xlu0 %v5096, 64
    %v5272 = vpop.permute.xlu0 %5271
    %5273 = vrot.lane.b32.xlu0 %v5098, 64
    %v5274 = vpop.permute.xlu0 %5273
    %5275 = vrot.lane.b32.xlu0 %v5100, 64
    %v5276 = vpop.permute.xlu0 %5275
    %5277 = vrot.lane.b32.xlu0 %v5102, 64
    %v5278 = vpop.permute.xlu0 %5277
    %5279 = vrot.lane.b32.xlu0 %v5104, 64
    %v5280 = vpop.permute.xlu0 %5279
    %5281 = vrot.lane.b32.xlu0 %v5106, 64
    %v5282 = vpop.permute.xlu0 %5281
    %5283 = vrot.lane.b32.xlu0 %v5108, 64
    %v5284 = vpop.permute.xlu0 %5283
    %5285 = vrot.lane.b32.xlu0 %v5110, 64
    %v5286 = vpop.permute.xlu0 %5285
    %5287 = vrot.lane.b32.xlu0 %v5112, 64
    %v5288 = vpop.permute.xlu0 %5287
    %5289 = vrot.lane.b32.xlu0 %v5114, 64
    %v5290 = vpop.permute.xlu0 %5289
    %5291 = vrot.lane.b32.xlu0 %v5116, 64
    %v5292 = vpop.permute.xlu0 %5291
    %5293 = vrot.lane.b32.xlu0 %v5118, 64
    %v5294 = vpop.permute.xlu0 %5293
    %5295 = vrot.lane.b32.xlu0 %v5120, 64
    %v5296 = vpop.permute.xlu0 %5295
    %5297 = vrot.lane.b32.xlu0 %v5122, 64
    %v5298 = vpop.permute.xlu0 %5297
    %5299 = vrot.lane.b32.xlu0 %v5124, 64
    %v5300 = vpop.permute.xlu0 %5299
    %5301 = vrot.lane.b32.xlu0 %v5126, 64
    %v5302 = vpop.permute.xlu0 %5301
    %5335 = vrot.lane.b32.xlu0 %v5128, 96
    %v5336 = vpop.permute.xlu0 %5335
    %5337 = vrot.lane.b32.xlu0 %v5130, 96
    %v5338 = vpop.permute.xlu0 %5337
    %5339 = vrot.lane.b32.xlu0 %v5132, 96
    %v5340 = vpop.permute.xlu0 %5339
    %5341 = vrot.lane.b32.xlu0 %v5134, 96
    %v5342 = vpop.permute.xlu0 %5341
    %5343 = vrot.lane.b32.xlu0 %v5136, 96
    %v5344 = vpop.permute.xlu0 %5343
    %5345 = vrot.lane.b32.xlu0 %v5138, 96
    %v5346 = vpop.permute.xlu0 %5345
    %5347 = vrot.lane.b32.xlu0 %v5140, 96
    %v5348 = vpop.permute.xlu0 %5347
    %5349 = vrot.lane.b32.xlu0 %v5142, 96
    %v5350 = vpop.permute.xlu0 %5349
    %5351 = vrot.lane.b32.xlu0 %v5144, 96
    %v5352 = vpop.permute.xlu0 %5351
    %5353 = vrot.lane.b32.xlu0 %v5146, 96
    %v5354 = vpop.permute.xlu0 %5353
    %5355 = vrot.lane.b32.xlu0 %v5148, 96
    %v5356 = vpop.permute.xlu0 %5355
    %5357 = vrot.lane.b32.xlu0 %v5150, 96
    %v5358 = vpop.permute.xlu0 %5357
    %5359 = vrot.lane.b32.xlu0 %v5152, 96
    %v5360 = vpop.permute.xlu0 %5359
    %5361 = vrot.lane.b32.xlu0 %v5154, 96
    %v5362 = vpop.permute.xlu0 %5361
    %5363 = vrot.lane.b32.xlu0 %v5156, 96
    %v5364 = vpop.permute.xlu0 %5363
    %5365 = vrot.lane.b32.xlu0 %v5158, 96
    %v5366 = vpop.permute.xlu0 %5365
    %v5383 = vsel %vm2573, %v5032, %v5208
    %v5384 = vsel %vm2573, %v5034, %v5210
    %v5385 = vsel %vm2573, %v5036, %v5212
    %v5386 = vsel %vm2573, %v5038, %v5214
    %v5387 = vsel %vm2573, %v5040, %v5216
    %v5388 = vsel %vm2573, %v5042, %v5218
    %v5389 = vsel %vm2573, %v5044, %v5220
    %v5390 = vsel %vm2573, %v5046, %v5222
    %v5391 = vsel %vm2573, %v5048, %v5224
    %v5392 = vsel %vm2573, %v5050, %v5226
    %v5393 = vsel %vm2573, %v5052, %v5228
    %v5394 = vsel %vm2573, %v5054, %v5230
    %v5395 = vsel %vm2573, %v5056, %v5232
    %v5396 = vsel %vm2573, %v5058, %v5234
    %v5397 = vsel %vm2573, %v5060, %v5236
    %v5398 = vsel %vm2573, %v5062, %v5238
    %v5399 = vsel %vm4111, %v5383, %v5272
    %v5400 = vsel %vm4111, %v5384, %v5274
    %v5401 = vsel %vm4111, %v5385, %v5276
    %v5402 = vsel %vm4111, %v5386, %v5278
    %v5403 = vsel %vm4111, %v5387, %v5280
    %v5404 = vsel %vm4111, %v5388, %v5282
    %v5405 = vsel %vm4111, %v5389, %v5284
    %v5406 = vsel %vm4111, %v5390, %v5286
    %v5407 = vsel %vm4111, %v5391, %v5288
    %v5408 = vsel %vm4111, %v5392, %v5290
    %v5409 = vsel %vm4111, %v5393, %v5292
    %v5410 = vsel %vm4111, %v5394, %v5294
    %v5411 = vsel %vm4111, %v5395, %v5296
    %v5412 = vsel %vm4111, %v5396, %v5298
    %v5413 = vsel %vm4111, %v5397, %v5300
    %v5414 = vsel %vm4111, %v5398, %v5302
    %v5415 = vsel %vm4144, %v5399, %v5336
    %v5416 = vsel %vm4144, %v5400, %v5338
    %v5417 = vsel %vm4144, %v5401, %v5340
    %v5418 = vsel %vm4144, %v5402, %v5342
    %v5419 = vsel %vm4144, %v5403, %v5344
    %v5420 = vsel %vm4144, %v5404, %v5346
    %v5421 = vsel %vm4144, %v5405, %v5348
    %v5422 = vsel %vm4144, %v5406, %v5350
    %v5423 = vsel %vm4144, %v5407, %v5352
    %v5424 = vsel %vm4144, %v5408, %v5354
    %v5425 = vsel %vm4144, %v5409, %v5356
    %v5426 = vsel %vm4144, %v5410, %v5358
    %v5427 = vsel %vm4144, %v5411, %v5360
    %v5428 = vsel %vm4144, %v5412, %v5362
    %v5429 = vsel %vm4144, %v5413, %v5364
    %v5430 = vsel %vm4144, %v5414, %v5366
    %v5431 = vld [vmem:[%s3] sm:$0xff]
    %v5432 = vld [vmem:[%s3 + $0x8] sm:$0xff]
    %v5433 = vld [vmem:[%s3 + $0x10] sm:$0xff]
    %v5434 = vld [vmem:[%s3 + $0x18] sm:$0xff]
    %v5435 = vld [vmem:[%s3 + $0x20] sm:$0xff]
    %v5436 = vld [vmem:[%s3 + $0x28] sm:$0xff]
    %v5437 = vld [vmem:[%s3 + $0x30] sm:$0xff]
    %v5438 = vld [vmem:[%s3 + $0x38] sm:$0xff]
    %v5439 = vld [vmem:[%s3 + $0x40] sm:$0xff]
    %v5440 = vld [vmem:[%s3 + $0x48] sm:$0xff]
    %v5441 = vld [vmem:[%s3 + $0x50] sm:$0xff]
    %v5442 = vld [vmem:[%s3 + $0x58] sm:$0xff]
    %v5443 = vld [vmem:[%s3 + $0x60] sm:$0xff]
    %v5444 = vld [vmem:[%s3 + $0x68] sm:$0xff]
    %v5445 = vld [vmem:[%s3 + $0x70] sm:$0xff]
    %v5446 = vld [vmem:[%s3 + $0x78] sm:$0xff]
    %v5447 = vld [vmem:[%s3 + $0x80] sm:$0xff]
    %v5448 = vld [vmem:[%s3 + $0x88] sm:$0xff]
    %v5449 = vld [vmem:[%s3 + $0x90] sm:$0xff]
    %v5450 = vld [vmem:[%s3 + $0x98] sm:$0xff]
    %v5452 = vsel %vm2573, %v5160, 0
    %v5455 = vsel %vm2573, %v5162, 0
    %v5458 = vsel %vm2573, %v5164, 0
    %v5461 = vsel %vm2573, %v5166, 0
    %v5464 = vsel %vm2573, %v5168, 0
    %v5467 = vsel %vm2573, %v5170, 0
    %v5470 = vsel %vm2573, %v5172, 0
    %v5473 = vsel %vm2573, %v5174, 0
    %v5476 = vsel %vm2573, %v5176, 0
    %v5479 = vsel %vm2573, %v5178, 0
    %v5482 = vsel %vm2573, %v5180, 0
    %v5485 = vsel %vm2573, %v5182, 0
    %v5488 = vsel %vm2573, %v5184, 0
    %v5491 = vsel %vm2573, %v5186, 0
    %v5494 = vsel %vm2573, %v5188, 0
    %v5497 = vsel %vm2573, %v5190, 0
    %5499 = vmatprep.subr.mxu0 0.0
    %5500 = vmatpush1.msra.mxu0 %v5431
    %5501 = vmatprep.subr.mxu0 0.0
    %5502 = vmatpush1.msra.mxu0 %v5432
    %5503 = vmatprep.subr.mxu0 0.0
    %5504 = vmatpush1.msra.mxu0 %v5433
    %5505 = vmatprep.subr.mxu0 0.0
    %5506 = vmatpush1.msra.mxu0 %v5434
    %5507 = vmatprep.subr.mxu0 0.0
    %5508 = vmatpush1.msra.mxu0 %v5435
    %5509 = vmatprep.subr.mxu0 0.0
    %5510 = vmatpush1.msra.mxu0 %v5436
    %5511 = vmatprep.subr.mxu0 0.0
    %5512 = vmatpush1.msra.mxu0 %v5437
    %5513 = vmatprep.subr.mxu0 0.0
    %5514 = vmatpush1.msra.mxu0 %v5438
    %5515 = vmatprep.subr.mxu0 0.0
    %5516 = vmatpush1.msra.mxu0 %v5439
    %5517 = vmatprep.subr.mxu0 0.0
    %5518 = vmatpush1.msra.mxu0 %v5440
    %5519 = vmatprep.subr.mxu0 0.0
    %5520 = vmatpush1.msra.mxu0 %v5441
    %5521 = vmatprep.subr.mxu0 0.0
    %5522 = vmatpush1.msra.mxu0 %v5442
    %5523 = vmatprep.subr.mxu0 0.0
    %5524 = vmatpush1.msra.mxu0 %v5443
    %5525 = vmatprep.subr.mxu0 0.0
    %5526 = vmatpush1.msra.mxu0 %v5444
    %5527 = vmatprep.subr.mxu0 0.0
    %5528 = vmatpush1.msra.mxu0 %v5445
    %5529 = vmatprep.subr.mxu0 0.0
    %5530 = vmatpush1.msra.mxu0 %v5446
    %5531 = vmatprep.subr.mxu0 0.0
    %5532 = vmatpush1.msra.mxu0 %v5447
    %5533 = vmatprep.subr.mxu0 0.0
    %5534 = vmatpush1.msra.mxu0 %v5448
    %5535 = vmatprep.subr.mxu0 0.0
    %5536 = vmatpush1.msra.mxu0 %v5449
    %5537 = vmatprep.subr.mxu0 0.0
    %5538 = vmatpush1.msra.mxu0 %v5450
    %5539 = vmatprep.subr.mxu0 0.0
    %5540 = vmatpush1.msra.mxu0 0.0
    %5541 = vmatprep.subr.mxu0 0.0
    %5542 = vmatpush1.msra.mxu0 0.0
    %5543 = vmatprep.subr.mxu0 0.0
    %5544 = vmatpush1.msra.mxu0 0.0
    %5545 = vmatprep.subr.mxu0 0.0
    %5546 = vmatpush1.msra.mxu0 0.0
    %5547 = vmatprep.subr.mxu0 0.0
    %5548 = vmatpush1.msra.mxu0 0.0
    %5549 = vmatprep.subr.mxu0 0.0
    %5550 = vmatpush1.msra.mxu0 0.0
    %5551 = vmatprep.subr.mxu0 0.0
    %5552 = vmatpush1.msra.mxu0 0.0
    %5553 = vmatprep.subr.mxu0 0.0
    %5554 = vmatpush1.msra.mxu0 0.0
    %5555 = vmatprep.subr.mxu0 0.0
    %5556 = vmatpush1.msra.mxu0 0.0
    %5557 = vmatprep.subr.mxu0 0.0
    %5558 = vmatpush1.msra.mxu0 0.0
    %5559 = vmatprep.subr.mxu0 0.0
    %5560 = vmatpush1.msra.mxu0 0.0
    %5561 = vmatprep.subr.mxu0 0.0
    %5562 = vmatpush1.msra.mxu0 0.0
    %5563 = vmatprep.mubr.f32.mxu0 %v5452
    %5564 = vmatmul.mubr.f32.gmra.mrb[0].mxu0 %v5415
    %v5565 = vpop.f32.mrb[0].mxu0
    %v5566 = vadd.f32 0.0, %v5565
    %v5567 = vpop.f32.mrb[0].mxu0
    %5568 = vmatprep.mubr.f32.mxu0 %v5455
    %5569 = vmatmul.mubr.f32.gmra.mrb[0].mxu0 %v5416
    %v5570 = vpop.f32.mrb[0].mxu0
    %v5571 = vadd.f32 0.0, %v5570
    %v5572 = vpop.f32.mrb[0].mxu0
    %5573 = vmatprep.mubr.f32.mxu0 %v5458
    %5574 = vmatmul.mubr.f32.gmra.mrb[0].mxu0 %v5417
    %v5575 = vpop.f32.mrb[0].mxu0
    %v5576 = vadd.f32 0.0, %v5575
    %v5577 = vpop.f32.mrb[0].mxu0
    %5578 = vmatprep.mubr.f32.mxu0 %v5461
    %5579 = vmatmul.mubr.f32.gmra.mrb[0].mxu0 %v5418
    %v5580 = vpop.f32.mrb[0].mxu0
    %v5581 = vadd.f32 0.0, %v5580
    %v5582 = vpop.f32.mrb[0].mxu0
    %5583 = vmatprep.mubr.f32.mxu0 %v5464
    %5584 = vmatmul.mubr.f32.gmra.mrb[0].mxu0 %v5419
    %v5585 = vpop.f32.mrb[0].mxu0
    %v5586 = vadd.f32 0.0, %v5585
    %v5587 = vpop.f32.mrb[0].mxu0
    %5588 = vmatprep.mubr.f32.mxu0 %v5467
    %5589 = vmatmul.mubr.f32.gmra.mrb[0].mxu0 %v5420
    %v5590 = vpop.f32.mrb[0].mxu0
    %v5591 = vadd.f32 0.0, %v5590
    %v5592 = vpop.f32.mrb[0].mxu0
    %5593 = vmatprep.mubr.f32.mxu0 %v5470
    %5594 = vmatmul.mubr.f32.gmra.mrb[0].mxu0 %v5421
    %v5595 = vpop.f32.mrb[0].mxu0
    %v5596 = vadd.f32 0.0, %v5595
    %v5597 = vpop.f32.mrb[0].mxu0
    %5598 = vmatprep.mubr.f32.mxu0 %v5473
    %5599 = vmatmul.mubr.f32.gmra.mrb[0].mxu0 %v5422
    %v5600 = vpop.f32.mrb[0].mxu0
    %v5601 = vadd.f32 0.0, %v5600
    %v5602 = vpop.f32.mrb[0].mxu0
    %5603 = vmatprep.mubr.f32.mxu0 %v5476
    %5604 = vmatmul.mubr.f32.gmra.mrb[0].mxu0 %v5423
    %v5605 = vpop.f32.mrb[0].mxu0
    %v5606 = vadd.f32 0.0, %v5605
    %v5607 = vpop.f32.mrb[0].mxu0
    %5608 = vmatprep.mubr.f32.mxu0 %v5479
    %5609 = vmatmul.mubr.f32.gmra.mrb[0].mxu0 %v5424
    %v5610 = vpop.f32.mrb[0].mxu0
    %v5611 = vadd.f32 0.0, %v5610
    %v5612 = vpop.f32.mrb[0].mxu0
    %5613 = vmatprep.mubr.f32.mxu0 %v5482
    %5614 = vmatmul.mubr.f32.gmra.mrb[0].mxu0 %v5425
    %v5615 = vpop.f32.mrb[0].mxu0
    %v5616 = vadd.f32 0.0, %v5615
    %v5617 = vpop.f32.mrb[0].mxu0
    %5618 = vmatprep.mubr.f32.mxu0 %v5485
    %5619 = vmatmul.mubr.f32.gmra.mrb[0].mxu0 %v5426
    %v5620 = vpop.f32.mrb[0].mxu0
    %v5621 = vadd.f32 0.0, %v5620
    %v5622 = vpop.f32.mrb[0].mxu0
    %5623 = vmatprep.mubr.f32.mxu0 %v5488
    %5624 = vmatmul.mubr.f32.gmra.mrb[0].mxu0 %v5427
    %v5625 = vpop.f32.mrb[0].mxu0
    %v5626 = vadd.f32 0.0, %v5625
    %v5627 = vpop.f32.mrb[0].mxu0
    %5628 = vmatprep.mubr.f32.mxu0 %v5491
    %5629 = vmatmul.mubr.f32.gmra.mrb[0].mxu0 %v5428
    %v5630 = vpop.f32.mrb[0].mxu0
    %v5631 = vadd.f32 0.0, %v5630
    %v5632 = vpop.f32.mrb[0].mxu0
    %5633 = vmatprep.mubr.f32.mxu0 %v5494
    %5634 = vmatmul.mubr.f32.gmra.mrb[0].mxu0 %v5429
    %v5635 = vpop.f32.mrb[0].mxu0
    %v5636 = vadd.f32 0.0, %v5635
    %v5637 = vpop.f32.mrb[0].mxu0
    %5638 = vmatprep.mubr.f32.mxu0 %v5497
    %5639 = vmatmul.mubr.f32.gmra.mrb[0].mxu0 %v5430
    %v5640 = vpop.f32.mrb[0].mxu0
    %v5641 = vadd.f32 0.0, %v5640
    %v5642 = vpop.f32.mrb[0].mxu0
    %5643 = vdwg.mxu0
    %v5644 = vand.u32 %v2317, 15
    %v5645 = vand.u32 %v2318, 15
    %v5646 = vand.u32 %v2319, 15
    %v5647 = vand.u32 %v2320, 15
    %v5648 = vand.u32 %v2321, 15
    %v5649 = vand.u32 %v2322, 15
    %v5650 = vand.u32 %v2323, 15
    %v5651 = vand.u32 %v2324, 15
    %v5652 = vand.u32 %v2325, 15
    %v5653 = vand.u32 %v2326, 15
    %v5654 = vand.u32 %v2327, 15
    %v5655 = vand.u32 %v2328, 15
    %v5656 = vand.u32 %v2329, 15
    %v5657 = vand.u32 %v2330, 15
    %v5658 = vand.u32 %v2331, 15
    %v5659 = vand.u32 %v2332, 15
    %vm5660 = vcmp.lt.s32.totalorder %v5644, 15
    %vm5661 = vcmp.lt.s32.totalorder %v5645, 15
    %vm5662 = vcmp.lt.s32.totalorder %v5646, 15
    %vm5663 = vcmp.lt.s32.totalorder %v5647, 15
    %vm5664 = vcmp.lt.s32.totalorder %v5648, 15
    %vm5665 = vcmp.lt.s32.totalorder %v5649, 15
    %vm5666 = vcmp.lt.s32.totalorder %v5650, 15
    %vm5667 = vcmp.lt.s32.totalorder %v5651, 15
    %vm5668 = vcmp.lt.s32.totalorder %v5652, 15
    %vm5669 = vcmp.lt.s32.totalorder %v5653, 15
    %vm5670 = vcmp.lt.s32.totalorder %v5654, 15
    %vm5671 = vcmp.lt.s32.totalorder %v5655, 15
    %vm5672 = vcmp.lt.s32.totalorder %v5656, 15
    %vm5673 = vcmp.lt.s32.totalorder %v5657, 15
    %vm5674 = vcmp.lt.s32.totalorder %v5658, 15
    %vm5675 = vcmp.lt.s32.totalorder %v5659, 15
    %v5676 = vsel %vm5660, %v5566, 0.0
    %v5677 = vsel %vm5661, %v5571, 0.0
    %v5678 = vsel %vm5662, %v5576, 0.0
    %v5679 = vsel %vm5663, %v5581, 0.0
    %v5680 = vsel %vm5664, %v5586, 0.0
    %v5681 = vsel %vm5665, %v5591, 0.0
    %v5682 = vsel %vm5666, %v5596, 0.0
    %v5683 = vsel %vm5667, %v5601, 0.0
    %v5684 = vsel %vm5668, %v5606, 0.0
    %v5685 = vsel %vm5669, %v5611, 0.0
    %v5686 = vsel %vm5670, %v5616, 0.0
    %v5687 = vsel %vm5671, %v5621, 0.0
    %v5688 = vsel %vm5672, %v5626, 0.0
    %v5689 = vsel %vm5673, %v5631, 0.0
    %v5690 = vsel %vm5674, %v5636, 0.0
    %v5691 = vsel %vm5675, %v5641, 0.0
    %v5692 = vsel %vm2573, %v5676, 0.0
    %v5693 = vsel %vm2573, %v5677, 0.0
    %v5694 = vadd.f32 %v5692, %v5693
    %v5695 = vsel %vm2573, %v5678, 0.0
    %v5696 = vadd.f32 %v5694, %v5695
    %v5697 = vsel %vm2573, %v5679, 0.0
    %v5698 = vadd.f32 %v5696, %v5697
    %v5699 = vsel %vm2573, %v5680, 0.0
    %v5700 = vadd.f32 %v5698, %v5699
    %v5701 = vsel %vm2573, %v5681, 0.0
    %v5702 = vadd.f32 %v5700, %v5701
    %v5703 = vsel %vm2573, %v5682, 0.0
    %v5704 = vadd.f32 %v5702, %v5703
    %v5705 = vsel %vm2573, %v5683, 0.0
    %v5706 = vadd.f32 %v5704, %v5705
    %v5707 = vsel %vm2573, %v5684, 0.0
    %v5708 = vadd.f32 %v5706, %v5707
    %v5709 = vsel %vm2573, %v5685, 0.0
    %v5710 = vadd.f32 %v5708, %v5709
    %v5711 = vsel %vm2573, %v5686, 0.0
    %v5712 = vadd.f32 %v5710, %v5711
    %v5713 = vsel %vm2573, %v5687, 0.0
    %v5714 = vadd.f32 %v5712, %v5713
    %v5715 = vsel %vm2573, %v5688, 0.0
    %v5716 = vadd.f32 %v5714, %v5715
    %v5717 = vsel %vm2573, %v5689, 0.0
    %v5718 = vadd.f32 %v5716, %v5717
    %v5719 = vsel %vm2573, %v5690, 0.0
    %v5720 = vadd.f32 %v5718, %v5719
    %v5721 = vsel %vm2573, %v5691, 0.0
    %v5722 = vadd.f32 %v5720, %v5721
    %v5723 = vrot.slane %v5722, 4
    %v5724 = vadd.f32 %v5722, %v5723
    %v5725 = vrot.slane %v5724, 2
    %v5726 = vadd.f32 %v5724, %v5725
    %v5727 = vrot.slane %v5726, 1
    %v5728 = vadd.f32 %v5726, %v5727
    %v5729 = vmul.f32 %v5728, 0.008333334
    %v5730 = vsub.f32 %v5566, %v5729
    %v5731 = vsub.f32 %v5571, %v5729
    %v5732 = vsub.f32 %v5576, %v5729
    %v5733 = vsub.f32 %v5581, %v5729
    %v5734 = vsub.f32 %v5586, %v5729
    %v5735 = vsub.f32 %v5591, %v5729
    %v5736 = vsub.f32 %v5596, %v5729
    %v5737 = vsub.f32 %v5601, %v5729
    %v5738 = vsub.f32 %v5606, %v5729
    %v5739 = vsub.f32 %v5611, %v5729
    %v5740 = vsub.f32 %v5616, %v5729
    %v5741 = vsub.f32 %v5621, %v5729
    %v5742 = vsub.f32 %v5626, %v5729
    %v5743 = vsub.f32 %v5631, %v5729
    %v5744 = vsub.f32 %v5636, %v5729
    %v5745 = vsub.f32 %v5641, %v5729
    %v5746 = vsel %vm5660, %v5730, 0.0
    %v5747 = vsel %vm5661, %v5731, 0.0
    %v5748 = vsel %vm5662, %v5732, 0.0
    %v5749 = vsel %vm5663, %v5733, 0.0
    %v5750 = vsel %vm5664, %v5734, 0.0
    %v5751 = vsel %vm5665, %v5735, 0.0
    %v5752 = vsel %vm5666, %v5736, 0.0
    %v5753 = vsel %vm5667, %v5737, 0.0
    %v5754 = vsel %vm5668, %v5738, 0.0
    %v5755 = vsel %vm5669, %v5739, 0.0
    %v5756 = vsel %vm5670, %v5740, 0.0
    %v5757 = vsel %vm5671, %v5741, 0.0
    %v5758 = vsel %vm5672, %v5742, 0.0
    %v5759 = vsel %vm5673, %v5743, 0.0
    %v5760 = vsel %vm5674, %v5744, 0.0
    %v5761 = vsel %vm5675, %v5745, 0.0
    %v5762 = vmul.f32 %v5746, %v5746
    %v5763 = vmul.f32 %v5747, %v5747
    %v5764 = vmul.f32 %v5748, %v5748
    %v5765 = vmul.f32 %v5749, %v5749
    %v5766 = vmul.f32 %v5750, %v5750
    %v5767 = vmul.f32 %v5751, %v5751
    %v5768 = vmul.f32 %v5752, %v5752
    %v5769 = vmul.f32 %v5753, %v5753
    %v5770 = vmul.f32 %v5754, %v5754
    %v5771 = vmul.f32 %v5755, %v5755
    %v5772 = vmul.f32 %v5756, %v5756
    %v5773 = vmul.f32 %v5757, %v5757
    %v5774 = vmul.f32 %v5758, %v5758
    %v5775 = vmul.f32 %v5759, %v5759
    %v5776 = vmul.f32 %v5760, %v5760
    %v5777 = vmul.f32 %v5761, %v5761
    %v5778 = vsel %vm2573, %v5762, 0.0
    %v5779 = vsel %vm2573, %v5763, 0.0
    %v5780 = vadd.f32 %v5778, %v5779
    %v5781 = vsel %vm2573, %v5764, 0.0
    %v5782 = vadd.f32 %v5780, %v5781
    %v5783 = vsel %vm2573, %v5765, 0.0
    %v5784 = vadd.f32 %v5782, %v5783
    %v5785 = vsel %vm2573, %v5766, 0.0
    %v5786 = vadd.f32 %v5784, %v5785
    %v5787 = vsel %vm2573, %v5767, 0.0
    %v5788 = vadd.f32 %v5786, %v5787
    %v5789 = vsel %vm2573, %v5768, 0.0
    %v5790 = vadd.f32 %v5788, %v5789
    %v5791 = vsel %vm2573, %v5769, 0.0
    %v5792 = vadd.f32 %v5790, %v5791
    %v5793 = vsel %vm2573, %v5770, 0.0
    %v5794 = vadd.f32 %v5792, %v5793
    %v5795 = vsel %vm2573, %v5771, 0.0
    %v5796 = vadd.f32 %v5794, %v5795
    %v5797 = vsel %vm2573, %v5772, 0.0
    %v5798 = vadd.f32 %v5796, %v5797
    %v5799 = vsel %vm2573, %v5773, 0.0
    %v5800 = vadd.f32 %v5798, %v5799
    %v5801 = vsel %vm2573, %v5774, 0.0
    %v5802 = vadd.f32 %v5800, %v5801
    %v5803 = vsel %vm2573, %v5775, 0.0
    %v5804 = vadd.f32 %v5802, %v5803
    %v5805 = vsel %vm2573, %v5776, 0.0
    %v5806 = vadd.f32 %v5804, %v5805
    %v5807 = vsel %vm2573, %v5777, 0.0
    %v5808 = vadd.f32 %v5806, %v5807
    %v5809 = vrot.slane %v5808, 4
    %v5810 = vadd.f32 %v5808, %v5809
    %v5811 = vrot.slane %v5810, 2
    %v5812 = vadd.f32 %v5810, %v5811
    %v5813 = vrot.slane %v5812, 1
    %v5814 = vadd.f32 %v5812, %v5813
    %v5815 = vmul.f32 %v5814, 0.008333334
    %v5816 = vld [vmem:[%s11] sm:$0x1]
    %v5817 = vadd.f32 %v5815, 1e-05
    %v5818 = vrsqrt.pop %v5817
    %v5819 = vmul.f32 %v5816, %v5818
    %v5820 = vld [vmem:[%s12] sm:$0x1]
    %v5821 = vmul.f32 %v5729, %v5819
    %v5822 = vsub.f32 %v5820, %v5821
    %v5824 = vlaneseq
    %v5825 = vshrl.u32 %v5824, 7
    %v5826 = vsub.s32 0, %v5825
    %v5827 = vrot.slane %v5819, %v5826
    %v5829 = vmul.f32 %v5566, %v5827
    %v5830 = vmul.f32 %v5571, %v5827
    %v5831 = vmul.f32 %v5576, %v5827
    %v5832 = vmul.f32 %v5581, %v5827
    %v5833 = vmul.f32 %v5586, %v5827
    %v5834 = vmul.f32 %v5591, %v5827
    %v5835 = vmul.f32 %v5596, %v5827
    %v5836 = vmul.f32 %v5601, %v5827
    %v5837 = vmul.f32 %v5606, %v5827
    %v5838 = vmul.f32 %v5611, %v5827
    %v5839 = vmul.f32 %v5616, %v5827
    %v5840 = vmul.f32 %v5621, %v5827
    %v5841 = vmul.f32 %v5626, %v5827
    %v5842 = vmul.f32 %v5631, %v5827
    %v5843 = vmul.f32 %v5636, %v5827
    %v5844 = vmul.f32 %v5641, %v5827
    %v5846 = vlaneseq
    %v5847 = vshrl.u32 %v5846, 7
    %v5848 = vsub.s32 0, %v5847
    %v5849 = vrot.slane %v5822, %v5848
    %v5851 = vadd.f32 %v5829, %v5849
    %v5852 = vadd.f32 %v5830, %v5849
    %v5853 = vadd.f32 %v5831, %v5849
    %v5854 = vadd.f32 %v5832, %v5849
    %v5855 = vadd.f32 %v5833, %v5849
    %v5856 = vadd.f32 %v5834, %v5849
    %v5857 = vadd.f32 %v5835, %v5849
    %v5858 = vadd.f32 %v5836, %v5849
    %v5859 = vadd.f32 %v5837, %v5849
    %v5860 = vadd.f32 %v5838, %v5849
    %v5861 = vadd.f32 %v5839, %v5849
    %v5862 = vadd.f32 %v5840, %v5849
    %v5863 = vadd.f32 %v5841, %v5849
    %v5864 = vadd.f32 %v5842, %v5849
    %v5865 = vadd.f32 %v5843, %v5849
    %v5866 = vadd.f32 %v5844, %v5849
    %v5867 = vmax.f32 %v5851, 0.0
    %v5868 = vmax.f32 %v5852, 0.0
    %v5869 = vmax.f32 %v5853, 0.0
    %v5870 = vmax.f32 %v5854, 0.0
    %v5871 = vmax.f32 %v5855, 0.0
    %v5872 = vmax.f32 %v5856, 0.0
    %v5873 = vmax.f32 %v5857, 0.0
    %v5874 = vmax.f32 %v5858, 0.0
    %v5875 = vmax.f32 %v5859, 0.0
    %v5876 = vmax.f32 %v5860, 0.0
    %v5877 = vmax.f32 %v5861, 0.0
    %v5878 = vmax.f32 %v5862, 0.0
    %v5879 = vmax.f32 %v5863, 0.0
    %v5880 = vmax.f32 %v5864, 0.0
    %v5881 = vmax.f32 %v5865, 0.0
    %v5882 = vmax.f32 %v5866, 0.0
    %v5883 = vsel %vm5660, %v5867, 0.0
    %v5884 = vsel %vm5661, %v5868, 0.0
    %v5885 = vsel %vm5662, %v5869, 0.0
    %v5886 = vsel %vm5663, %v5870, 0.0
    %v5887 = vsel %vm5664, %v5871, 0.0
    %v5888 = vsel %vm5665, %v5872, 0.0
    %v5889 = vsel %vm5666, %v5873, 0.0
    %v5890 = vsel %vm5667, %v5874, 0.0
    %v5891 = vsel %vm5668, %v5875, 0.0
    %v5892 = vsel %vm5669, %v5876, 0.0
    %v5893 = vsel %vm5670, %v5877, 0.0
    %v5894 = vsel %vm5671, %v5878, 0.0
    %v5895 = vsel %vm5672, %v5879, 0.0
    %v5896 = vsel %vm5673, %v5880, 0.0
    %v5897 = vsel %vm5674, %v5881, 0.0
    %v5898 = vsel %vm5675, %v5882, 0.0
    %5899 = vst.msk [vmem:[#allocation4] sm:$0xff] %vm2573, %v5883
    %5900 = vst.msk [vmem:[#allocation4 + $0x8] sm:$0xff] %vm2573, %v5884
    %5901 = vst.msk [vmem:[#allocation4 + $0x10] sm:$0xff] %vm2573, %v5885
    %5902 = vst.msk [vmem:[#allocation4 + $0x18] sm:$0xff] %vm2573, %v5886
    %5903 = vst.msk [vmem:[#allocation4 + $0x20] sm:$0xff] %vm2573, %v5887
    %5904 = vst.msk [vmem:[#allocation4 + $0x28] sm:$0xff] %vm2573, %v5888
    %5905 = vst.msk [vmem:[#allocation4 + $0x30] sm:$0xff] %vm2573, %v5889
    %5906 = vst.msk [vmem:[#allocation4 + $0x38] sm:$0xff] %vm2573, %v5890
    %5907 = vst.msk [vmem:[#allocation4 + $0x40] sm:$0xff] %vm2573, %v5891
    %5908 = vst.msk [vmem:[#allocation4 + $0x48] sm:$0xff] %vm2573, %v5892
    %5909 = vst.msk [vmem:[#allocation4 + $0x50] sm:$0xff] %vm2573, %v5893
    %5910 = vst.msk [vmem:[#allocation4 + $0x58] sm:$0xff] %vm2573, %v5894
    %5911 = vst.msk [vmem:[#allocation4 + $0x60] sm:$0xff] %vm2573, %v5895
    %5912 = vst.msk [vmem:[#allocation4 + $0x68] sm:$0xff] %vm2573, %v5896
    %5913 = vst.msk [vmem:[#allocation4 + $0x70] sm:$0xff] %vm2573, %v5897
    %5914 = vst.msk [vmem:[#allocation4 + $0x78] sm:$0xff] %vm2573, %v5898
    %v5915 = vld [vmem:[#allocation4] ss:$16 sm:$0x3]
    %v5916 = vld [vmem:[#allocation4] ss:$16 sm:$0xc]
    %v5917 = vor.u32 %v5915, %v5916
    %v5918 = vld [vmem:[#allocation4] ss:$16 sm:$0x30]
    %v5919 = vor.u32 %v5917, %v5918
    %v5920 = vld [vmem:[#allocation4] ss:$16 sm:$0xc0]
    %v5921 = vor.u32 %v5919, %v5920
    %s5922 = scalar_lea.vmem [#allocation4], 1
    %v5923 = vld [vmem:[%s5922] ss:$16 sm:$0x3]
    %v5924 = vld [vmem:[%s5922] ss:$16 sm:$0xc]
    %v5925 = vor.u32 %v5923, %v5924
    %v5926 = vld [vmem:[%s5922] ss:$16 sm:$0x30]
    %v5927 = vor.u32 %v5925, %v5926
    %v5928 = vld [vmem:[%s5922] ss:$16 sm:$0xc0]
    %v5929 = vor.u32 %v5927, %v5928
    %s5930 = scalar_lea.vmem [#allocation4], 2
    %v5931 = vld [vmem:[%s5930] ss:$16 sm:$0x3]
    %v5932 = vld [vmem:[%s5930] ss:$16 sm:$0xc]
    %v5933 = vor.u32 %v5931, %v5932
    %v5934 = vld [vmem:[%s5930] ss:$16 sm:$0x30]
    %v5935 = vor.u32 %v5933, %v5934
    %v5936 = vld [vmem:[%s5930] ss:$16 sm:$0xc0]
    %v5937 = vor.u32 %v5935, %v5936
    %s5938 = scalar_lea.vmem [#allocation4], 3
    %v5939 = vld [vmem:[%s5938] ss:$16 sm:$0x3]
    %v5940 = vld [vmem:[%s5938] ss:$16 sm:$0xc]
    %v5941 = vor.u32 %v5939, %v5940
    %v5942 = vld [vmem:[%s5938] ss:$16 sm:$0x30]
    %v5943 = vor.u32 %v5941, %v5942
    %v5944 = vld [vmem:[%s5938] ss:$16 sm:$0xc0]
    %v5945 = vor.u32 %v5943, %v5944
    %s5946 = scalar_lea.vmem [#allocation4], 4
    %v5947 = vld [vmem:[%s5946] ss:$16 sm:$0x3]
    %v5948 = vld [vmem:[%s5946] ss:$16 sm:$0xc]
    %v5949 = vor.u32 %v5947, %v5948
    %v5950 = vld [vmem:[%s5946] ss:$16 sm:$0x30]
    %v5951 = vor.u32 %v5949, %v5950
    %v5952 = vld [vmem:[%s5946] ss:$16 sm:$0xc0]
    %v5953 = vor.u32 %v5951, %v5952
    %s5954 = scalar_lea.vmem [#allocation4], 5
    %v5955 = vld [vmem:[%s5954] ss:$16 sm:$0x3]
    %v5956 = vld [vmem:[%s5954] ss:$16 sm:$0xc]
    %v5957 = vor.u32 %v5955, %v5956
    %v5958 = vld [vmem:[%s5954] ss:$16 sm:$0x30]
    %v5959 = vor.u32 %v5957, %v5958
    %v5960 = vld [vmem:[%s5954] ss:$16 sm:$0xc0]
    %v5961 = vor.u32 %v5959, %v5960
    %s5962 = scalar_lea.vmem [#allocation4], 6
    %v5963 = vld [vmem:[%s5962] ss:$16 sm:$0x3]
    %v5964 = vld [vmem:[%s5962] ss:$16 sm:$0xc]
    %v5965 = vor.u32 %v5963, %v5964
    %v5966 = vld [vmem:[%s5962] ss:$16 sm:$0x30]
    %v5967 = vor.u32 %v5965, %v5966
    %v5968 = vld [vmem:[%s5962] ss:$16 sm:$0xc0]
    %v5969 = vor.u32 %v5967, %v5968
    %s5970 = scalar_lea.vmem [#allocation4], 7
    %v5971 = vld [vmem:[%s5970] ss:$16 sm:$0x3]
    %v5972 = vld [vmem:[%s5970] ss:$16 sm:$0xc]
    %v5973 = vor.u32 %v5971, %v5972
    %v5974 = vld [vmem:[%s5970] ss:$16 sm:$0x30]
    %v5975 = vor.u32 %v5973, %v5974
    %v5976 = vld [vmem:[%s5970] ss:$16 sm:$0xc0]
    %v5977 = vor.u32 %v5975, %v5976
    %s5978 = scalar_lea.vmem [#allocation4], 8
    %v5979 = vld [vmem:[%s5978] ss:$16 sm:$0x3]
    %v5980 = vld [vmem:[%s5978] ss:$16 sm:$0xc]
    %v5981 = vor.u32 %v5979, %v5980
    %v5982 = vld [vmem:[%s5978] ss:$16 sm:$0x30]
    %v5983 = vor.u32 %v5981, %v5982
    %v5984 = vld [vmem:[%s5978] ss:$16 sm:$0xc0]
    %v5985 = vor.u32 %v5983, %v5984
    %s5986 = scalar_lea.vmem [#allocation4], 9
    %v5987 = vld [vmem:[%s5986] ss:$16 sm:$0x3]
    %v5988 = vld [vmem:[%s5986] ss:$16 sm:$0xc]
    %v5989 = vor.u32 %v5987, %v5988
    %v5990 = vld [vmem:[%s5986] ss:$16 sm:$0x30]
    %v5991 = vor.u32 %v5989, %v5990
    %v5992 = vld [vmem:[%s5986] ss:$16 sm:$0xc0]
    %v5993 = vor.u32 %v5991, %v5992
    %s5994 = scalar_lea.vmem [#allocation4], 10
    %v5995 = vld [vmem:[%s5994] ss:$16 sm:$0x3]
    %v5996 = vld [vmem:[%s5994] ss:$16 sm:$0xc]
    %v5997 = vor.u32 %v5995, %v5996
    %v5998 = vld [vmem:[%s5994] ss:$16 sm:$0x30]
    %v5999 = vor.u32 %v5997, %v5998
    %v6000 = vld [vmem:[%s5994] ss:$16 sm:$0xc0]
    %v6001 = vor.u32 %v5999, %v6000
    %s6002 = scalar_lea.vmem [#allocation4], 11
    %v6003 = vld [vmem:[%s6002] ss:$16 sm:$0x3]
    %v6004 = vld [vmem:[%s6002] ss:$16 sm:$0xc]
    %v6005 = vor.u32 %v6003, %v6004
    %v6006 = vld [vmem:[%s6002] ss:$16 sm:$0x30]
    %v6007 = vor.u32 %v6005, %v6006
    %v6008 = vld [vmem:[%s6002] ss:$16 sm:$0xc0]
    %v6009 = vor.u32 %v6007, %v6008
    %s6010 = scalar_lea.vmem [#allocation4], 12
    %v6011 = vld [vmem:[%s6010] ss:$16 sm:$0x3]
    %v6012 = vld [vmem:[%s6010] ss:$16 sm:$0xc]
    %v6013 = vor.u32 %v6011, %v6012
    %v6014 = vld [vmem:[%s6010] ss:$16 sm:$0x30]
    %v6015 = vor.u32 %v6013, %v6014
    %v6016 = vld [vmem:[%s6010] ss:$16 sm:$0xc0]
    %v6017 = vor.u32 %v6015, %v6016
    %s6018 = scalar_lea.vmem [#allocation4], 13
    %v6019 = vld [vmem:[%s6018] ss:$16 sm:$0x3]
    %v6020 = vld [vmem:[%s6018] ss:$16 sm:$0xc]
    %v6021 = vor.u32 %v6019, %v6020
    %v6022 = vld [vmem:[%s6018] ss:$16 sm:$0x30]
    %v6023 = vor.u32 %v6021, %v6022
    %v6024 = vld [vmem:[%s6018] ss:$16 sm:$0xc0]
    %v6025 = vor.u32 %v6023, %v6024
    %s6026 = scalar_lea.vmem [#allocation4], 14
    %v6027 = vld [vmem:[%s6026] ss:$16 sm:$0x3]
    %v6028 = vld [vmem:[%s6026] ss:$16 sm:$0xc]
    %v6029 = vor.u32 %v6027, %v6028
    %v6030 = vld [vmem:[%s6026] ss:$16 sm:$0x30]
    %v6031 = vor.u32 %v6029, %v6030
    %v6032 = vld [vmem:[%s6026] ss:$16 sm:$0xc0]
    %v6033 = vor.u32 %v6031, %v6032
    %6035 = vrot.lane.b32.xlu0 %v5929, 32
    %v6036 = vpop.permute.xlu0 %6035
    %6039 = vrot.lane.b32.xlu0 %v5937, 64
    %v6040 = vpop.permute.xlu0 %6039
    %6043 = vrot.lane.b32.xlu0 %v5945, 96
    %v6044 = vpop.permute.xlu0 %6043
    %6047 = vrot.lane.b32.xlu0 %v5961, 32
    %v6048 = vpop.permute.xlu0 %6047
    %6051 = vrot.lane.b32.xlu0 %v5969, 64
    %v6052 = vpop.permute.xlu0 %6051
    %6055 = vrot.lane.b32.xlu0 %v5977, 96
    %v6056 = vpop.permute.xlu0 %6055
    %6059 = vrot.lane.b32.xlu0 %v5993, 32
    %v6060 = vpop.permute.xlu0 %6059
    %6063 = vrot.lane.b32.xlu0 %v6001, 64
    %v6064 = vpop.permute.xlu0 %6063
    %6067 = vrot.lane.b32.xlu0 %v6009, 96
    %v6068 = vpop.permute.xlu0 %6067
    %6071 = vrot.lane.b32.xlu0 %v6025, 32
    %v6072 = vpop.permute.xlu0 %6071
    %6075 = vrot.lane.b32.xlu0 %v6033, 64
    %v6076 = vpop.permute.xlu0 %6075
    %v6078 = vsel %vm2573, %v5921, %v6036
    %v6079 = vsel %vm4111, %v6078, %v6040
    %v6080 = vsel %vm4144, %v6079, %v6044
    %v6081 = vsel %vm2573, %v5953, %v6048
    %v6082 = vsel %vm4111, %v6081, %v6052
    %v6083 = vsel %vm4144, %v6082, %v6056
    %v6084 = vsel %vm2573, %v5985, %v6060
    %v6085 = vsel %vm4111, %v6084, %v6064
    %v6086 = vsel %vm4144, %v6085, %v6068
    %v6087 = vsel %vm2573, %v6017, %v6072
    %v6088 = vsel %vm4111, %v6087, %v6076
    %v6089 = vld [vmem:[%s4] sm:$0xff]
    %v6090 = vld [vmem:[%s4 + $0x8] sm:$0xff]
    %v6091 = vld [vmem:[%s4 + $0x10] sm:$0xff]
    %v6092 = vld [vmem:[%s4 + $0x18] sm:$0xff]
    %v6093 = vld [vmem:[%s4 + $0x20] sm:$0xff]
    %v6094 = vld [vmem:[%s4 + $0x28] sm:$0xff]
    %v6095 = vld [vmem:[%s4 + $0x30] sm:$0xff]
    %v6096 = vld [vmem:[%s4 + $0x38] sm:$0xff]
    %v6097 = vld [vmem:[%s4 + $0x40] sm:$0xff]
    %v6098 = vld [vmem:[%s4 + $0x48] sm:$0xff]
    %v6099 = vld [vmem:[%s4 + $0x50] sm:$0xff]
    %v6100 = vld [vmem:[%s4 + $0x58] sm:$0xff]
    %v6101 = vld [vmem:[%s4 + $0x60] sm:$0xff]
    %v6102 = vld [vmem:[%s4 + $0x68] sm:$0xff]
    %v6103 = vld [vmem:[%s4 + $0x70] sm:$0xff]
    %v6104 = vld [vmem:[%s4 + $0x78] sm:$0xff]
    %v6105 = vld [vmem:[%s4 + $0x80] sm:$0xff]
    %v6106 = vld [vmem:[%s4 + $0x88] sm:$0xff]
    %v6107 = vld [vmem:[%s4 + $0x90] sm:$0xff]
    %v6108 = vld [vmem:[%s4 + $0x98] sm:$0xff]
    %v6109 = vld [vmem:[%s4 + $0xa0] sm:$0xff]
    %v6110 = vld [vmem:[%s4 + $0xa8] sm:$0xff]
    %v6111 = vld [vmem:[%s4 + $0xb0] sm:$0xff]
    %v6112 = vld [vmem:[%s4 + $0xb8] sm:$0xff]
    %v6113 = vld [vmem:[%s4 + $0xc0] sm:$0xff]
    %v6114 = vld [vmem:[%s4 + $0xc8] sm:$0xff]
    %v6115 = vld [vmem:[%s4 + $0xd0] sm:$0xff]
    %v6116 = vld [vmem:[%s4 + $0xd8] sm:$0xff]
    %v6117 = vld [vmem:[%s4 + $0xe0] sm:$0xff]
    %v6118 = vld [vmem:[%s4 + $0xe8] sm:$0xff]
    %v6119 = vld [vmem:[%s4 + $0xf0] sm:$0xff]
    %v6120 = vld [vmem:[%s4 + $0xf8] sm:$0xff]
    %v6121 = vld [vmem:[%s4 + $0x100] sm:$0xff]
    %v6122 = vld [vmem:[%s4 + $0x108] sm:$0xff]
    %v6123 = vld [vmem:[%s4 + $0x110] sm:$0xff]
    %v6124 = vld [vmem:[%s4 + $0x118] sm:$0xff]
    %v6125 = vld [vmem:[%s4 + $0x120] sm:$0xff]
    %v6126 = vld [vmem:[%s4 + $0x128] sm:$0xff]
    %v6127 = vld [vmem:[%s4 + $0x130] sm:$0xff]
    %v6128 = vld [vmem:[%s4 + $0x138] sm:$0xff]
    %v6129 = vld [vmem:[%s4 + $0x140] sm:$0xff]
    %v6130 = vld [vmem:[%s4 + $0x148] sm:$0xff]
    %v6131 = vld [vmem:[%s4 + $0x150] sm:$0xff]
    %v6132 = vld [vmem:[%s4 + $0x158] sm:$0xff]
    %v6133 = vld [vmem:[%s4 + $0x160] sm:$0xff]
    %v6134 = vld [vmem:[%s4 + $0x168] sm:$0xff]
    %v6135 = vld [vmem:[%s4 + $0x170] sm:$0xff]
    %v6136 = vld [vmem:[%s4 + $0x178] sm:$0xff]
    %v6137 = vld [vmem:[%s4 + $0x180] sm:$0xff]
    %v6138 = vld [vmem:[%s4 + $0x188] sm:$0xff]
    %v6139 = vld [vmem:[%s4 + $0x190] sm:$0xff]
    %v6140 = vld [vmem:[%s4 + $0x198] sm:$0xff]
    %v6141 = vld [vmem:[%s4 + $0x1a0] sm:$0xff]
    %v6142 = vld [vmem:[%s4 + $0x1a8] sm:$0xff]
    %v6143 = vld [vmem:[%s4 + $0x1b0] sm:$0xff]
    %v6144 = vld [vmem:[%s4 + $0x1b8] sm:$0xff]
    %v6145 = vld [vmem:[%s4 + $0x1c0] sm:$0xff]
    %v6146 = vld [vmem:[%s4 + $0x1c8] sm:$0xff]
    %v6147 = vld [vmem:[%s4 + $0x1d0] sm:$0xff]
    %v6148 = vld [vmem:[%s4 + $0x1d8] sm:$0xff]
    %v6150 = vsel %vm4144, %v6088, 0
    %6152 = vmatprep.subr.mxu0 0.0
    %6153 = vmatpush1.msra.mxu0 %v6089
    %6154 = vmatprep.subr.mxu0 0.0
    %6155 = vmatpush1.msra.mxu0 %v6090
    %6156 = vmatprep.subr.mxu0 0.0
    %6157 = vmatpush1.msra.mxu0 %v6091
    %6158 = vmatprep.subr.mxu0 0.0
    %6159 = vmatpush1.msra.mxu0 %v6092
    %6160 = vmatprep.subr.mxu0 0.0
    %6161 = vmatpush1.msra.mxu0 %v6093
    %6162 = vmatprep.subr.mxu0 0.0
    %6163 = vmatpush1.msra.mxu0 %v6094
    %6164 = vmatprep.subr.mxu0 0.0
    %6165 = vmatpush1.msra.mxu0 %v6095
    %6166 = vmatprep.subr.mxu0 0.0
    %6167 = vmatpush1.msra.mxu0 %v6096
    %6168 = vmatprep.subr.mxu0 0.0
    %6169 = vmatpush1.msra.mxu0 %v6097
    %6170 = vmatprep.subr.mxu0 0.0
    %6171 = vmatpush1.msra.mxu0 %v6098
    %6172 = vmatprep.subr.mxu0 0.0
    %6173 = vmatpush1.msra.mxu0 %v6099
    %6174 = vmatprep.subr.mxu0 0.0
    %6175 = vmatpush1.msra.mxu0 %v6100
    %6176 = vmatprep.subr.mxu0 0.0
    %6177 = vmatpush1.msra.mxu0 %v6101
    %6178 = vmatprep.subr.mxu0 0.0
    %6179 = vmatpush1.msra.mxu0 %v6102
    %6180 = vmatprep.subr.mxu0 0.0
    %6181 = vmatpush1.msra.mxu0 %v6103
    %6182 = vmatprep.subr.mxu0 0.0
    %6183 = vmatpush1.msra.mxu0 %v6104
    %6184 = vmatprep.subr.mxu0 0.0
    %6185 = vmatpush1.msra.mxu0 %v6105
    %6186 = vmatprep.subr.mxu0 0.0
    %6187 = vmatpush1.msra.mxu0 %v6106
    %6188 = vmatprep.subr.mxu0 0.0
    %6189 = vmatpush1.msra.mxu0 %v6107
    %6190 = vmatprep.subr.mxu0 0.0
    %6191 = vmatpush1.msra.mxu0 %v6108
    %6192 = vmatprep.subr.mxu0 0.0
    %6193 = vmatpush1.msra.mxu0 %v6109
    %6194 = vmatprep.subr.mxu0 0.0
    %6195 = vmatpush1.msra.mxu0 %v6110
    %6196 = vmatprep.subr.mxu0 0.0
    %6197 = vmatpush1.msra.mxu0 %v6111
    %6198 = vmatprep.subr.mxu0 0.0
    %6199 = vmatpush1.msra.mxu0 %v6112
    %6200 = vmatprep.subr.mxu0 0.0
    %6201 = vmatpush1.msra.mxu0 %v6113
    %6202 = vmatprep.subr.mxu0 0.0
    %6203 = vmatpush1.msra.mxu0 %v6114
    %6204 = vmatprep.subr.mxu0 0.0
    %6205 = vmatpush1.msra.mxu0 %v6115
    %6206 = vmatprep.subr.mxu0 0.0
    %6207 = vmatpush1.msra.mxu0 %v6116
    %6208 = vmatprep.subr.mxu0 0.0
    %6209 = vmatpush1.msra.mxu0 %v6117
    %6210 = vmatprep.subr.mxu0 0.0
    %6211 = vmatpush1.msra.mxu0 %v6118
    %6212 = vmatprep.subr.mxu0 0.0
    %6213 = vmatpush1.msra.mxu0 %v6119
    %6214 = vmatprep.subr.mxu0 0.0
    %6215 = vmatpush1.msra.mxu0 %v6120
    %6216 = vmatprep.mubr.f32.mxu0 %v6083
    %6217 = vmatmul.mubr.f32.gmra.mrb[0].mxu0 %v6080
    %v6218 = vpop.f32.mrb[0].mxu0
    %v6219 = vadd.f32 0.0, %v6218
    %v6220 = vpop.f32.mrb[0].mxu0
    %6221 = vdwg.mxu0
    %6222 = vmatprep.subr.mxu0 0.0
    %6223 = vmatpush1.msra.mxu0 %v6121
    %6224 = vmatprep.subr.mxu0 0.0
    %6225 = vmatpush1.msra.mxu0 %v6122
    %6226 = vmatprep.subr.mxu0 0.0
    %6227 = vmatpush1.msra.mxu0 %v6123
    %6228 = vmatprep.subr.mxu0 0.0
    %6229 = vmatpush1.msra.mxu0 %v6124
    %6230 = vmatprep.subr.mxu0 0.0
    %6231 = vmatpush1.msra.mxu0 %v6125
    %6232 = vmatprep.subr.mxu0 0.0
    %6233 = vmatpush1.msra.mxu0 %v6126
    %6234 = vmatprep.subr.mxu0 0.0
    %6235 = vmatpush1.msra.mxu0 %v6127
    %6236 = vmatprep.subr.mxu0 0.0
    %6237 = vmatpush1.msra.mxu0 %v6128
    %6238 = vmatprep.subr.mxu0 0.0
    %6239 = vmatpush1.msra.mxu0 %v6129
    %6240 = vmatprep.subr.mxu0 0.0
    %6241 = vmatpush1.msra.mxu0 %v6130
    %6242 = vmatprep.subr.mxu0 0.0
    %6243 = vmatpush1.msra.mxu0 %v6131
    %6244 = vmatprep.subr.mxu0 0.0
    %6245 = vmatpush1.msra.mxu0 %v6132
    %6246 = vmatprep.subr.mxu0 0.0
    %6247 = vmatpush1.msra.mxu0 %v6133
    %6248 = vmatprep.subr.mxu0 0.0
    %6249 = vmatpush1.msra.mxu0 %v6134
    %6250 = vmatprep.subr.mxu0 0.0
    %6251 = vmatpush1.msra.mxu0 %v6135
    %6252 = vmatprep.subr.mxu0 0.0
    %6253 = vmatpush1.msra.mxu0 %v6136
    %6254 = vmatprep.subr.mxu0 0.0
    %6255 = vmatpush1.msra.mxu0 %v6137
    %6256 = vmatprep.subr.mxu0 0.0
    %6257 = vmatpush1.msra.mxu0 %v6138
    %6258 = vmatprep.subr.mxu0 0.0
    %6259 = vmatpush1.msra.mxu0 %v6139
    %6260 = vmatprep.subr.mxu0 0.0
    %6261 = vmatpush1.msra.mxu0 %v6140
    %6262 = vmatprep.subr.mxu0 0.0
    %6263 = vmatpush1.msra.mxu0 %v6141
    %6264 = vmatprep.subr.mxu0 0.0
    %6265 = vmatpush1.msra.mxu0 %v6142
    %6266 = vmatprep.subr.mxu0 0.0
    %6267 = vmatpush1.msra.mxu0 %v6143
    %6268 = vmatprep.subr.mxu0 0.0
    %6269 = vmatpush1.msra.mxu0 %v6144
    %6270 = vmatprep.subr.mxu0 0.0
    %6271 = vmatpush1.msra.mxu0 %v6145
    %6272 = vmatprep.subr.mxu0 0.0
    %6273 = vmatpush1.msra.mxu0 %v6146
    %6274 = vmatprep.subr.mxu0 0.0
    %6275 = vmatpush1.msra.mxu0 %v6147
    %6276 = vmatprep.subr.mxu0 0.0
    %6277 = vmatpush1.msra.mxu0 %v6148
    %6278 = vmatprep.subr.mxu0 0.0
    %6279 = vmatpush1.msra.mxu0 0.0
    %6280 = vmatprep.subr.mxu0 0.0
    %6281 = vmatpush1.msra.mxu0 0.0
    %6282 = vmatprep.subr.mxu0 0.0
    %6283 = vmatpush1.msra.mxu0 0.0
    %6284 = vmatprep.subr.mxu0 0.0
    %6285 = vmatpush1.msra.mxu0 0.0
    %6286 = vmatprep.mubr.f32.mxu0 %v6150
    %6287 = vmatmul.mubr.f32.gmra.mrb[0].mxu0 %v6086
    %v6288 = vpop.f32.mrb[0].mxu0
    %v6289 = vadd.f32 %v6219, %v6288
    %v6290 = vpop.f32.mrb[0].mxu0
    %6291 = vdwg.mxu0
    %v6292 = vsel %vm2573, %v6289, 0.0
    %v6293 = vrot.slane %v6292, 4
    %v6294 = vadd.f32 %v6292, %v6293
    %v6295 = vrot.slane %v6294, 2
    %v6296 = vadd.f32 %v6294, %v6295
    %v6297 = vrot.slane %v6296, 1
    %v6298 = vadd.f32 %v6296, %v6297
    %v6299 = vmul.f32 %v6298, 0.125
    %v6300 = vsub.f32 %v6289, %v6299
    %v6301 = vmul.f32 %v6300, %v6300
    %v6302 = vsel %vm2573, %v6301, 0.0
    %v6303 = vrot.slane %v6302, 4
    %v6304 = vadd.f32 %v6302, %v6303
    %v6305 = vrot.slane %v6304, 2
    %v6306 = vadd.f32 %v6304, %v6305
    %v6307 = vrot.slane %v6306, 1
    %v6308 = vadd.f32 %v6306, %v6307
    %v6309 = vmul.f32 %v6308, 0.125
    %v6310 = vld [vmem:[%s13] sm:$0x1]
    %v6311 = vadd.f32 %v6309, 1e-05
    %v6312 = vrsqrt.pop %v6311
    %v6313 = vmul.f32 %v6310, %v6312
    %v6314 = vld [vmem:[%s14] sm:$0x1]
    %v6315 = vmul.f32 %v6299, %v6313
    %v6316 = vsub.f32 %v6314, %v6315
    %v6318 = vlaneseq
    %v6319 = vshrl.u32 %v6318, 7
    %v6320 = vsub.s32 0, %v6319
    %v6321 = vrot.slane %v6313, %v6320
    %v6323 = vmul.f32 %v6289, %v6321
    %v6325 = vlaneseq
    %v6326 = vshrl.u32 %v6325, 7
    %v6327 = vsub.s32 0, %v6326
    %v6328 = vrot.slane %v6316, %v6327
    %v6330 = vadd.f32 %v6323, %v6328
    %v6331 = vmax.f32 %v6330, 0.0
    %v6332 = vld [vmem:[%s5] sm:$0xff]
    %v6333 = vld [vmem:[%s5 + $0x8] sm:$0xff]
    %v6334 = vld [vmem:[%s5 + $0x10] sm:$0xff]
    %v6335 = vld [vmem:[%s5 + $0x18] sm:$0xff]
    %v6336 = vld [vmem:[%s6] sm:$0x1]
    %v6338 = vlaneseq
    %v6339 = vshrl.u32 %v6338, 7
    %v6340 = vsub.s32 0, %v6339
    %v6341 = vrot.slane %v6336, %v6340
    %v6344 = vsel %vm2573, %v6331, 0
    %6346 = vmatprep.subr.mxu0 0.0
    %6347 = vmatpush1.msra.mxu0 %v6332
    %6348 = vmatprep.subr.mxu0 0.0
    %6349 = vmatpush1.msra.mxu0 %v6333
    %6350 = vmatprep.subr.mxu0 0.0
    %6351 = vmatpush1.msra.mxu0 %v6334
    %6352 = vmatprep.subr.mxu0 0.0
    %6353 = vmatpush1.msra.mxu0 %v6335
    %6354 = vmatprep.subr.mxu0 0.0
    %6355 = vmatpush1.msra.mxu0 0.0
    %6356 = vmatprep.subr.mxu0 0.0
    %6357 = vmatpush1.msra.mxu0 0.0
    %6358 = vmatprep.subr.mxu0 0.0
    %6359 = vmatpush1.msra.mxu0 0.0
    %6360 = vmatprep.subr.mxu0 0.0
    %6361 = vmatpush1.msra.mxu0 0.0
    %6362 = vmatprep.subr.mxu0 0.0
    %6363 = vmatpush1.msra.mxu0 0.0
    %6364 = vmatprep.subr.mxu0 0.0
    %6365 = vmatpush1.msra.mxu0 0.0
    %6366 = vmatprep.subr.mxu0 0.0
    %6367 = vmatpush1.msra.mxu0 0.0
    %6368 = vmatprep.subr.mxu0 0.0
    %6369 = vmatpush1.msra.mxu0 0.0
    %6370 = vmatprep.subr.mxu0 0.0
    %6371 = vmatpush1.msra.mxu0 0.0
    %6372 = vmatprep.subr.mxu0 0.0
    %6373 = vmatpush1.msra.mxu0 0.0
    %6374 = vmatprep.subr.mxu0 0.0
    %6375 = vmatpush1.msra.mxu0 0.0
    %6376 = vmatprep.subr.mxu0 0.0
    %6377 = vmatpush1.msra.mxu0 0.0
    %6378 = vmatprep.subr.mxu0 0.0
    %6379 = vmatpush1.msra.mxu0 0.0
    %6380 = vmatprep.subr.mxu0 0.0
    %6381 = vmatpush1.msra.mxu0 0.0
    %6382 = vmatprep.subr.mxu0 0.0
    %6383 = vmatpush1.msra.mxu0 0.0
    %6384 = vmatprep.subr.mxu0 0.0
    %6385 = vmatpush1.msra.mxu0 0.0
    %6386 = vmatprep.subr.mxu0 0.0
    %6387 = vmatpush1.msra.mxu0 0.0
    %6388 = vmatprep.subr.mxu0 0.0
    %6389 = vmatpush1.msra.mxu0 0.0
    %6390 = vmatprep.subr.mxu0 0.0
    %6391 = vmatpush1.msra.mxu0 0.0
    %6392 = vmatprep.subr.mxu0 0.0
    %6393 = vmatpush1.msra.mxu0 0.0
    %6394 = vmatprep.subr.mxu0 0.0
    %6395 = vmatpush1.msra.mxu0 0.0
    %6396 = vmatprep.subr.mxu0 0.0
    %6397 = vmatpush1.msra.mxu0 0.0
    %6398 = vmatprep.subr.mxu0 0.0
    %6399 = vmatpush1.msra.mxu0 0.0
    %6400 = vmatprep.subr.mxu0 0.0
    %6401 = vmatpush1.msra.mxu0 0.0
    %6402 = vmatprep.subr.mxu0 0.0
    %6403 = vmatpush1.msra.mxu0 0.0
    %6404 = vmatprep.subr.mxu0 0.0
    %6405 = vmatpush1.msra.mxu0 0.0
    %6406 = vmatprep.subr.mxu0 0.0
    %6407 = vmatpush1.msra.mxu0 0.0
    %6408 = vmatprep.subr.mxu0 0.0
    %6409 = vmatpush1.msra.mxu0 0.0
    %6410 = vmatprep.mubr.f32.mxu0 0.0
    %6411 = vmatmul.mubr.f32.gmra.mrb[0].mxu0 %v6344
    %v6412 = vpop.f32.mrb[0].mxu0
    %v6413 = vadd.f32 %v6341, %v6412
    %v6414 = vpop.f32.mrb[0].mxu0
    %6415 = vdwg.mxu0
    %vm6416 = vcmask 146432
    %6417 = vst.msk [vmem:[#allocation5] sm:$0xff] %vm6416, %v6413
    // Predicated region
    $region62: #{pretrain_forward.1} parent=1 // pred_check
      _
    $region63: #{pretrain_forward.1} parent=1 // pred_check_branch
      %6419 = sbr.rel (0) target = $region65
    $region64: #{pretrain_forward.1} parent=1 // pred_region
      %s6421 = ssub.s32 128, 128
      %6422 = vsyncadd [#allocation6], %s6421
      %s6424 = sshll.u32 [#allocation5], 4
      %s6425 = int_to_ptr.vmem [resolvable:$true] %s6424
      %6427 = dma.vmem_to_hbm [thread:$0]  %s6425, 128, %s15, [#allocation6]
    $region65: #{pretrain_forward.1} parent=1 // pred_fallthru
      _
    // Predicated region
    $region66: #{pretrain_forward.1} parent=1 // pred_check
      _
    $region67: #{pretrain_forward.1} parent=1 // pred_check_branch
      %6429 = sbr.rel (0) target = $region69
    $region68: #{pretrain_forward.1} parent=1 // pred_region
      %6430 = dma.done [#allocation6], 128
    $region69: #{pretrain_forward.1} parent=1 // pred_fallthru
      _
    %6431 = vsyncpa [#allocation6], 1

</llo_original>
